<compile_context>
chip_gen: v7x
topology: tpu7x:2x2x1
jax: 0.10.0
libtpu: 0.0.40
codegen_flags: <defaults>
</compile_context>

<pallas_src>
import math
import functools

import jax
import jax.numpy as jnp
from jax.experimental import pallas as pl
from jax.experimental.pallas import tpu as pltpu


# Row order inside the packed per-layer vector array (all rows padded to max(D, F)).
(_VEC_BQ, _VEC_BK, _VEC_BV, _VEC_BO, _VEC_G1,
 _VEC_BE1, _VEC_B1, _VEC_B2, _VEC_G2, _VEC_BE2) = range(10)
_N_VECS = 10


# ---------------------------------------------------------------------------
# Fused encoder kernel: grid = (batch_blocks, n_layers); layer axis innermost.
# ---------------------------------------------------------------------------
def _encoder_kernel(x_ref, wqkv_ref, wo_ref, w1_ref, w2_ref, vec_ref,
                    o_ref, act_ref, *,
                    n_heads, d_k, bblk, seq_len, ff_dim,
                    compute_dtype, weights_resident):
    layer = pl.program_id(1)
    n_layers = pl.num_programs(1)
    M = bblk * seq_len
    D = n_heads * d_k
    F = ff_dim

    # Load the input activation into the resident VMEM scratch once per batch
    # block (layer axis is innermost, so this happens before layer 0 computes).
    @pl.when(layer == 0)
    def _():
        act_ref[...] = x_ref[...].reshape(M, D).astype(jnp.float32)

    x = act_ref[...]                                      # (M, D) f32

    li = layer if weights_resident else 0                 # dynamic index when resident
    wqkv = wqkv_ref[li]                                   # (D, 3D)  compute_dtype
    wo = wo_ref[li]                                       # (D, D)
    w1 = w1_ref[li]                                       # (D, F)
    w2 = w2_ref[li]                                       # (F, D)
    vec = vec_ref[li]                                     # (10, Vmax) f32

    bq = vec[_VEC_BQ:_VEC_BQ + 1, :D]
    bk = vec[_VEC_BK:_VEC_BK + 1, :D]
    bv = vec[_VEC_BV:_VEC_BV + 1, :D]
    bo = vec[_VEC_BO:_VEC_BO + 1, :D]
    g1 = vec[_VEC_G1:_VEC_G1 + 1, :D]
    be1 = vec[_VEC_BE1:_VEC_BE1 + 1, :D]
    b1 = vec[_VEC_B1:_VEC_B1 + 1, :F]
    b2 = vec[_VEC_B2:_VEC_B2 + 1, :D]
    g2 = vec[_VEC_G2:_VEC_G2 + 1, :D]
    be2 = vec[_VEC_BE2:_VEC_BE2 + 1, :D]

    def mm(a, w):
        # weights are already compute_dtype (cast once in the wrapper)
        return jnp.dot(a.astype(compute_dtype), w, preferred_element_type=jnp.float32)

    def layer_norm(z, g, b):
        mu = jnp.mean(z, axis=-1, keepdims=True)
        var = jnp.maximum(jnp.mean(z * z, axis=-1, keepdims=True) - mu * mu, 0.0)
        return (z - mu) * jax.lax.rsqrt(var + 1e-5) * g + b

    # ---- fused QKV projection (one MXU pass) ----------------------------
    scale = 1.0 / math.sqrt(d_k)
    qkv = mm(x, wqkv)                                     # (M, 3D) f32
    q = (qkv[:, :D] + bq) * scale                         # pre-scale q once
    k = qkv[:, D:2 * D] + bk
    v = qkv[:, 2 * D:3 * D] + bv

    def split_heads(t):
        # (M, D) -> (bblk*H, S, d_k) with one reshape + one transpose
        t = t.reshape(bblk, seq_len, n_heads, d_k)
        t = jnp.swapaxes(t, 1, 2)                         # (bblk, H, S, d_k)
        return t.reshape(bblk * n_heads, seq_len, d_k).astype(compute_dtype)

    qh, kh, vh = split_heads(q), split_heads(k), split_heads(v)

    # one head/batch-batched score matmul + one batched softmax + one PV matmul
    s = jnp.einsum("gqd,gkd->gqk", qh, kh,
                   preferred_element_type=jnp.float32)    # (G, S, S) f32
    s = s - jnp.max(s, axis=-1, keepdims=True)
    p = jnp.exp(s)
    denom = jnp.sum(p, axis=-1, keepdims=True)
    r = pl.reciprocal(denom, approx=True)                 # EUP slot
    r = r * (2.0 - denom * r)                             # one Newton step -> ~exact
    p = (p * r).astype(compute_dtype)
    ctx = jnp.einsum("gqk,gkd->gqd", p, vh,
                     preferred_element_type=jnp.float32)  # (G, S, d_k) f32

    # merge heads: (G, S, d_k) -> (M, D) with one transpose + reshapes
    ctx = ctx.reshape(bblk, n_heads, seq_len, d_k)
    ctx = jnp.swapaxes(ctx, 1, 2).reshape(M, D)

    attn = mm(ctx, wo) + bo                               # output projection

    # ---- residual + LayerNorm 1 -----------------------------------------
    h1 = layer_norm(x + attn, g1, be1)

    # ---- FeedForward (LeakyReLU, slope 0.01) -----------------------------
    ff = mm(h1, w1) + b1
    ff = jnp.where(ff >= 0, ff, 0.01 * ff)
    ff = mm(ff, w2) + b2

    # ---- residual + LayerNorm 2 -----------------------------------------
    h2 = layer_norm(h1 + ff, g2, be2)

    # carry the activation to the next layer in VMEM
    act_ref[...] = h2

    @pl.when(layer == n_layers - 1)
    def _():
        o_ref[...] = h2.reshape(bblk, seq_len, D).astype(o_ref.dtype)


# ---------------------------------------------------------------------------
# Generation-aware planning helpers.
# ---------------------------------------------------------------------------
def _tpu_defaults():
    """Returns (vmem_limit_bytes or None, parallel TensorCores per chip)."""
    kind = ""
    try:
        kind = (jax.devices()[0].device_kind or "").lower()
    except Exception:
        pass
    if "v7" in kind:
        return 56 * 2**20, 2          # 64 MiB/TC physical, leave headroom; 2 TCs
    if "v6" in kind:
        return 100 * 2**20, 1
    if "v5" in kind:
        if "lite" in kind or "v5e" in kind:
            return 100 * 2**20, 1
        return 100 * 2**20, 2         # v5p megacore
    if "v4" in kind:
        return 100 * 2**20, 2
    return None, 1                    # unknown / older: keep compiler defaults


def _weight_bytes_per_layer(D, F, wbytes):
    return (D * 3 * D + D * D + 2 * D * F) * wbytes + _N_VECS * max(D, F) * 4


def _footprint_bytes(bblk, S, D, F, H, L, wbytes, resident):
    """Rough per-core VMEM footprint (double-buffered weights + I/O + temps)."""
    M = bblk * S
    G = H * bblk
    d_k = D // H
    w = 2 * _weight_bytes_per_layer(D, F, wbytes) * (L if resident else 1)
    io = 2 * 2 * bblk * S * D * 4                         # x + out blocks, dbl-buffered
    act = M * D * 4
    temps = 4 * (4 * M * D + 2 * G * S * S + G * S * d_k + 2 * M * F)
    return w + io + act + temps


def _plan_blocks(B, S, D, F, H, L, wbytes, budget, n_cores):
    divisors = [d for d in range(1, B + 1) if B % d == 0]
    if n_cores >= 2:
        # Prefer an even number of batch blocks (megacore balance), largest block first.
        pref = sorted([d for d in divisors if (B // d) % n_cores == 0], reverse=True)
        pref += [d for d in sorted(divisors, reverse=True) if d not in pref]
    else:
        pref = sorted(divisors, reverse=True)             # nb = 1 first (no re-streaming)
    for resident in (True, False):
        for bblk in pref:
            if _footprint_bytes(bblk, S, D, F, H, L, wbytes, resident) <= budget:
                return bblk, resident
    return 1, False


# ---------------------------------------------------------------------------
# Wrapper: whole encoder (all layers) in one pallas_call.
# ---------------------------------------------------------------------------
def transformer_encoder(x, layer_params, *, n_heads,
                        compute_dtype=jnp.bfloat16,
                        batch_block=None, weights_resident=None,
                        vmem_limit_bytes=None):
    B, S, D = x.shape
    assert D % n_heads == 0, "d_model must be divisible by n_heads"
    d_k = D // n_heads
    L = len(layer_params)
    F = layer_params[0]["w1"].shape[-1]
    Vmax = max(D, F)
    wbytes = jnp.dtype(compute_dtype).itemsize

    # ---- pack / stack weights once (bf16 matmul operands live in HBM as bf16) ----
    def stack(name):
        return jnp.stack([p[name] for p in layer_params], axis=0)

    wqkv = jnp.concatenate([stack("wq"), stack("wk"), stack("wv")],
                           axis=-1).astype(compute_dtype)          # (L, D, 3D)
    wo = stack("wo").astype(compute_dtype)                          # (L, D, D)
    w1 = stack("w1").astype(compute_dtype)                          # (L, D, F)
    w2 = stack("w2").astype(compute_dtype)                          # (L, F, D)

    vec_order = [("bq", D), ("bk", D), ("bv", D), ("bo", D), ("g1", D),
                 ("be1", D), ("b1", F), ("b2", D), ("g2", D), ("be2", D)]

    def pack_vecs(p):
        rows = []
        for name, dim in vec_order:
            v = p[name].reshape(dim).astype(jnp.float32)
            rows.append(jnp.pad(v, (0, Vmax - dim)))
        return jnp.stack(rows, axis=0)                              # (10, Vmax)

    vecs = jnp.stack([pack_vecs(p) for p in layer_params], axis=0)  # (L, 10, Vmax) f32

    # ---- generation-aware VMEM budget / tiling plan ----------------------
    auto_limit, n_cores = _tpu_defaults()
    if vmem_limit_bytes is None:
        vmem_limit_bytes = auto_limit
    budget = int(0.85 * (vmem_limit_bytes if vmem_limit_bytes else 12 * 2**20))

    auto_bblk, auto_res = _plan_blocks(B, S, D, F, n_heads, L, wbytes, budget, n_cores)
    if batch_block is None:
        batch_block = auto_bblk
    if weights_resident is None:
        weights_resident = auto_res
    assert B % batch_block == 0, "batch_block must divide batch size"
    nb = B // batch_block

    if weights_resident:
        # Whole (L, ...) stack is one block with a constant index -> DMA'd once,
        # stays resident in VMEM for the entire kernel.
        def wspec(arr):
            return pl.BlockSpec(arr.shape, lambda b, l: (0, 0, 0))
    else:
        # Per-layer blocks: layer l+1 weights prefetched while layer l computes.
        def wspec(arr):
            return pl.BlockSpec((1,) + tuple(arr.shape[1:]), lambda b, l: (l, 0, 0))

    in_specs = [pl.BlockSpec((batch_block, S, D), lambda b, l: (b, 0, 0)),
                wspec(wqkv), wspec(wo), wspec(w1), wspec(w2), wspec(vecs)]
    out_spec = pl.BlockSpec((batch_block, S, D), lambda b, l: (b, 0, 0))

    kernel = functools.partial(
        _encoder_kernel, n_heads=n_heads, d_k=d_k, bblk=batch_block,
        seq_len=S, ff_dim=F, compute_dtype=compute_dtype,
        weights_resident=weights_resident)

    # Advisory cost estimate for the XLA scheduler.
    M_tot = B * S
    flops = L * (2 * M_tot * D * (3 * D) + 2 * M_tot * D * D + 4 * M_tot * D * F
                 + 4 * B * n_heads * S * S * d_k)
    transcendentals = L * (B * n_heads * S * S + 2 * M_tot)
    bytes_accessed = (2 * B * S * D * x.dtype.itemsize
                      + L * _weight_bytes_per_layer(D, F, wbytes)
                      * (1 if weights_resident else nb))
    cost = pl.CostEstimate(flops=int(flops),
                           transcendentals=int(transcendentals),
                           bytes_accessed=int(bytes_accessed))

    return pl.pallas_call(
        kernel,
        out_shape=jax.ShapeDtypeStruct((B, S, D), x.dtype),
        grid=(nb, L),
        in_specs=in_specs,
        out_specs=out_spec,
        scratch_shapes=[pltpu.VMEM((batch_block * S, D), jnp.float32)],
        compiler_params=pltpu.CompilerParams(
            dimension_semantics=("parallel", "arbitrary"),
            vmem_limit_bytes=vmem_limit_bytes),
        cost_estimate=cost,
    )(x, wqkv, wo, w1, w2, vecs)


# ---------------------------------------------------------------------------
# Pure-JAX reference (same math) for a correctness sanity check.
# ---------------------------------------------------------------------------
def _ref_block(x, p, n_heads):
    B, S, D = x.shape
    d_k = D // n_heads

    def lin(z, w, b):
        return z @ w + b[0]

    def ln(z, g, b):
        mu = z.mean(-1, keepdims=True)
        var = ((z - mu) ** 2).mean(-1, keepdims=True)
        return (z - mu) / jnp.sqrt(var + 1e-5) * g[0] + b[0]

    q = lin(x, p["wq"], p["bq"]).reshape(B, S, n_heads, d_k).transpose(0, 2, 1, 3)
    k = lin(x, p["wk"], p["bk"]).reshape(B, S, n_heads, d_k).transpose(0, 2, 1, 3)
    v = lin(x, p["wv"], p["bv"]).reshape(B, S, n_heads, d_k).transpose(0, 2, 1, 3)
    s = jnp.einsum("bhqd,bhkd->bhqk", q, k) / math.sqrt(d_k)
    a = jax.nn.softmax(s, axis=-1)
    o = jnp.einsum("bhqk,bhkd->bhqd", a, v).transpose(0, 2, 1, 3).reshape(B, S, D)
    o = lin(o, p["wo"], p["bo"])
    h1 = ln(x + o, p["g1"], p["be1"])
    f = lin(h1, p["w1"], p["b1"])
    f = jnp.where(f >= 0, f, 0.01 * f)
    f = lin(f, p["w2"], p["b2"])
    return ln(h1 + f, p["g2"], p["be2"])


def _ref_encoder(x, layer_params, n_heads):
    for p in layer_params:
        x = _ref_block(x, p, n_heads)
    return x


# ---------------------------------------------------------------------------
# Deterministic parameter init (shapes per nn.Linear / nn.LayerNorm).
# ---------------------------------------------------------------------------
def init_layer_params(key, d_model, ff_hidden_dim):
    ks = jax.random.split(key, 12)
    sc_d = 1.0 / math.sqrt(d_model)
    sc_h = 1.0 / math.sqrt(ff_hidden_dim)

    def w(k, shape, sc):
        return jax.random.uniform(k, shape, jnp.float32, -sc, sc)

    return {
        "wq": w(ks[0], (d_model, d_model), sc_d), "bq": w(ks[1], (1, d_model), sc_d),
        "wk": w(ks[2], (d_model, d_model), sc_d), "bk": w(ks[3], (1, d_model), sc_d),
        "wv": w(ks[4], (d_model, d_model), sc_d), "bv": w(ks[5], (1, d_model), sc_d),
        "wo": w(ks[6], (d_model, d_model), sc_d), "bo": w(ks[7], (1, d_model), sc_d),
        "g1": jnp.ones((1, d_model), jnp.float32),
        "be1": jnp.zeros((1, d_model), jnp.float32),
        "w1": w(ks[8], (d_model, ff_hidden_dim), sc_d), "b1": w(ks[9], (1, ff_hidden_dim), sc_d),
        "w2": w(ks[10], (ff_hidden_dim, d_model), sc_h), "b2": w(ks[11], (1, d_model), sc_h),
        "g2": jnp.ones((1, d_model), jnp.float32),
        "be2": jnp.zeros((1, d_model), jnp.float32),
    }


if __name__ == "__main__":
    # Small config: batch=2, seq=8, d_model=32, n_heads=4, ff_hidden=64, layers=2
    B, S, D = 2, 8, 32
    N_HEADS = 4
    FF_HIDDEN = 64
    N_LAYERS = 2

    root = jax.random.PRNGKey(0)
    kx, *layer_keys = jax.random.split(root, 1 + N_LAYERS)
    x = jax.random.normal(kx, (B, S, D), jnp.float32)
    layer_params = [init_layer_params(k, D, FF_HIDDEN) for k in layer_keys]

    ref = _ref_encoder(x, layer_params, N_HEADS)

    # Exact-semantics path (f32 compute) -> tight tolerance vs. f32 reference.
    out_f32 = transformer_encoder(x, layer_params, n_heads=N_HEADS,
                                  compute_dtype=jnp.float32)
    out_f32 = jax.block_until_ready(out_f32)
    assert out_f32.shape == (B, S, D)
    err_f32 = jnp.max(jnp.abs(out_f32 - ref))
    assert jnp.allclose(out_f32, ref, atol=1e-4, rtol=1e-4), f"f32 max abs diff {err_f32}"

    # Default fast path (bf16 MXU compute, bf16 weights in HBM) -> loose tolerance.
    out_bf16 = transformer_encoder(x, layer_params, n_heads=N_HEADS)
    out_bf16 = jax.block_until_ready(out_bf16)
    assert out_bf16.shape == (B, S, D)
    err_bf16 = jnp.max(jnp.abs(out_bf16 - ref))
    assert jnp.allclose(out_bf16, ref, atol=0.15, rtol=0.05), f"bf16 max abs diff {err_bf16}"

    print("KERNEL_OK")
</pallas_src>

<mosaic_0001>
module attributes {stable_mosaic.version = 11 : i64} {
  func.func @_encoder_kernel(%arg0: i32, %arg1: i32, %arg2: memref<2x8x32xf32, #tpu.memory_space<vmem>>, %arg3: memref<2x32x96xf32, #tpu.memory_space<vmem>>, %arg4: memref<2x32x32xf32, #tpu.memory_space<vmem>>, %arg5: memref<2x32x64xf32, #tpu.memory_space<vmem>>, %arg6: memref<2x64x32xf32, #tpu.memory_space<vmem>>, %arg7: memref<2x10x64xf32, #tpu.memory_space<vmem>>, %arg8: memref<2x8x32xf32, #tpu.memory_space<vmem>>, %arg9: memref<16x32xf32, #tpu.memory_space<vmem>>) attributes {dimension_semantics = [#tpu.dimension_semantics<parallel>, #tpu.dimension_semantics<arbitrary>], iteration_bounds = array<i64: 1, 2>, scalar_prefetch = 0 : i64, scratch_operands = 1 : i64, tpu.core_type = #tpu.core_type<tc>, window_params = [{transform_indices = @transform_0, window_bounds = array<i64: 2, 8, 32>}, {pipeline_mode = #tpu.pipeline_mode<synchronous>, transform_indices = @transform_1, window_bounds = array<i64: 2, 32, 96>}, {pipeline_mode = #tpu.pipeline_mode<synchronous>, transform_indices = @transform_2, window_bounds = array<i64: 2, 32, 32>}, {pipeline_mode = #tpu.pipeline_mode<synchronous>, transform_indices = @transform_3, window_bounds = array<i64: 2, 32, 64>}, {pipeline_mode = #tpu.pipeline_mode<synchronous>, transform_indices = @transform_4, window_bounds = array<i64: 2, 64, 32>}, {pipeline_mode = #tpu.pipeline_mode<synchronous>, transform_indices = @transform_5, window_bounds = array<i64: 2, 10, 64>}, {transform_indices = @transform_6, window_bounds = array<i64: 2, 8, 32>}]} {
    %c0_i32 = arith.constant 0 : i32
    %0 = arith.cmpi eq, %arg1, %c0_i32 : i32
    %1 = arith.extui %0 : i1 to i32
    %c0_i32_0 = arith.constant 0 : i32
    %2 = arith.cmpi ne, %1, %c0_i32_0 : i32
    scf.if %2 {
      %c0_38 = arith.constant 0 : index
      %c0_39 = arith.constant 0 : index
      %c0_40 = arith.constant 0 : index
      %137 = vector.load %arg2[%c0_38, %c0_39, %c0_40] : memref<2x8x32xf32, #tpu.memory_space<vmem>>, vector<2x8x32xf32>
      %138 = vector.shape_cast %137 : vector<2x8x32xf32> to vector<16x32xf32>
      %c0_41 = arith.constant 0 : index
      %c0_42 = arith.constant 0 : index
      %139 = vector.load %arg9[%c0_41, %c0_42] : memref<16x32xf32, #tpu.memory_space<vmem>>, vector<16x32xf32>
      tpu.vector_store %arg9[%c0_41, %c0_42], %138 {strides = array<i32>} : memref<16x32xf32, #tpu.memory_space<vmem>>, vector<16x32xf32>,
    } else {
    }
    %c0 = arith.constant 0 : index
    %c0_1 = arith.constant 0 : index
    %3 = vector.load %arg9[%c0, %c0_1] : memref<16x32xf32, #tpu.memory_space<vmem>>, vector<16x32xf32>
    %4 = arith.index_cast %arg1 : i32 to index
    %c0_2 = arith.constant 0 : index
    %c0_3 = arith.constant 0 : index
    %5 = vector.load %arg3[%4, %c0_2, %c0_3] : memref<2x32x96xf32, #tpu.memory_space<vmem>>, vector<1x32x96xf32>
    %6 = vector.shape_cast %5 : vector<1x32x96xf32> to vector<32x96xf32>
    %7 = arith.index_cast %arg1 : i32 to index
    %c0_4 = arith.constant 0 : index
    %c0_5 = arith.constant 0 : index
    %8 = vector.load %arg4[%7, %c0_4, %c0_5] : memref<2x32x32xf32, #tpu.memory_space<vmem>>, vector<1x32x32xf32>
    %9 = vector.shape_cast %8 : vector<1x32x32xf32> to vector<32x32xf32>
    %10 = arith.index_cast %arg1 : i32 to index
    %c0_6 = arith.constant 0 : index
    %c0_7 = arith.constant 0 : index
    %11 = vector.load %arg5[%10, %c0_6, %c0_7] : memref<2x32x64xf32, #tpu.memory_space<vmem>>, vector<1x32x64xf32>
    %12 = vector.shape_cast %11 : vector<1x32x64xf32> to vector<32x64xf32>
    %13 = arith.index_cast %arg1 : i32 to index
    %c0_8 = arith.constant 0 : index
    %c0_9 = arith.constant 0 : index
    %14 = vector.load %arg6[%13, %c0_8, %c0_9] : memref<2x64x32xf32, #tpu.memory_space<vmem>>, vector<1x64x32xf32>
    %15 = vector.shape_cast %14 : vector<1x64x32xf32> to vector<64x32xf32>
    %16 = arith.index_cast %arg1 : i32 to index
    %c0_10 = arith.constant 0 : index
    %c0_11 = arith.constant 0 : index
    %17 = vector.load %arg7[%16, %c0_10, %c0_11] : memref<2x10x64xf32, #tpu.memory_space<vmem>>, vector<1x10x64xf32>
    %18 = vector.shape_cast %17 : vector<1x10x64xf32> to vector<10x64xf32>
    %19 = vector.extract_strided_slice %18 {offsets = [0, 0], sizes = [1, 32], strides = [1, 1]} : vector<10x64xf32> to vector<1x32xf32>
    %20 = vector.extract_strided_slice %18 {offsets = [1, 0], sizes = [1, 32], strides = [1, 1]} : vector<10x64xf32> to vector<1x32xf32>
    %21 = vector.extract_strided_slice %18 {offsets = [2, 0], sizes = [1, 32], strides = [1, 1]} : vector<10x64xf32> to vector<1x32xf32>
    %22 = vector.extract_strided_slice %18 {offsets = [3, 0], sizes = [1, 32], strides = [1, 1]} : vector<10x64xf32> to vector<1x32xf32>
    %23 = vector.extract_strided_slice %18 {offsets = [4, 0], sizes = [1, 32], strides = [1, 1]} : vector<10x64xf32> to vector<1x32xf32>
    %24 = vector.extract_strided_slice %18 {offsets = [5, 0], sizes = [1, 32], strides = [1, 1]} : vector<10x64xf32> to vector<1x32xf32>
    %25 = vector.extract_strided_slice %18 {offsets = [6, 0], sizes = [1, 64], strides = [1, 1]} : vector<10x64xf32> to vector<1x64xf32>
    %26 = vector.extract_strided_slice %18 {offsets = [7, 0], sizes = [1, 32], strides = [1, 1]} : vector<10x64xf32> to vector<1x32xf32>
    %27 = vector.extract_strided_slice %18 {offsets = [8, 0], sizes = [1, 32], strides = [1, 1]} : vector<10x64xf32> to vector<1x32xf32>
    %28 = vector.extract_strided_slice %18 {offsets = [9, 0], sizes = [1, 32], strides = [1, 1]} : vector<10x64xf32> to vector<1x32xf32>
    %cst = arith.constant dense<0.000000e+00> : vector<16x96xf32>
    %29 = tpu.matmul %3, %6, %cst {dimension_numbers = #tpu.dot_dimension_numbers<[1], [0], [0], [1], [0, 0, 1, 1], [], []>} : vector<16x32xf32>, vector<32x96xf32>, vector<16x96xf32> -> vector<16x96xf32>
    %30 = vector.extract_strided_slice %29 {offsets = [0, 0], sizes = [16, 32], strides = [1, 1]} : vector<16x96xf32> to vector<16x32xf32>
    %31 = vector.broadcast %19 : vector<1x32xf32> to vector<16x32xf32>
    %32 = arith.addf %30, %31 : vector<16x32xf32>
    %cst_12 = arith.constant 0.353553385 : f32
    %33 = vector.broadcast %cst_12 : f32 to vector<16x32xf32>
    %34 = arith.mulf %32, %33 : vector<16x32xf32>
    %35 = vector.extract_strided_slice %29 {offsets = [0, 32], sizes = [16, 32], strides = [1, 1]} : vector<16x96xf32> to vector<16x32xf32>
    %36 = vector.broadcast %20 : vector<1x32xf32> to vector<16x32xf32>
    %37 = arith.addf %35, %36 : vector<16x32xf32>
    %38 = vector.extract_strided_slice %29 {offsets = [0, 64], sizes = [16, 32], strides = [1, 1]} : vector<16x96xf32> to vector<16x32xf32>
    %39 = vector.broadcast %21 : vector<1x32xf32> to vector<16x32xf32>
    %40 = arith.addf %38, %39 : vector<16x32xf32>
    %41 = vector.shape_cast %34 : vector<16x32xf32> to vector<2x8x4x8xf32>
    %42 = tpu.transpose %41, [0, 2, 1, 3] : vector<2x8x4x8xf32> -> vector<2x4x8x8xf32>
    %43 = vector.shape_cast %42 : vector<2x4x8x8xf32> to vector<8x8x8xf32>
    %44 = vector.shape_cast %37 : vector<16x32xf32> to vector<2x8x4x8xf32>
    %45 = tpu.transpose %44, [0, 2, 1, 3] : vector<2x8x4x8xf32> -> vector<2x4x8x8xf32>
    %46 = vector.shape_cast %45 : vector<2x4x8x8xf32> to vector<8x8x8xf32>
    %47 = vector.shape_cast %40 : vector<16x32xf32> to vector<2x8x4x8xf32>
    %48 = tpu.transpose %47, [0, 2, 1, 3] : vector<2x8x4x8xf32> -> vector<2x4x8x8xf32>
    %49 = vector.shape_cast %48 : vector<2x4x8x8xf32> to vector<8x8x8xf32>
    "tpu.trace_start"() <{level = 10 : i32, message = "gqd,gkd->gqk"}> : () -> ()
    %cst_13 = arith.constant dense<0.000000e+00> : vector<8x8x8xf32>
    %50 = tpu.matmul %43, %46, %cst_13 {dimension_numbers = #tpu.dot_dimension_numbers<[2], [2], [1], [1], [0, 0, 0, 1, 1, 1], [0], [0]>} : vector<8x8x8xf32>, vector<8x8x8xf32>, vector<8x8x8xf32> -> vector<8x8x8xf32>
    "tpu.trace_stop"() : () -> ()
    %cst_14 = arith.constant dense<0xFF800000> : vector<8x8xf32>
    %51 = vector.multi_reduction <maximumf>, %50, %cst_14 [2] : vector<8x8x8xf32> to vector<8x8xf32>
    %52 = vector.shape_cast %51 : vector<8x8xf32> to vector<8x8x1xf32>
    %53 = vector.broadcast %52 : vector<8x8x1xf32> to vector<8x8x8xf32>
    %54 = arith.subf %50, %53 : vector<8x8x8xf32>
    %55 = math.exp %54 : vector<8x8x8xf32>
    %cst_15 = arith.constant dense<0.000000e+00> : vector<8x8xf32>
    %56 = vector.multi_reduction <add>, %55, %cst_15 [2] : vector<8x8x8xf32> to vector<8x8xf32>
    %57 = vector.shape_cast %56 : vector<8x8xf32> to vector<8x8x1xf32>
    %58 = tpu.reciprocal %57 {approx = true} : vector<8x8x1xf32> -> vector<8x8x1xf32>
    %59 = arith.mulf %57, %58 : vector<8x8x1xf32>
    %cst_16 = arith.constant 2.000000e+00 : f32
    %60 = vector.broadcast %cst_16 : f32 to vector<8x8x1xf32>
    %61 = arith.subf %60, %59 : vector<8x8x1xf32>
    %62 = arith.mulf %58, %61 : vector<8x8x1xf32>
    %63 = vector.broadcast %62 : vector<8x8x1xf32> to vector<8x8x8xf32>
    %64 = arith.mulf %55, %63 : vector<8x8x8xf32>
    "tpu.trace_start"() <{level = 10 : i32, message = "gqk,gkd->gqd"}> : () -> ()
    %cst_17 = arith.constant dense<0.000000e+00> : vector<8x8x8xf32>
    %65 = tpu.matmul %64, %49, %cst_17 {dimension_numbers = #tpu.dot_dimension_numbers<[2], [1], [1], [2], [0, 0, 0, 1, 1, 2], [0], [0]>} : vector<8x8x8xf32>, vector<8x8x8xf32>, vector<8x8x8xf32> -> vector<8x8x8xf32>
    "tpu.trace_stop"() : () -> ()
    %66 = vector.shape_cast %65 : vector<8x8x8xf32> to vector<2x4x8x8xf32>
    %67 = tpu.transpose %66, [0, 2, 1, 3] : vector<2x4x8x8xf32> -> vector<2x8x4x8xf32>
    %68 = vector.shape_cast %67 : vector<2x8x4x8xf32> to vector<16x32xf32>
    %cst_18 = arith.constant dense<0.000000e+00> : vector<16x32xf32>
    %69 = tpu.matmul %68, %9, %cst_18 {dimension_numbers = #tpu.dot_dimension_numbers<[1], [0], [0], [1], [0, 0, 1, 1], [], []>} : vector<16x32xf32>, vector<32x32xf32>, vector<16x32xf32> -> vector<16x32xf32>
    %70 = vector.broadcast %22 : vector<1x32xf32> to vector<16x32xf32>
    %71 = arith.addf %69, %70 : vector<16x32xf32>
    %72 = arith.addf %3, %71 : vector<16x32xf32>
    %cst_19 = arith.constant dense<0.000000e+00> : vector<16xf32>
    %73 = vector.multi_reduction <add>, %72, %cst_19 [1] : vector<16x32xf32> to vector<16xf32>
    %74 = vector.shape_cast %73 : vector<16xf32> to vector<16x1xf32>
    %cst_20 = arith.constant 3.200000e+01 : f32
    %75 = vector.broadcast %cst_20 : f32 to vector<16x1xf32>
    %76 = arith.divf %74, %75 : vector<16x1xf32>
    %77 = arith.mulf %72, %72 : vector<16x32xf32>
    %cst_21 = arith.constant dense<0.000000e+00> : vector<16xf32>
    %78 = vector.multi_reduction <add>, %77, %cst_21 [1] : vector<16x32xf32> to vector<16xf32>
    %79 = vector.shape_cast %78 : vector<16xf32> to vector<16x1xf32>
    %cst_22 = arith.constant 3.200000e+01 : f32
    %80 = vector.broadcast %cst_22 : f32 to vector<16x1xf32>
    %81 = arith.divf %79, %80 : vector<16x1xf32>
    %82 = arith.mulf %76, %76 : vector<16x1xf32>
    %83 = arith.subf %81, %82 : vector<16x1xf32>
    %cst_23 = arith.constant 0.000000e+00 : f32
    %84 = vector.broadcast %cst_23 : f32 to vector<16x1xf32>
    %85 = arith.maximumf %83, %84 : vector<16x1xf32>
    %86 = vector.broadcast %76 : vector<16x1xf32> to vector<16x32xf32>
    %87 = arith.subf %72, %86 : vector<16x32xf32>
    %cst_24 = arith.constant 9.99999974E-6 : f32
    %88 = vector.broadcast %cst_24 : f32 to vector<16x1xf32>
    %89 = arith.addf %85, %88 : vector<16x1xf32>
    %90 = math.rsqrt %89 : vector<16x1xf32>
    %91 = vector.broadcast %90 : vector<16x1xf32> to vector<16x32xf32>
    %92 = arith.mulf %87, %91 : vector<16x32xf32>
    %93 = vector.broadcast %23 : vector<1x32xf32> to vector<16x32xf32>
    %94 = arith.mulf %92, %93 : vector<16x32xf32>
    %95 = vector.broadcast %24 : vector<1x32xf32> to vector<16x32xf32>
    %96 = arith.addf %94, %95 : vector<16x32xf32>
    %cst_25 = arith.constant dense<0.000000e+00> : vector<16x64xf32>
    %97 = tpu.matmul %96, %12, %cst_25 {dimension_numbers = #tpu.dot_dimension_numbers<[1], [0], [0], [1], [0, 0, 1, 1], [], []>} : vector<16x32xf32>, vector<32x64xf32>, vector<16x64xf32> -> vector<16x64xf32>
    %98 = vector.broadcast %25 : vector<1x64xf32> to vector<16x64xf32>
    %99 = arith.addf %97, %98 : vector<16x64xf32>
    %cst_26 = arith.constant 0.000000e+00 : f32
    %100 = vector.broadcast %cst_26 : f32 to vector<16x64xf32>
    %101 = arith.cmpf oge, %99, %100 : vector<16x64xf32>
    %cst_27 = arith.constant 0.00999999977 : f32
    %102 = vector.broadcast %cst_27 : f32 to vector<16x64xf32>
    %103 = arith.mulf %102, %99 : vector<16x64xf32>
    %104 = arith.select %101, %99, %103 : vector<16x64xi1>, vector<16x64xf32>
    %cst_28 = arith.constant dense<0.000000e+00> : vector<16x32xf32>
    %105 = tpu.matmul %104, %15, %cst_28 {dimension_numbers = #tpu.dot_dimension_numbers<[1], [0], [0], [1], [0, 0, 1, 1], [], []>} : vector<16x64xf32>, vector<64x32xf32>, vector<16x32xf32> -> vector<16x32xf32>
    %106 = vector.broadcast %26 : vector<1x32xf32> to vector<16x32xf32>
    %107 = arith.addf %105, %106 : vector<16x32xf32>
    %108 = arith.addf %96, %107 : vector<16x32xf32>
    %cst_29 = arith.constant dense<0.000000e+00> : vector<16xf32>
    %109 = vector.multi_reduction <add>, %108, %cst_29 [1] : vector<16x32xf32> to vector<16xf32>
    %110 = vector.shape_cast %109 : vector<16xf32> to vector<16x1xf32>
    %cst_30 = arith.constant 3.200000e+01 : f32
    %111 = vector.broadcast %cst_30 : f32 to vector<16x1xf32>
    %112 = arith.divf %110, %111 : vector<16x1xf32>
    %113 = arith.mulf %108, %108 : vector<16x32xf32>
    %cst_31 = arith.constant dense<0.000000e+00> : vector<16xf32>
    %114 = vector.multi_reduction <add>, %113, %cst_31 [1] : vector<16x32xf32> to vector<16xf32>
    %115 = vector.shape_cast %114 : vector<16xf32> to vector<16x1xf32>
    %cst_32 = arith.constant 3.200000e+01 : f32
    %116 = vector.broadcast %cst_32 : f32 to vector<16x1xf32>
    %117 = arith.divf %115, %116 : vector<16x1xf32>
    %118 = arith.mulf %112, %112 : vector<16x1xf32>
    %119 = arith.subf %117, %118 : vector<16x1xf32>
    %cst_33 = arith.constant 0.000000e+00 : f32
    %120 = vector.broadcast %cst_33 : f32 to vector<16x1xf32>
    %121 = arith.maximumf %119, %120 : vector<16x1xf32>
    %122 = vector.broadcast %112 : vector<16x1xf32> to vector<16x32xf32>
    %123 = arith.subf %108, %122 : vector<16x32xf32>
    %cst_34 = arith.constant 9.99999974E-6 : f32
    %124 = vector.broadcast %cst_34 : f32 to vector<16x1xf32>
    %125 = arith.addf %121, %124 : vector<16x1xf32>
    %126 = math.rsqrt %125 : vector<16x1xf32>
    %127 = vector.broadcast %126 : vector<16x1xf32> to vector<16x32xf32>
    %128 = arith.mulf %123, %127 : vector<16x32xf32>
    %129 = vector.broadcast %27 : vector<1x32xf32> to vector<16x32xf32>
    %130 = arith.mulf %128, %129 : vector<16x32xf32>
    %131 = vector.broadcast %28 : vector<1x32xf32> to vector<16x32xf32>
    %132 = arith.addf %130, %131 : vector<16x32xf32>
    %c0_35 = arith.constant 0 : index
    %c0_36 = arith.constant 0 : index
    %133 = vector.load %arg9[%c0_35, %c0_36] : memref<16x32xf32, #tpu.memory_space<vmem>>, vector<16x32xf32>
    tpu.vector_store %arg9[%c0_35, %c0_36], %132 {strides = array<i32>} : memref<16x32xf32, #tpu.memory_space<vmem>>, vector<16x32xf32>,
    %c1_i32 = arith.constant 1 : i32
    %134 = arith.cmpi eq, %arg1, %c1_i32 : i32
    %135 = arith.extui %134 : i1 to i32
    %c0_i32_37 = arith.constant 0 : i32
    %136 = arith.cmpi ne, %135, %c0_i32_37 : i32
    scf.if %136 {
      %137 = vector.shape_cast %132 : vector<16x32xf32> to vector<2x8x32xf32>
      %c0_38 = arith.constant 0 : index
      %c0_39 = arith.constant 0 : index
      %c0_40 = arith.constant 0 : index
      %138 = vector.load %arg8[%c0_38, %c0_39, %c0_40] : memref<2x8x32xf32, #tpu.memory_space<vmem>>, vector<2x8x32xf32>
      tpu.vector_store %arg8[%c0_38, %c0_39, %c0_40], %137 {strides = array<i32>} : memref<2x8x32xf32, #tpu.memory_space<vmem>>, vector<2x8x32xf32>,
    } else {
    }
    return
  }
  func.func @transform_0(%arg0: i32, %arg1: i32) -> (i32, i32, i32) {
    %c0_i32 = arith.constant 0 : i32
    %c0_i32_0 = arith.constant 0 : i32
    %c0_i32_1 = arith.constant 0 : i32
    return %arg0, %c0_i32, %c0_i32_0 : i32, i32, i32
  }
  func.func @transform_1(%arg0: i32, %arg1: i32) -> (i32, i32, i32) {
    %c0_i32 = arith.constant 0 : i32
    %c0_i32_0 = arith.constant 0 : i32
    %c0_i32_1 = arith.constant 0 : i32
    %c0_i32_2 = arith.constant 0 : i32
    return %c0_i32, %c0_i32_0, %c0_i32_1 : i32, i32, i32
  }
  func.func @transform_2(%arg0: i32, %arg1: i32) -> (i32, i32, i32) {
    %c0_i32 = arith.constant 0 : i32
    %c0_i32_0 = arith.constant 0 : i32
    %c0_i32_1 = arith.constant 0 : i32
    %c0_i32_2 = arith.constant 0 : i32
    return %c0_i32, %c0_i32_0, %c0_i32_1 : i32, i32, i32
  }
  func.func @transform_3(%arg0: i32, %arg1: i32) -> (i32, i32, i32) {
    %c0_i32 = arith.constant 0 : i32
    %c0_i32_0 = arith.constant 0 : i32
    %c0_i32_1 = arith.constant 0 : i32
    %c0_i32_2 = arith.constant 0 : i32
    return %c0_i32, %c0_i32_0, %c0_i32_1 : i32, i32, i32
  }
  func.func @transform_4(%arg0: i32, %arg1: i32) -> (i32, i32, i32) {
    %c0_i32 = arith.constant 0 : i32
    %c0_i32_0 = arith.constant 0 : i32
    %c0_i32_1 = arith.constant 0 : i32
    %c0_i32_2 = arith.constant 0 : i32
    return %c0_i32, %c0_i32_0, %c0_i32_1 : i32, i32, i32
  }
  func.func @transform_5(%arg0: i32, %arg1: i32) -> (i32, i32, i32) {
    %c0_i32 = arith.constant 0 : i32
    %c0_i32_0 = arith.constant 0 : i32
    %c0_i32_1 = arith.constant 0 : i32
    %c0_i32_2 = arith.constant 0 : i32
    return %c0_i32, %c0_i32_0, %c0_i32_1 : i32, i32, i32
  }
  func.func @transform_6(%arg0: i32, %arg1: i32) -> (i32, i32, i32) {
    %c0_i32 = arith.constant 0 : i32
    %c0_i32_0 = arith.constant 0 : i32
    %c0_i32_1 = arith.constant 0 : i32
    return %arg0, %c0_i32, %c0_i32_0 : i32, i32, i32
  }
}

</mosaic_0001>

<llo_original>
// kernel: tpu_custom_call.1
$region0: #{tpu_custom_call.1}
  #allocation0 [shape = 'u32[]', space=smem, size = 0x4, offset = 0x4, fixed_abs, tag = 'smem constant byte address 0x4 - core index']
  #allocation1 [shape = 'u32[144,128]{1,0:T(1,128)}', space=vmem, size = 0x12000, scoped, tag = 'internal scratch']
  #allocation2 [shape = 'f32[16,32]{1,0:T(8,128)}', space=vmem, size = 0x2000, scoped, tag = 'scratch operand']
  %s0 = inlined_call_operand.hbm [shape: f32[2,8,32], index: 0, kind: input, shape index: {}]
  %s1 = inlined_call_operand.vmem [shape: f32[2,32,96], index: 1, kind: input, shape index: {}]
  %s2 = inlined_call_operand.vmem [shape: f32[2,32,32], index: 2, kind: input, shape index: {}]
  %s3 = inlined_call_operand.vmem [shape: f32[2,32,64], index: 3, kind: input, shape index: {}]
  %s4 = inlined_call_operand.vmem [shape: f32[2,64,32], index: 4, kind: input, shape index: {}]
  %s5 = inlined_call_operand.vmem [shape: f32[2,10,64], index: 5, kind: input, shape index: {}]
  %s6 = inlined_call_operand.hbm [shape: f32[2,8,32], index: 6, kind: output, shape index: {}]
  %s7 = sld [smem:[#allocation0]]
  $region69: #{tpu_custom_call.1} parent=0
    _
  %s9 = ssub.s32 1, %s7
  %s10 = scalar_select 0, %s9, %s7
  $region1: #{tpu_custom_call.1} parent=0
    #allocation3 [shape = 'u8[8192]{0}', space=vmem, size = 0x2000, scoped, tag = 'input window, operand 0, single buffered']
    #allocation4 [shape = 's32[2]{0}', space=sflag, size = 0x8, scoped, tag = 'scoped memory for tpu_custom_call.1']
    #allocation5 [shape = 's32[2]{0}', space=sflag, size = 0x8, scoped, tag = 'scoped memory for tpu_custom_call.1']
    #allocation6 [shape = 'u8[8192]{0}', space=vmem, size = 0x2000, scoped, tag = 'output window, operand 0, single buffered']
    %11 = vsyncpa [#allocation4], 0
    %12 = vsyncpa [#allocation5], 0
    loop: start=0, step=1, limit=4
    $region2: #{tpu_custom_call.1} parent=1 // loop_pre_header
      _
    $region3: #{tpu_custom_call.1} parent=1 // loop_header
      %s14 = sphi 0, %s18
      %p15 = scmp.ge.s32.totalorder %s14, 4
      %s21 = sphi 0, %s33
      %s22 = sphi 0, %s29
      %s23 = sphi 0, %s21
      %s24 = sphi 0, %s22
      %s25 = sphi 0, %s23
      %s26 = sphi 0, %s24
      %s36 = sphi 0, %s38
      %s39 = sphi 0, %s36
      %s40 = sphi 0, %s39
      %s56 = sphi 0, %s40
      %s60 = sphi 0, %s60
      %s62 = sphi 0, %s60
      %s63 = sphi 0, %s62
      %s77 = sphi 0, %s63
      %s81 = sphi 0, %s81
      %s83 = sphi 0, %s81
      %s84 = sphi 0, %s83
      %s98 = sphi 0, %s84
      %s102 = sphi 0, %s102
      %s104 = sphi 0, %s102
      %s105 = sphi 0, %s104
      %s119 = sphi 0, %s105
      %s123 = sphi 0, %s123
      %s125 = sphi 0, %s123
      %s126 = sphi 0, %s125
      %s140 = sphi 0, %s126
      %s144 = sphi 0, %s144
      %s146 = sphi 0, %s144
      %s147 = sphi 0, %s146
      %s161 = sphi 0, %s147
      %s167 = sphi 0, %s169
      %s170 = sphi 0, %s167
      %s171 = sphi 0, %s170
      %s187 = sphi 0, %s171
    $region4: #{tpu_custom_call.1} parent=1 // loop_header_branch
      %17 = sbr.rel (%p15) target = $region8
    $region5: #{tpu_custom_call.1} parent=1 // loop_body
      %s19 = ssub.s32 %s14, 1
      %s20 = ssub.s32 %s14, 2
      %s27 = sadd.s32 1, %s22
      %p28 = scmp.ge.s32.totalorder %s27, 2
      %s29 = scalar_select %p28, 0, %s27
      %s30 = sadd.s32 1, %s21
      %s31 = scalar_select %p28, %s30, %s21
      %p32 = scmp.ge.s32.totalorder %s31, 1
      %s33 = scalar_select %p32, 0, %s31
      %s34 = ssub.s32 %s21, %s33
      %p35 = scmp.eq.s32.totalorder %s34, 0
      %s37 = sadd.s32 %s36, 1
      %s38 = scalar_select %p35, %s36, %s37
      %p41 = pneg %p35
      %p42 = scmp.eq.s32.totalorder %s14, 1
      %p43 = por %p41, %p42
      %p44 = scmp.ne.s32.totalorder %s36, %s39
      %p45 = scmp.eq.s32.totalorder %s14, 0
      %p46 = por %p44, %p45
      %p47 = scmp.ne.s32.totalorder %s36, %s39
      %p48 = scmp.eq.s32.totalorder %s19, 1
      %p49 = por %p47, %p48
      %p50 = scmp.ne.s32.totalorder %s39, %s40
      %p51 = scmp.eq.s32.totalorder %s19, 0
      %p52 = por %p50, %p51
      %p53 = scmp.ne.s32.totalorder %s39, %s40
      %p54 = scmp.eq.s32.totalorder %s20, 1
      %p55 = por %p53, %p54
      %p57 = scmp.ne.s32.totalorder %s40, %s56
      %p58 = scmp.eq.s32.totalorder %s20, 0
      %p59 = por %p57, %p58
      %s61 = sadd.s32 %s60, 1
      %p64 = scmp.eq.s32.totalorder %s14, 1
      %p65 = scmp.ne.s32.totalorder %s60, %s62
      %p66 = scmp.eq.s32.totalorder %s14, 0
      %p67 = por %p65, %p66
      %p68 = scmp.ne.s32.totalorder %s60, %s62
      %p69 = scmp.eq.s32.totalorder %s19, 1
      %p70 = por %p68, %p69
      %p71 = scmp.ne.s32.totalorder %s62, %s63
      %p72 = scmp.eq.s32.totalorder %s19, 0
      %p73 = por %p71, %p72
      %p74 = scmp.ne.s32.totalorder %s62, %s63
      %p75 = scmp.eq.s32.totalorder %s20, 1
      %p76 = por %p74, %p75
      %p78 = scmp.ne.s32.totalorder %s63, %s77
      %p79 = scmp.eq.s32.totalorder %s20, 0
      %p80 = por %p78, %p79
      %s82 = sadd.s32 %s81, 1
      %p85 = scmp.eq.s32.totalorder %s14, 1
      %p86 = scmp.ne.s32.totalorder %s81, %s83
      %p87 = scmp.eq.s32.totalorder %s14, 0
      %p88 = por %p86, %p87
      %p89 = scmp.ne.s32.totalorder %s81, %s83
      %p90 = scmp.eq.s32.totalorder %s19, 1
      %p91 = por %p89, %p90
      %p92 = scmp.ne.s32.totalorder %s83, %s84
      %p93 = scmp.eq.s32.totalorder %s19, 0
      %p94 = por %p92, %p93
      %p95 = scmp.ne.s32.totalorder %s83, %s84
      %p96 = scmp.eq.s32.totalorder %s20, 1
      %p97 = por %p95, %p96
      %p99 = scmp.ne.s32.totalorder %s84, %s98
      %p100 = scmp.eq.s32.totalorder %s20, 0
      %p101 = por %p99, %p100
      %s103 = sadd.s32 %s102, 1
      %p106 = scmp.eq.s32.totalorder %s14, 1
      %p107 = scmp.ne.s32.totalorder %s102, %s104
      %p108 = scmp.eq.s32.totalorder %s14, 0
      %p109 = por %p107, %p108
      %p110 = scmp.ne.s32.totalorder %s102, %s104
      %p111 = scmp.eq.s32.totalorder %s19, 1
      %p112 = por %p110, %p111
      %p113 = scmp.ne.s32.totalorder %s104, %s105
      %p114 = scmp.eq.s32.totalorder %s19, 0
      %p115 = por %p113, %p114
      %p116 = scmp.ne.s32.totalorder %s104, %s105
      %p117 = scmp.eq.s32.totalorder %s20, 1
      %p118 = por %p116, %p117
      %p120 = scmp.ne.s32.totalorder %s105, %s119
      %p121 = scmp.eq.s32.totalorder %s20, 0
      %p122 = por %p120, %p121
      %s124 = sadd.s32 %s123, 1
      %p127 = scmp.eq.s32.totalorder %s14, 1
      %p128 = scmp.ne.s32.totalorder %s123, %s125
      %p129 = scmp.eq.s32.totalorder %s14, 0
      %p130 = por %p128, %p129
      %p131 = scmp.ne.s32.totalorder %s123, %s125
      %p132 = scmp.eq.s32.totalorder %s19, 1
      %p133 = por %p131, %p132
      %p134 = scmp.ne.s32.totalorder %s125, %s126
      %p135 = scmp.eq.s32.totalorder %s19, 0
      %p136 = por %p134, %p135
      %p137 = scmp.ne.s32.totalorder %s125, %s126
      %p138 = scmp.eq.s32.totalorder %s20, 1
      %p139 = por %p137, %p138
      %p141 = scmp.ne.s32.totalorder %s126, %s140
      %p142 = scmp.eq.s32.totalorder %s20, 0
      %p143 = por %p141, %p142
      %s145 = sadd.s32 %s144, 1
      %p148 = scmp.eq.s32.totalorder %s14, 1
      %p149 = scmp.ne.s32.totalorder %s144, %s146
      %p150 = scmp.eq.s32.totalorder %s14, 0
      %p151 = por %p149, %p150
      %p152 = scmp.ne.s32.totalorder %s144, %s146
      %p153 = scmp.eq.s32.totalorder %s19, 1
      %p154 = por %p152, %p153
      %p155 = scmp.ne.s32.totalorder %s146, %s147
      %p156 = scmp.eq.s32.totalorder %s19, 0
      %p157 = por %p155, %p156
      %p158 = scmp.ne.s32.totalorder %s146, %s147
      %p159 = scmp.eq.s32.totalorder %s20, 1
      %p160 = por %p158, %p159
      %p162 = scmp.ne.s32.totalorder %s147, %s161
      %p163 = scmp.eq.s32.totalorder %s20, 0
      %p164 = por %p162, %p163
      %s165 = ssub.s32 %s21, %s33
      %p166 = scmp.eq.s32.totalorder %s165, 0
      %s168 = sadd.s32 %s167, 1
      %s169 = scalar_select %p166, %s167, %s168
      %p172 = pneg %p166
      %p173 = scmp.eq.s32.totalorder %s14, 1
      %p174 = por %p172, %p173
      %p175 = scmp.ne.s32.totalorder %s167, %s170
      %p176 = scmp.eq.s32.totalorder %s14, 0
      %p177 = por %p175, %p176
      %p178 = scmp.ne.s32.totalorder %s167, %s170
      %p179 = scmp.eq.s32.totalorder %s19, 1
      %p180 = por %p178, %p179
      %p181 = scmp.ne.s32.totalorder %s170, %s171
      %p182 = scmp.eq.s32.totalorder %s19, 0
      %p183 = por %p181, %p182
      %p184 = scmp.ne.s32.totalorder %s170, %s171
      %p185 = scmp.eq.s32.totalorder %s20, 1
      %p186 = por %p184, %p185
      %p188 = scmp.ne.s32.totalorder %s171, %s187
      %p189 = scmp.eq.s32.totalorder %s20, 0
      %p190 = por %p188, %p189
      %p191 = scmp.le.s32.totalorder 1, %s14
      %p192 = scmp.lt.s32.totalorder %s14, 3
      %p193 = pnand %p191, %p192
      %p194 = pneg %p193
      // Predicated region
      $region9: #{tpu_custom_call.1} parent=5 // pred_check
        _
      $region10: #{tpu_custom_call.1} parent=5 // pred_check_branch
        %196 = sbr.rel (%p193) target = $region12
      $region11: #{tpu_custom_call.1} parent=5 // pred_region
        %s197 = ssub.s32 %s14, 1
        // Predicated region
        $region13: #{tpu_custom_call.1} parent=11 // pred_check
          %p198 = pneg %p52
        $region14: #{tpu_custom_call.1} parent=11 // pred_check_branch
          %200 = sbr.rel (%p198) target = $region16
        $region15: #{tpu_custom_call.1} parent=11 // pred_region
          %s201 = smul.u32 2, %s23
          %s203 = ssub.s32 256, 256
          %204 = vsyncadd [#allocation4], %s203
          %s205 = smul.addr %s201, 128
          %s206 = scalar_lea.hbm %s0, %s205
          %s207 = sshll.u32 [#allocation3], 4
          %s208 = int_to_ptr.vmem [resolvable:$true] %s207
          %213 = dma.hbm_to_vmem [thread:$0]  %s206, 256, %s208, [#allocation4], 128, 128, 8
        $region16: #{tpu_custom_call.1} parent=11 // pred_fallthru
          _
        // Predicated region
        $region17: #{tpu_custom_call.1} parent=11 // pred_check
          %p214 = pneg %p73
        $region18: #{tpu_custom_call.1} parent=11 // pred_check_branch
          %216 = sbr.rel (%p214) target = $region20
        $region19: #{tpu_custom_call.1} parent=11 // pred_region
          _
        $region20: #{tpu_custom_call.1} parent=11 // pred_fallthru
          _
        // Predicated region
        $region21: #{tpu_custom_call.1} parent=11 // pred_check
          %p217 = pneg %p94
        $region22: #{tpu_custom_call.1} parent=11 // pred_check_branch
          %219 = sbr.rel (%p217) target = $region24
        $region23: #{tpu_custom_call.1} parent=11 // pred_region
          _
        $region24: #{tpu_custom_call.1} parent=11 // pred_fallthru
          _
        // Predicated region
        $region25: #{tpu_custom_call.1} parent=11 // pred_check
          %p220 = pneg %p115
        $region26: #{tpu_custom_call.1} parent=11 // pred_check_branch
          %222 = sbr.rel (%p220) target = $region28
        $region27: #{tpu_custom_call.1} parent=11 // pred_region
          _
        $region28: #{tpu_custom_call.1} parent=11 // pred_fallthru
          _
        // Predicated region
        $region29: #{tpu_custom_call.1} parent=11 // pred_check
          %p223 = pneg %p136
        $region30: #{tpu_custom_call.1} parent=11 // pred_check_branch
          %225 = sbr.rel (%p223) target = $region32
        $region31: #{tpu_custom_call.1} parent=11 // pred_region
          _
        $region32: #{tpu_custom_call.1} parent=11 // pred_fallthru
          _
        // Predicated region
        $region33: #{tpu_custom_call.1} parent=11 // pred_check
          %p226 = pneg %p157
        $region34: #{tpu_custom_call.1} parent=11 // pred_check_branch
          %228 = sbr.rel (%p226) target = $region36
        $region35: #{tpu_custom_call.1} parent=11 // pred_region
          _
        $region36: #{tpu_custom_call.1} parent=11 // pred_fallthru
          _
      $region12: #{tpu_custom_call.1} parent=5 // pred_fallthru
        _
      %p229 = scmp.lt.s32.totalorder %s14, 2
      // Predicated region
      $region37: #{tpu_custom_call.1} parent=5 // pred_check
        %p230 = pneg %p229
      $region38: #{tpu_custom_call.1} parent=5 // pred_check_branch
        %232 = sbr.rel (%p230) target = $region40
      $region39: #{tpu_custom_call.1} parent=5 // pred_region
        _
      $region40: #{tpu_custom_call.1} parent=5 // pred_fallthru
        _
      %p233 = scmp.le.s32.totalorder 1, %s14
      %p234 = scmp.lt.s32.totalorder %s14, 3
      %p235 = pnand %p233, %p234
      %p236 = pneg %p235
      // Predicated region
      $region41: #{tpu_custom_call.1} parent=5 // pred_check
        _
      $region42: #{tpu_custom_call.1} parent=5 // pred_check_branch
        %238 = sbr.rel (%p235) target = $region44
      $region43: #{tpu_custom_call.1} parent=5 // pred_region
        %s239 = ssub.s32 %s14, 1
        // Predicated region
        $region45: #{tpu_custom_call.1} parent=43 // pred_check
          %p240 = pneg %p52
        $region46: #{tpu_custom_call.1} parent=43 // pred_check_branch
          %242 = sbr.rel (%p240) target = $region48
        $region47: #{tpu_custom_call.1} parent=43 // pred_region
          %243 = dma.done [#allocation4], 256
        $region48: #{tpu_custom_call.1} parent=43 // pred_fallthru
          _
        %p244 = pneg %p52
        %p245 = pneg %p49
        %p246 = pneg %p73
        %p247 = pneg %p70
        %p248 = pneg %p94
        %p249 = pneg %p91
        %p250 = pneg %p115
        %p251 = pneg %p112
        %p252 = pneg %p136
        %p253 = pneg %p133
        %p254 = pneg %p157
        %p255 = pneg %p154
        %p256 = pneg %p183
        %p257 = pneg %p180
        %s258 = smul.u32 2, %s23
        %s259 = smul.u32 2, %s23
        %p260 = scmp.eq.s32.totalorder %s24, 0
        // Predicated region
        $region49: #{tpu_custom_call.1} parent=43 // pred_check
          %p261 = pneg %p260
        $region50: #{tpu_custom_call.1} parent=43 // pred_check_branch
          %263 = sbr.rel (%p261) target = $region52
        $region51: #{tpu_custom_call.1} parent=43 // pred_region
          %v264 = vld [vmem:[#allocation3] sm:$0xff]
          %v265 = vld [vmem:[#allocation3 + $0x8] sm:$0xff]
          %vm266 = vcmask 261120
          %267 = vst.msk [vmem:[#allocation2] sm:$0xff] %vm266, %v264
          %268 = vst.msk [vmem:[#allocation2 + $0x8] sm:$0xff] %vm266, %v265
        $region52: #{tpu_custom_call.1} parent=43 // pred_fallthru
          _
        %v269 = vld [vmem:[#allocation2] sm:$0xff]
        %v270 = vld [vmem:[#allocation2 + $0x8] sm:$0xff]
        %s271 = smul.u32 %s24, 32
        %s272 = scalar_lea.vmem %s1, %s271
        %v273 = vld [vmem:[%s272] sm:$0xff]
        %v274 = vld [vmem:[%s272 + $0x8] sm:$0xff]
        %v275 = vld [vmem:[%s272 + $0x10] sm:$0xff]
        %v276 = vld [vmem:[%s272 + $0x18] sm:$0xff]
        %s277 = scalar_lea.vmem %s2, %s271
        %v278 = vld [vmem:[%s277] sm:$0xff]
        %v279 = vld [vmem:[%s277 + $0x8] sm:$0xff]
        %v280 = vld [vmem:[%s277 + $0x10] sm:$0xff]
        %v281 = vld [vmem:[%s277 + $0x18] sm:$0xff]
        %s282 = scalar_lea.vmem %s3, %s271
        %v283 = vld [vmem:[%s282] sm:$0xff]
        %v284 = vld [vmem:[%s282 + $0x8] sm:$0xff]
        %v285 = vld [vmem:[%s282 + $0x10] sm:$0xff]
        %v286 = vld [vmem:[%s282 + $0x18] sm:$0xff]
        %s287 = smul.u32 %s24, 64
        %s288 = scalar_lea.vmem %s4, %s287
        %v289 = vld [vmem:[%s288] sm:$0xff]
        %v290 = vld [vmem:[%s288 + $0x8] sm:$0xff]
        %v291 = vld [vmem:[%s288 + $0x10] sm:$0xff]
        %v292 = vld [vmem:[%s288 + $0x18] sm:$0xff]
        %v293 = vld [vmem:[%s288 + $0x20] sm:$0xff]
        %v294 = vld [vmem:[%s288 + $0x28] sm:$0xff]
        %v295 = vld [vmem:[%s288 + $0x30] sm:$0xff]
        %v296 = vld [vmem:[%s288 + $0x38] sm:$0xff]
        %s297 = smul.u32 %s24, 16
        %s298 = scalar_lea.vmem %s5, %s297
        %v299 = vld [vmem:[%s298] sm:$0xff]
        %v300 = vld [vmem:[%s298 + $0x8] sm:$0x3]
        %vm301 = vcmask 261120
        %v303 = vsel %vm301, %v269, 0
        %v306 = vsel %vm301, %v270, 0
        %308 = vmatprep.subr.mxu0 0.0
        %309 = vmatpush1.msra.mxu0 %v273
        %310 = vmatprep.subr.mxu0 0.0
        %311 = vmatpush1.msra.mxu0 %v274
        %312 = vmatprep.subr.mxu0 0.0
        %313 = vmatpush1.msra.mxu0 %v275
        %314 = vmatprep.subr.mxu0 0.0
        %315 = vmatpush1.msra.mxu0 %v276
        %316 = vmatprep.subr.mxu0 0.0
        %317 = vmatpush1.msra.mxu0 0.0
        %318 = vmatprep.subr.mxu0 0.0
        %319 = vmatpush1.msra.mxu0 0.0
        %320 = vmatprep.subr.mxu0 0.0
        %321 = vmatpush1.msra.mxu0 0.0
        %322 = vmatprep.subr.mxu0 0.0
        %323 = vmatpush1.msra.mxu0 0.0
        %324 = vmatprep.subr.mxu0 0.0
        %325 = vmatpush1.msra.mxu0 0.0
        %326 = vmatprep.subr.mxu0 0.0
        %327 = vmatpush1.msra.mxu0 0.0
        %328 = vmatprep.subr.mxu0 0.0
        %329 = vmatpush1.msra.mxu0 0.0
        %330 = vmatprep.subr.mxu0 0.0
        %331 = vmatpush1.msra.mxu0 0.0
        %332 = vmatprep.subr.mxu0 0.0
        %333 = vmatpush1.msra.mxu0 0.0
        %334 = vmatprep.subr.mxu0 0.0
        %335 = vmatpush1.msra.mxu0 0.0
        %336 = vmatprep.subr.mxu0 0.0
        %337 = vmatpush1.msra.mxu0 0.0
        %338 = vmatprep.subr.mxu0 0.0
        %339 = vmatpush1.msra.mxu0 0.0
        %340 = vmatprep.subr.mxu0 0.0
        %341 = vmatpush1.msra.mxu0 0.0
        %342 = vmatprep.subr.mxu0 0.0
        %343 = vmatpush1.msra.mxu0 0.0
        %344 = vmatprep.subr.mxu0 0.0
        %345 = vmatpush1.msra.mxu0 0.0
        %346 = vmatprep.subr.mxu0 0.0
        %347 = vmatpush1.msra.mxu0 0.0
        %348 = vmatprep.subr.mxu0 0.0
        %349 = vmatpush1.msra.mxu0 0.0
        %350 = vmatprep.subr.mxu0 0.0
        %351 = vmatpush1.msra.mxu0 0.0
        %352 = vmatprep.subr.mxu0 0.0
        %353 = vmatpush1.msra.mxu0 0.0
        %354 = vmatprep.subr.mxu0 0.0
        %355 = vmatpush1.msra.mxu0 0.0
        %356 = vmatprep.subr.mxu0 0.0
        %357 = vmatpush1.msra.mxu0 0.0
        %358 = vmatprep.subr.mxu0 0.0
        %359 = vmatpush1.msra.mxu0 0.0
        %360 = vmatprep.subr.mxu0 0.0
        %361 = vmatpush1.msra.mxu0 0.0
        %362 = vmatprep.subr.mxu0 0.0
        %363 = vmatpush1.msra.mxu0 0.0
        %364 = vmatprep.subr.mxu0 0.0
        %365 = vmatpush1.msra.mxu0 0.0
        %366 = vmatprep.subr.mxu0 0.0
        %367 = vmatpush1.msra.mxu0 0.0
        %368 = vmatprep.subr.mxu0 0.0
        %369 = vmatpush1.msra.mxu0 0.0
        %370 = vmatprep.subr.mxu0 0.0
        %371 = vmatpush1.msra.mxu0 0.0
        %372 = vmatprep.mubr.f32.mxu0 0.0
        %373 = vmatmul.mubr.f32.gmra.mrb[0].mxu0 %v303
        %v374 = vpop.f32.mrb[0].mxu0
        %v375 = vadd.f32 0.0, %v374
        %v376 = vpop.f32.mrb[0].mxu0
        %377 = vmatprep.mubr.f32.mxu0 0.0
        %378 = vmatmul.mubr.f32.gmra.mrb[0].mxu0 %v306
        %v379 = vpop.f32.mrb[0].mxu0
        %v380 = vadd.f32 0.0, %v379
        %v381 = vpop.f32.mrb[0].mxu0
        %382 = vdwg.mxu0
        %v383 = vlaneseq
        %v384 = vshrl.u32 %v383, 7
        %v385 = vsub.s32 0, %v384
        %v386 = vrot.slane %v299, %v385
        %v387 = vadd.f32 %v375, %v386
        %v388 = vadd.f32 %v380, %v386
        %v389 = vmul.f32 %v387, 0.35355338
        %v390 = vmul.f32 %v388, 0.35355338
        %v391 = vlaneseq
        %v392 = vshrl.u32 %v391, 7
        %v393 = vsub.s32 1, %v392
        %v394 = vrot.slane %v299, %v393
        %396 = vrot.lane.b32.xlu0 %v394, 32
        %v397 = vpop.permute.xlu0 %396
        %v399 = vadd.f32 %v375, %v397
        %v400 = vadd.f32 %v380, %v397
        %v401 = vlaneseq
        %v402 = vshrl.u32 %v401, 7
        %v403 = vsub.s32 2, %v402
        %v404 = vrot.slane %v299, %v403
        %406 = vrot.lane.b32.xlu0 %v404, 64
        %v407 = vpop.permute.xlu0 %406
        %v409 = vadd.f32 %v375, %v407
        %v410 = vadd.f32 %v380, %v407
        %413 = vrot.lane.b32.xlu0 %v389, 120
        %v414 = vpop.permute.xlu0 %413
        %415 = vrot.lane.b32.xlu0 %v390, 120
        %v416 = vpop.permute.xlu0 %415
        %419 = vrot.lane.b32.xlu0 %v389, 112
        %v420 = vpop.permute.xlu0 %419
        %421 = vrot.lane.b32.xlu0 %v390, 112
        %v422 = vpop.permute.xlu0 %421
        %425 = vrot.lane.b32.xlu0 %v389, 104
        %v426 = vpop.permute.xlu0 %425
        %427 = vrot.lane.b32.xlu0 %v390, 104
        %v428 = vpop.permute.xlu0 %427
        %v431 = vcombine.low %v389, %v420
        %v432 = vcombine.high %v389, %v420
        %v434 = vunpack.c.l.s4 1983009808
        %v435 = vunpack.c.0.s8 %v434
        %v436 = vlaneseq
        %v437 = vshrl.u32 %v436, 7
        %v438 = vsub.s32 %v435, %v437
        %v439 = vrot.slane %v431, %v438
        %v441 = vunpack.c.l.s4 1983009808
        %v442 = vunpack.c.0.s8 %v441
        %v443 = vlaneseq
        %v444 = vshrl.u32 %v443, 7
        %v445 = vsub.s32 %v442, %v444
        %v446 = vrot.slane %v432, %v445
        %v447 = vcombine.low %v414, %v426
        %v448 = vcombine.high %v414, %v426
        %v450 = vunpack.c.l.s4 1983009808
        %v451 = vunpack.c.0.s8 %v450
        %v452 = vlaneseq
        %v453 = vshrl.u32 %v452, 7
        %v454 = vsub.s32 %v451, %v453
        %v455 = vrot.slane %v447, %v454
        %v457 = vunpack.c.l.s4 1983009808
        %v458 = vunpack.c.0.s8 %v457
        %v459 = vlaneseq
        %v460 = vshrl.u32 %v459, 7
        %v461 = vsub.s32 %v458, %v460
        %v462 = vrot.slane %v448, %v461
        %v463 = vcombine.low %v439, %v455
        %v464 = vcombine.high %v439, %v455
        %v466 = vunpack.c.l.s4 1934713408
        %v467 = vunpack.c.0.s8 %v466
        %v468 = vlaneseq
        %v469 = vshrl.u32 %v468, 7
        %v470 = vsub.s32 %v467, %v469
        %v471 = vrot.slane %v463, %v470
        %v473 = vunpack.c.l.s4 1934713408
        %v474 = vunpack.c.0.s8 %v473
        %v475 = vlaneseq
        %v476 = vshrl.u32 %v475, 7
        %v477 = vsub.s32 %v474, %v476
        %v478 = vrot.slane %v464, %v477
        %v479 = vcombine.low %v446, %v462
        %v480 = vcombine.high %v446, %v462
        %v482 = vunpack.c.l.s4 1934713408
        %v483 = vunpack.c.0.s8 %v482
        %v484 = vlaneseq
        %v485 = vshrl.u32 %v484, 7
        %v486 = vsub.s32 %v483, %v485
        %v487 = vrot.slane %v479, %v486
        %v489 = vunpack.c.l.s4 1934713408
        %v490 = vunpack.c.0.s8 %v489
        %v491 = vlaneseq
        %v492 = vshrl.u32 %v491, 7
        %v493 = vsub.s32 %v490, %v492
        %v494 = vrot.slane %v480, %v493
        %v495 = vcombine.high %v471, 0.0
        %v496 = vcombine.high %v478, 0.0
        %v497 = vcombine.high %v487, 0.0
        %v498 = vcombine.high %v494, 0.0
        %v499 = vcombine.low %v390, %v422
        %v500 = vcombine.high %v390, %v422
        %v502 = vunpack.c.l.s4 1983009808
        %v503 = vunpack.c.0.s8 %v502
        %v504 = vlaneseq
        %v505 = vshrl.u32 %v504, 7
        %v506 = vsub.s32 %v503, %v505
        %v507 = vrot.slane %v499, %v506
        %v509 = vunpack.c.l.s4 1983009808
        %v510 = vunpack.c.0.s8 %v509
        %v511 = vlaneseq
        %v512 = vshrl.u32 %v511, 7
        %v513 = vsub.s32 %v510, %v512
        %v514 = vrot.slane %v500, %v513
        %v515 = vcombine.low %v416, %v428
        %v516 = vcombine.high %v416, %v428
        %v518 = vunpack.c.l.s4 1983009808
        %v519 = vunpack.c.0.s8 %v518
        %v520 = vlaneseq
        %v521 = vshrl.u32 %v520, 7
        %v522 = vsub.s32 %v519, %v521
        %v523 = vrot.slane %v515, %v522
        %v525 = vunpack.c.l.s4 1983009808
        %v526 = vunpack.c.0.s8 %v525
        %v527 = vlaneseq
        %v528 = vshrl.u32 %v527, 7
        %v529 = vsub.s32 %v526, %v528
        %v530 = vrot.slane %v516, %v529
        %v531 = vcombine.low %v507, %v523
        %v532 = vcombine.high %v507, %v523
        %v534 = vunpack.c.l.s4 1934713408
        %v535 = vunpack.c.0.s8 %v534
        %v536 = vlaneseq
        %v537 = vshrl.u32 %v536, 7
        %v538 = vsub.s32 %v535, %v537
        %v539 = vrot.slane %v531, %v538
        %v541 = vunpack.c.l.s4 1934713408
        %v542 = vunpack.c.0.s8 %v541
        %v543 = vlaneseq
        %v544 = vshrl.u32 %v543, 7
        %v545 = vsub.s32 %v542, %v544
        %v546 = vrot.slane %v532, %v545
        %v547 = vcombine.low %v514, %v530
        %v548 = vcombine.high %v514, %v530
        %v550 = vunpack.c.l.s4 1934713408
        %v551 = vunpack.c.0.s8 %v550
        %v552 = vlaneseq
        %v553 = vshrl.u32 %v552, 7
        %v554 = vsub.s32 %v551, %v553
        %v555 = vrot.slane %v547, %v554
        %v557 = vunpack.c.l.s4 1934713408
        %v558 = vunpack.c.0.s8 %v557
        %v559 = vlaneseq
        %v560 = vshrl.u32 %v559, 7
        %v561 = vsub.s32 %v558, %v560
        %v562 = vrot.slane %v548, %v561
        %v563 = vcombine.high %v539, 0.0
        %v564 = vcombine.high %v546, 0.0
        %v565 = vcombine.high %v555, 0.0
        %v566 = vcombine.high %v562, 0.0
        %v567 = vcombine.low %v471, %v478
        %v569 = vunpack.c.l.s4 1983009808
        %v570 = vunpack.c.0.s8 %v569
        %v571 = vlaneseq
        %v572 = vshrl.u32 %v571, 7
        %v573 = vsub.s32 %v570, %v572
        %v574 = vrot.slane %v567, %v573
        %v575 = vcombine.low %v495, %v496
        %v577 = vunpack.c.l.s4 1983009808
        %v578 = vunpack.c.0.s8 %v577
        %v579 = vlaneseq
        %v580 = vshrl.u32 %v579, 7
        %v581 = vsub.s32 %v578, %v580
        %v582 = vrot.slane %v575, %v581
        %v583 = vcombine.low %v487, %v494
        %v585 = vunpack.c.l.s4 1983009808
        %v586 = vunpack.c.0.s8 %v585
        %v587 = vlaneseq
        %v588 = vshrl.u32 %v587, 7
        %v589 = vsub.s32 %v586, %v588
        %v590 = vrot.slane %v583, %v589
        %v591 = vcombine.low %v497, %v498
        %v593 = vunpack.c.l.s4 1983009808
        %v594 = vunpack.c.0.s8 %v593
        %v595 = vlaneseq
        %v596 = vshrl.u32 %v595, 7
        %v597 = vsub.s32 %v594, %v596
        %v598 = vrot.slane %v591, %v597
        %v599 = vcombine.low %v574, %v582
        %v600 = vcombine.high %v574, %v582
        %v602 = vunpack.c.l.s4 1934713408
        %v603 = vunpack.c.0.s8 %v602
        %v604 = vlaneseq
        %v605 = vshrl.u32 %v604, 7
        %v606 = vsub.s32 %v603, %v605
        %v607 = vrot.slane %v599, %v606
        %v609 = vunpack.c.l.s4 1934713408
        %v610 = vunpack.c.0.s8 %v609
        %v611 = vlaneseq
        %v612 = vshrl.u32 %v611, 7
        %v613 = vsub.s32 %v610, %v612
        %v614 = vrot.slane %v600, %v613
        %v615 = vcombine.low %v590, %v598
        %v616 = vcombine.high %v590, %v598
        %v618 = vunpack.c.l.s4 1934713408
        %v619 = vunpack.c.0.s8 %v618
        %v620 = vlaneseq
        %v621 = vshrl.u32 %v620, 7
        %v622 = vsub.s32 %v619, %v621
        %v623 = vrot.slane %v615, %v622
        %v625 = vunpack.c.l.s4 1934713408
        %v626 = vunpack.c.0.s8 %v625
        %v627 = vlaneseq
        %v628 = vshrl.u32 %v627, 7
        %v629 = vsub.s32 %v626, %v628
        %v630 = vrot.slane %v616, %v629
        %v631 = vcombine.low %v607, %v623
        %v632 = vcombine.high %v607, %v623
        %v633 = vcombine.low %v614, %v630
        %v634 = vcombine.high %v614, %v630
        %v635 = vcombine.low %v539, %v546
        %v637 = vunpack.c.l.s4 1983009808
        %v638 = vunpack.c.0.s8 %v637
        %v639 = vlaneseq
        %v640 = vshrl.u32 %v639, 7
        %v641 = vsub.s32 %v638, %v640
        %v642 = vrot.slane %v635, %v641
        %v643 = vcombine.low %v563, %v564
        %v645 = vunpack.c.l.s4 1983009808
        %v646 = vunpack.c.0.s8 %v645
        %v647 = vlaneseq
        %v648 = vshrl.u32 %v647, 7
        %v649 = vsub.s32 %v646, %v648
        %v650 = vrot.slane %v643, %v649
        %v651 = vcombine.low %v555, %v562
        %v653 = vunpack.c.l.s4 1983009808
        %v654 = vunpack.c.0.s8 %v653
        %v655 = vlaneseq
        %v656 = vshrl.u32 %v655, 7
        %v657 = vsub.s32 %v654, %v656
        %v658 = vrot.slane %v651, %v657
        %v659 = vcombine.low %v565, %v566
        %v661 = vunpack.c.l.s4 1983009808
        %v662 = vunpack.c.0.s8 %v661
        %v663 = vlaneseq
        %v664 = vshrl.u32 %v663, 7
        %v665 = vsub.s32 %v662, %v664
        %v666 = vrot.slane %v659, %v665
        %v667 = vcombine.low %v642, %v650
        %v668 = vcombine.high %v642, %v650
        %v670 = vunpack.c.l.s4 1934713408
        %v671 = vunpack.c.0.s8 %v670
        %v672 = vlaneseq
        %v673 = vshrl.u32 %v672, 7
        %v674 = vsub.s32 %v671, %v673
        %v675 = vrot.slane %v667, %v674
        %v677 = vunpack.c.l.s4 1934713408
        %v678 = vunpack.c.0.s8 %v677
        %v679 = vlaneseq
        %v680 = vshrl.u32 %v679, 7
        %v681 = vsub.s32 %v678, %v680
        %v682 = vrot.slane %v668, %v681
        %v683 = vcombine.low %v658, %v666
        %v684 = vcombine.high %v658, %v666
        %v686 = vunpack.c.l.s4 1934713408
        %v687 = vunpack.c.0.s8 %v686
        %v688 = vlaneseq
        %v689 = vshrl.u32 %v688, 7
        %v690 = vsub.s32 %v687, %v689
        %v691 = vrot.slane %v683, %v690
        %v693 = vunpack.c.l.s4 1934713408
        %v694 = vunpack.c.0.s8 %v693
        %v695 = vlaneseq
        %v696 = vshrl.u32 %v695, 7
        %v697 = vsub.s32 %v694, %v696
        %v698 = vrot.slane %v684, %v697
        %v699 = vcombine.low %v675, %v691
        %v700 = vcombine.high %v675, %v691
        %v701 = vcombine.low %v682, %v698
        %v702 = vcombine.high %v682, %v698
        %705 = vrot.lane.b32.xlu0 %v399, 120
        %v706 = vpop.permute.xlu0 %705
        %707 = vrot.lane.b32.xlu0 %v400, 120
        %v708 = vpop.permute.xlu0 %707
        %709 = vrot.lane.b32.xlu0 %v399, 112
        %v710 = vpop.permute.xlu0 %709
        %711 = vrot.lane.b32.xlu0 %v400, 112
        %v712 = vpop.permute.xlu0 %711
        %713 = vrot.lane.b32.xlu0 %v399, 104
        %v714 = vpop.permute.xlu0 %713
        %715 = vrot.lane.b32.xlu0 %v400, 104
        %v716 = vpop.permute.xlu0 %715
        %717 = vrot.lane.b32.xlu0 %v399, 96
        %v718 = vpop.permute.xlu0 %717
        %719 = vrot.lane.b32.xlu0 %v400, 96
        %v720 = vpop.permute.xlu0 %719
        %721 = vrot.lane.b32.xlu0 %v706, 96
        %v722 = vpop.permute.xlu0 %721
        %723 = vrot.lane.b32.xlu0 %v708, 96
        %v724 = vpop.permute.xlu0 %723
        %725 = vrot.lane.b32.xlu0 %v710, 96
        %v726 = vpop.permute.xlu0 %725
        %727 = vrot.lane.b32.xlu0 %v712, 96
        %v728 = vpop.permute.xlu0 %727
        %729 = vrot.lane.b32.xlu0 %v714, 96
        %v730 = vpop.permute.xlu0 %729
        %731 = vrot.lane.b32.xlu0 %v716, 96
        %v732 = vpop.permute.xlu0 %731
        %v741 = vcombine.low %v718, %v726
        %v742 = vcombine.high %v718, %v726
        %v744 = vunpack.c.l.s4 1983009808
        %v745 = vunpack.c.0.s8 %v744
        %v746 = vlaneseq
        %v747 = vshrl.u32 %v746, 7
        %v748 = vsub.s32 %v745, %v747
        %v749 = vrot.slane %v741, %v748
        %v751 = vunpack.c.l.s4 1983009808
        %v752 = vunpack.c.0.s8 %v751
        %v753 = vlaneseq
        %v754 = vshrl.u32 %v753, 7
        %v755 = vsub.s32 %v752, %v754
        %v756 = vrot.slane %v742, %v755
        %v757 = vcombine.low %v722, %v730
        %v758 = vcombine.high %v722, %v730
        %v760 = vunpack.c.l.s4 1983009808
        %v761 = vunpack.c.0.s8 %v760
        %v762 = vlaneseq
        %v763 = vshrl.u32 %v762, 7
        %v764 = vsub.s32 %v761, %v763
        %v765 = vrot.slane %v757, %v764
        %v767 = vunpack.c.l.s4 1983009808
        %v768 = vunpack.c.0.s8 %v767
        %v769 = vlaneseq
        %v770 = vshrl.u32 %v769, 7
        %v771 = vsub.s32 %v768, %v770
        %v772 = vrot.slane %v758, %v771
        %v773 = vcombine.low %v749, %v765
        %v774 = vcombine.high %v749, %v765
        %v776 = vunpack.c.l.s4 1934713408
        %v777 = vunpack.c.0.s8 %v776
        %v778 = vlaneseq
        %v779 = vshrl.u32 %v778, 7
        %v780 = vsub.s32 %v777, %v779
        %v781 = vrot.slane %v773, %v780
        %v783 = vunpack.c.l.s4 1934713408
        %v784 = vunpack.c.0.s8 %v783
        %v785 = vlaneseq
        %v786 = vshrl.u32 %v785, 7
        %v787 = vsub.s32 %v784, %v786
        %v788 = vrot.slane %v774, %v787
        %v789 = vcombine.low %v756, %v772
        %v790 = vcombine.high %v756, %v772
        %v792 = vunpack.c.l.s4 1934713408
        %v793 = vunpack.c.0.s8 %v792
        %v794 = vlaneseq
        %v795 = vshrl.u32 %v794, 7
        %v796 = vsub.s32 %v793, %v795
        %v797 = vrot.slane %v789, %v796
        %v799 = vunpack.c.l.s4 1934713408
        %v800 = vunpack.c.0.s8 %v799
        %v801 = vlaneseq
        %v802 = vshrl.u32 %v801, 7
        %v803 = vsub.s32 %v800, %v802
        %v804 = vrot.slane %v790, %v803
        %v805 = vcombine.high %v781, 0.0
        %v806 = vcombine.high %v788, 0.0
        %v807 = vcombine.high %v797, 0.0
        %v808 = vcombine.high %v804, 0.0
        %v809 = vcombine.low %v720, %v728
        %v810 = vcombine.high %v720, %v728
        %v812 = vunpack.c.l.s4 1983009808
        %v813 = vunpack.c.0.s8 %v812
        %v814 = vlaneseq
        %v815 = vshrl.u32 %v814, 7
        %v816 = vsub.s32 %v813, %v815
        %v817 = vrot.slane %v809, %v816
        %v819 = vunpack.c.l.s4 1983009808
        %v820 = vunpack.c.0.s8 %v819
        %v821 = vlaneseq
        %v822 = vshrl.u32 %v821, 7
        %v823 = vsub.s32 %v820, %v822
        %v824 = vrot.slane %v810, %v823
        %v825 = vcombine.low %v724, %v732
        %v826 = vcombine.high %v724, %v732
        %v828 = vunpack.c.l.s4 1983009808
        %v829 = vunpack.c.0.s8 %v828
        %v830 = vlaneseq
        %v831 = vshrl.u32 %v830, 7
        %v832 = vsub.s32 %v829, %v831
        %v833 = vrot.slane %v825, %v832
        %v835 = vunpack.c.l.s4 1983009808
        %v836 = vunpack.c.0.s8 %v835
        %v837 = vlaneseq
        %v838 = vshrl.u32 %v837, 7
        %v839 = vsub.s32 %v836, %v838
        %v840 = vrot.slane %v826, %v839
        %v841 = vcombine.low %v817, %v833
        %v842 = vcombine.high %v817, %v833
        %v844 = vunpack.c.l.s4 1934713408
        %v845 = vunpack.c.0.s8 %v844
        %v846 = vlaneseq
        %v847 = vshrl.u32 %v846, 7
        %v848 = vsub.s32 %v845, %v847
        %v849 = vrot.slane %v841, %v848
        %v851 = vunpack.c.l.s4 1934713408
        %v852 = vunpack.c.0.s8 %v851
        %v853 = vlaneseq
        %v854 = vshrl.u32 %v853, 7
        %v855 = vsub.s32 %v852, %v854
        %v856 = vrot.slane %v842, %v855
        %v857 = vcombine.low %v824, %v840
        %v858 = vcombine.high %v824, %v840
        %v860 = vunpack.c.l.s4 1934713408
        %v861 = vunpack.c.0.s8 %v860
        %v862 = vlaneseq
        %v863 = vshrl.u32 %v862, 7
        %v864 = vsub.s32 %v861, %v863
        %v865 = vrot.slane %v857, %v864
        %v867 = vunpack.c.l.s4 1934713408
        %v868 = vunpack.c.0.s8 %v867
        %v869 = vlaneseq
        %v870 = vshrl.u32 %v869, 7
        %v871 = vsub.s32 %v868, %v870
        %v872 = vrot.slane %v858, %v871
        %v873 = vcombine.high %v849, 0.0
        %v874 = vcombine.high %v856, 0.0
        %v875 = vcombine.high %v865, 0.0
        %v876 = vcombine.high %v872, 0.0
        %v877 = vcombine.low %v781, %v788
        %v879 = vunpack.c.l.s4 1983009808
        %v880 = vunpack.c.0.s8 %v879
        %v881 = vlaneseq
        %v882 = vshrl.u32 %v881, 7
        %v883 = vsub.s32 %v880, %v882
        %v884 = vrot.slane %v877, %v883
        %v885 = vcombine.low %v805, %v806
        %v887 = vunpack.c.l.s4 1983009808
        %v888 = vunpack.c.0.s8 %v887
        %v889 = vlaneseq
        %v890 = vshrl.u32 %v889, 7
        %v891 = vsub.s32 %v888, %v890
        %v892 = vrot.slane %v885, %v891
        %v893 = vcombine.low %v797, %v804
        %v895 = vunpack.c.l.s4 1983009808
        %v896 = vunpack.c.0.s8 %v895
        %v897 = vlaneseq
        %v898 = vshrl.u32 %v897, 7
        %v899 = vsub.s32 %v896, %v898
        %v900 = vrot.slane %v893, %v899
        %v901 = vcombine.low %v807, %v808
        %v903 = vunpack.c.l.s4 1983009808
        %v904 = vunpack.c.0.s8 %v903
        %v905 = vlaneseq
        %v906 = vshrl.u32 %v905, 7
        %v907 = vsub.s32 %v904, %v906
        %v908 = vrot.slane %v901, %v907
        %v909 = vcombine.low %v884, %v892
        %v910 = vcombine.high %v884, %v892
        %v912 = vunpack.c.l.s4 1934713408
        %v913 = vunpack.c.0.s8 %v912
        %v914 = vlaneseq
        %v915 = vshrl.u32 %v914, 7
        %v916 = vsub.s32 %v913, %v915
        %v917 = vrot.slane %v909, %v916
        %v919 = vunpack.c.l.s4 1934713408
        %v920 = vunpack.c.0.s8 %v919
        %v921 = vlaneseq
        %v922 = vshrl.u32 %v921, 7
        %v923 = vsub.s32 %v920, %v922
        %v924 = vrot.slane %v910, %v923
        %v925 = vcombine.low %v900, %v908
        %v926 = vcombine.high %v900, %v908
        %v928 = vunpack.c.l.s4 1934713408
        %v929 = vunpack.c.0.s8 %v928
        %v930 = vlaneseq
        %v931 = vshrl.u32 %v930, 7
        %v932 = vsub.s32 %v929, %v931
        %v933 = vrot.slane %v925, %v932
        %v935 = vunpack.c.l.s4 1934713408
        %v936 = vunpack.c.0.s8 %v935
        %v937 = vlaneseq
        %v938 = vshrl.u32 %v937, 7
        %v939 = vsub.s32 %v936, %v938
        %v940 = vrot.slane %v926, %v939
        %v941 = vcombine.low %v917, %v933
        %v942 = vcombine.high %v917, %v933
        %v943 = vcombine.low %v924, %v940
        %v944 = vcombine.high %v924, %v940
        %v945 = vcombine.low %v849, %v856
        %v947 = vunpack.c.l.s4 1983009808
        %v948 = vunpack.c.0.s8 %v947
        %v949 = vlaneseq
        %v950 = vshrl.u32 %v949, 7
        %v951 = vsub.s32 %v948, %v950
        %v952 = vrot.slane %v945, %v951
        %v953 = vcombine.low %v873, %v874
        %v955 = vunpack.c.l.s4 1983009808
        %v956 = vunpack.c.0.s8 %v955
        %v957 = vlaneseq
        %v958 = vshrl.u32 %v957, 7
        %v959 = vsub.s32 %v956, %v958
        %v960 = vrot.slane %v953, %v959
        %v961 = vcombine.low %v865, %v872
        %v963 = vunpack.c.l.s4 1983009808
        %v964 = vunpack.c.0.s8 %v963
        %v965 = vlaneseq
        %v966 = vshrl.u32 %v965, 7
        %v967 = vsub.s32 %v964, %v966
        %v968 = vrot.slane %v961, %v967
        %v969 = vcombine.low %v875, %v876
        %v971 = vunpack.c.l.s4 1983009808
        %v972 = vunpack.c.0.s8 %v971
        %v973 = vlaneseq
        %v974 = vshrl.u32 %v973, 7
        %v975 = vsub.s32 %v972, %v974
        %v976 = vrot.slane %v969, %v975
        %v977 = vcombine.low %v952, %v960
        %v978 = vcombine.high %v952, %v960
        %v980 = vunpack.c.l.s4 1934713408
        %v981 = vunpack.c.0.s8 %v980
        %v982 = vlaneseq
        %v983 = vshrl.u32 %v982, 7
        %v984 = vsub.s32 %v981, %v983
        %v985 = vrot.slane %v977, %v984
        %v987 = vunpack.c.l.s4 1934713408
        %v988 = vunpack.c.0.s8 %v987
        %v989 = vlaneseq
        %v990 = vshrl.u32 %v989, 7
        %v991 = vsub.s32 %v988, %v990
        %v992 = vrot.slane %v978, %v991
        %v993 = vcombine.low %v968, %v976
        %v994 = vcombine.high %v968, %v976
        %v996 = vunpack.c.l.s4 1934713408
        %v997 = vunpack.c.0.s8 %v996
        %v998 = vlaneseq
        %v999 = vshrl.u32 %v998, 7
        %v1000 = vsub.s32 %v997, %v999
        %v1001 = vrot.slane %v993, %v1000
        %v1003 = vunpack.c.l.s4 1934713408
        %v1004 = vunpack.c.0.s8 %v1003
        %v1005 = vlaneseq
        %v1006 = vshrl.u32 %v1005, 7
        %v1007 = vsub.s32 %v1004, %v1006
        %v1008 = vrot.slane %v994, %v1007
        %v1009 = vcombine.low %v985, %v1001
        %v1010 = vcombine.high %v985, %v1001
        %v1011 = vcombine.low %v992, %v1008
        %v1012 = vcombine.high %v992, %v1008
        %1015 = vrot.lane.b32.xlu0 %v409, 120
        %v1016 = vpop.permute.xlu0 %1015
        %1017 = vrot.lane.b32.xlu0 %v410, 120
        %v1018 = vpop.permute.xlu0 %1017
        %1019 = vrot.lane.b32.xlu0 %v409, 112
        %v1020 = vpop.permute.xlu0 %1019
        %1021 = vrot.lane.b32.xlu0 %v410, 112
        %v1022 = vpop.permute.xlu0 %1021
        %1023 = vrot.lane.b32.xlu0 %v409, 104
        %v1024 = vpop.permute.xlu0 %1023
        %1025 = vrot.lane.b32.xlu0 %v410, 104
        %v1026 = vpop.permute.xlu0 %1025
        %1027 = vrot.lane.b32.xlu0 %v409, 64
        %v1028 = vpop.permute.xlu0 %1027
        %1029 = vrot.lane.b32.xlu0 %v410, 64
        %v1030 = vpop.permute.xlu0 %1029
        %1031 = vrot.lane.b32.xlu0 %v1016, 64
        %v1032 = vpop.permute.xlu0 %1031
        %1033 = vrot.lane.b32.xlu0 %v1018, 64
        %v1034 = vpop.permute.xlu0 %1033
        %1035 = vrot.lane.b32.xlu0 %v1020, 64
        %v1036 = vpop.permute.xlu0 %1035
        %1037 = vrot.lane.b32.xlu0 %v1022, 64
        %v1038 = vpop.permute.xlu0 %1037
        %1039 = vrot.lane.b32.xlu0 %v1024, 64
        %v1040 = vpop.permute.xlu0 %1039
        %1041 = vrot.lane.b32.xlu0 %v1026, 64
        %v1042 = vpop.permute.xlu0 %1041
        %v1051 = vcombine.low %v1028, %v1036
        %v1052 = vcombine.high %v1028, %v1036
        %v1054 = vunpack.c.l.s4 1983009808
        %v1055 = vunpack.c.0.s8 %v1054
        %v1056 = vlaneseq
        %v1057 = vshrl.u32 %v1056, 7
        %v1058 = vsub.s32 %v1055, %v1057
        %v1059 = vrot.slane %v1051, %v1058
        %v1061 = vunpack.c.l.s4 1983009808
        %v1062 = vunpack.c.0.s8 %v1061
        %v1063 = vlaneseq
        %v1064 = vshrl.u32 %v1063, 7
        %v1065 = vsub.s32 %v1062, %v1064
        %v1066 = vrot.slane %v1052, %v1065
        %v1067 = vcombine.low %v1032, %v1040
        %v1068 = vcombine.high %v1032, %v1040
        %v1070 = vunpack.c.l.s4 1983009808
        %v1071 = vunpack.c.0.s8 %v1070
        %v1072 = vlaneseq
        %v1073 = vshrl.u32 %v1072, 7
        %v1074 = vsub.s32 %v1071, %v1073
        %v1075 = vrot.slane %v1067, %v1074
        %v1077 = vunpack.c.l.s4 1983009808
        %v1078 = vunpack.c.0.s8 %v1077
        %v1079 = vlaneseq
        %v1080 = vshrl.u32 %v1079, 7
        %v1081 = vsub.s32 %v1078, %v1080
        %v1082 = vrot.slane %v1068, %v1081
        %v1083 = vcombine.low %v1059, %v1075
        %v1084 = vcombine.high %v1059, %v1075
        %v1086 = vunpack.c.l.s4 1934713408
        %v1087 = vunpack.c.0.s8 %v1086
        %v1088 = vlaneseq
        %v1089 = vshrl.u32 %v1088, 7
        %v1090 = vsub.s32 %v1087, %v1089
        %v1091 = vrot.slane %v1083, %v1090
        %v1093 = vunpack.c.l.s4 1934713408
        %v1094 = vunpack.c.0.s8 %v1093
        %v1095 = vlaneseq
        %v1096 = vshrl.u32 %v1095, 7
        %v1097 = vsub.s32 %v1094, %v1096
        %v1098 = vrot.slane %v1084, %v1097
        %v1099 = vcombine.low %v1066, %v1082
        %v1100 = vcombine.high %v1066, %v1082
        %v1102 = vunpack.c.l.s4 1934713408
        %v1103 = vunpack.c.0.s8 %v1102
        %v1104 = vlaneseq
        %v1105 = vshrl.u32 %v1104, 7
        %v1106 = vsub.s32 %v1103, %v1105
        %v1107 = vrot.slane %v1099, %v1106
        %v1109 = vunpack.c.l.s4 1934713408
        %v1110 = vunpack.c.0.s8 %v1109
        %v1111 = vlaneseq
        %v1112 = vshrl.u32 %v1111, 7
        %v1113 = vsub.s32 %v1110, %v1112
        %v1114 = vrot.slane %v1100, %v1113
        %v1115 = vcombine.high %v1091, 0.0
        %v1116 = vcombine.high %v1098, 0.0
        %v1117 = vcombine.high %v1107, 0.0
        %v1118 = vcombine.high %v1114, 0.0
        %v1119 = vcombine.low %v1030, %v1038
        %v1120 = vcombine.high %v1030, %v1038
        %v1122 = vunpack.c.l.s4 1983009808
        %v1123 = vunpack.c.0.s8 %v1122
        %v1124 = vlaneseq
        %v1125 = vshrl.u32 %v1124, 7
        %v1126 = vsub.s32 %v1123, %v1125
        %v1127 = vrot.slane %v1119, %v1126
        %v1129 = vunpack.c.l.s4 1983009808
        %v1130 = vunpack.c.0.s8 %v1129
        %v1131 = vlaneseq
        %v1132 = vshrl.u32 %v1131, 7
        %v1133 = vsub.s32 %v1130, %v1132
        %v1134 = vrot.slane %v1120, %v1133
        %v1135 = vcombine.low %v1034, %v1042
        %v1136 = vcombine.high %v1034, %v1042
        %v1138 = vunpack.c.l.s4 1983009808
        %v1139 = vunpack.c.0.s8 %v1138
        %v1140 = vlaneseq
        %v1141 = vshrl.u32 %v1140, 7
        %v1142 = vsub.s32 %v1139, %v1141
        %v1143 = vrot.slane %v1135, %v1142
        %v1145 = vunpack.c.l.s4 1983009808
        %v1146 = vunpack.c.0.s8 %v1145
        %v1147 = vlaneseq
        %v1148 = vshrl.u32 %v1147, 7
        %v1149 = vsub.s32 %v1146, %v1148
        %v1150 = vrot.slane %v1136, %v1149
        %v1151 = vcombine.low %v1127, %v1143
        %v1152 = vcombine.high %v1127, %v1143
        %v1154 = vunpack.c.l.s4 1934713408
        %v1155 = vunpack.c.0.s8 %v1154
        %v1156 = vlaneseq
        %v1157 = vshrl.u32 %v1156, 7
        %v1158 = vsub.s32 %v1155, %v1157
        %v1159 = vrot.slane %v1151, %v1158
        %v1161 = vunpack.c.l.s4 1934713408
        %v1162 = vunpack.c.0.s8 %v1161
        %v1163 = vlaneseq
        %v1164 = vshrl.u32 %v1163, 7
        %v1165 = vsub.s32 %v1162, %v1164
        %v1166 = vrot.slane %v1152, %v1165
        %v1167 = vcombine.low %v1134, %v1150
        %v1168 = vcombine.high %v1134, %v1150
        %v1170 = vunpack.c.l.s4 1934713408
        %v1171 = vunpack.c.0.s8 %v1170
        %v1172 = vlaneseq
        %v1173 = vshrl.u32 %v1172, 7
        %v1174 = vsub.s32 %v1171, %v1173
        %v1175 = vrot.slane %v1167, %v1174
        %v1177 = vunpack.c.l.s4 1934713408
        %v1178 = vunpack.c.0.s8 %v1177
        %v1179 = vlaneseq
        %v1180 = vshrl.u32 %v1179, 7
        %v1181 = vsub.s32 %v1178, %v1180
        %v1182 = vrot.slane %v1168, %v1181
        %v1183 = vcombine.high %v1159, 0.0
        %v1184 = vcombine.high %v1166, 0.0
        %v1185 = vcombine.high %v1175, 0.0
        %v1186 = vcombine.high %v1182, 0.0
        %v1187 = vcombine.low %v1091, %v1098
        %v1189 = vunpack.c.l.s4 1983009808
        %v1190 = vunpack.c.0.s8 %v1189
        %v1191 = vlaneseq
        %v1192 = vshrl.u32 %v1191, 7
        %v1193 = vsub.s32 %v1190, %v1192
        %v1194 = vrot.slane %v1187, %v1193
        %v1195 = vcombine.low %v1115, %v1116
        %v1197 = vunpack.c.l.s4 1983009808
        %v1198 = vunpack.c.0.s8 %v1197
        %v1199 = vlaneseq
        %v1200 = vshrl.u32 %v1199, 7
        %v1201 = vsub.s32 %v1198, %v1200
        %v1202 = vrot.slane %v1195, %v1201
        %v1203 = vcombine.low %v1107, %v1114
        %v1205 = vunpack.c.l.s4 1983009808
        %v1206 = vunpack.c.0.s8 %v1205
        %v1207 = vlaneseq
        %v1208 = vshrl.u32 %v1207, 7
        %v1209 = vsub.s32 %v1206, %v1208
        %v1210 = vrot.slane %v1203, %v1209
        %v1211 = vcombine.low %v1117, %v1118
        %v1213 = vunpack.c.l.s4 1983009808
        %v1214 = vunpack.c.0.s8 %v1213
        %v1215 = vlaneseq
        %v1216 = vshrl.u32 %v1215, 7
        %v1217 = vsub.s32 %v1214, %v1216
        %v1218 = vrot.slane %v1211, %v1217
        %v1219 = vcombine.low %v1194, %v1202
        %v1220 = vcombine.high %v1194, %v1202
        %v1222 = vunpack.c.l.s4 1934713408
        %v1223 = vunpack.c.0.s8 %v1222
        %v1224 = vlaneseq
        %v1225 = vshrl.u32 %v1224, 7
        %v1226 = vsub.s32 %v1223, %v1225
        %v1227 = vrot.slane %v1219, %v1226
        %v1229 = vunpack.c.l.s4 1934713408
        %v1230 = vunpack.c.0.s8 %v1229
        %v1231 = vlaneseq
        %v1232 = vshrl.u32 %v1231, 7
        %v1233 = vsub.s32 %v1230, %v1232
        %v1234 = vrot.slane %v1220, %v1233
        %v1235 = vcombine.low %v1210, %v1218
        %v1236 = vcombine.high %v1210, %v1218
        %v1238 = vunpack.c.l.s4 1934713408
        %v1239 = vunpack.c.0.s8 %v1238
        %v1240 = vlaneseq
        %v1241 = vshrl.u32 %v1240, 7
        %v1242 = vsub.s32 %v1239, %v1241
        %v1243 = vrot.slane %v1235, %v1242
        %v1245 = vunpack.c.l.s4 1934713408
        %v1246 = vunpack.c.0.s8 %v1245
        %v1247 = vlaneseq
        %v1248 = vshrl.u32 %v1247, 7
        %v1249 = vsub.s32 %v1246, %v1248
        %v1250 = vrot.slane %v1236, %v1249
        %v1251 = vcombine.low %v1227, %v1243
        %v1252 = vcombine.high %v1227, %v1243
        %v1253 = vcombine.low %v1234, %v1250
        %v1254 = vcombine.high %v1234, %v1250
        %v1255 = vcombine.low %v1159, %v1166
        %v1257 = vunpack.c.l.s4 1983009808
        %v1258 = vunpack.c.0.s8 %v1257
        %v1259 = vlaneseq
        %v1260 = vshrl.u32 %v1259, 7
        %v1261 = vsub.s32 %v1258, %v1260
        %v1262 = vrot.slane %v1255, %v1261
        %v1263 = vcombine.low %v1183, %v1184
        %v1265 = vunpack.c.l.s4 1983009808
        %v1266 = vunpack.c.0.s8 %v1265
        %v1267 = vlaneseq
        %v1268 = vshrl.u32 %v1267, 7
        %v1269 = vsub.s32 %v1266, %v1268
        %v1270 = vrot.slane %v1263, %v1269
        %v1271 = vcombine.low %v1175, %v1182
        %v1273 = vunpack.c.l.s4 1983009808
        %v1274 = vunpack.c.0.s8 %v1273
        %v1275 = vlaneseq
        %v1276 = vshrl.u32 %v1275, 7
        %v1277 = vsub.s32 %v1274, %v1276
        %v1278 = vrot.slane %v1271, %v1277
        %v1279 = vcombine.low %v1185, %v1186
        %v1281 = vunpack.c.l.s4 1983009808
        %v1282 = vunpack.c.0.s8 %v1281
        %v1283 = vlaneseq
        %v1284 = vshrl.u32 %v1283, 7
        %v1285 = vsub.s32 %v1282, %v1284
        %v1286 = vrot.slane %v1279, %v1285
        %v1287 = vcombine.low %v1262, %v1270
        %v1288 = vcombine.high %v1262, %v1270
        %v1290 = vunpack.c.l.s4 1934713408
        %v1291 = vunpack.c.0.s8 %v1290
        %v1292 = vlaneseq
        %v1293 = vshrl.u32 %v1292, 7
        %v1294 = vsub.s32 %v1291, %v1293
        %v1295 = vrot.slane %v1287, %v1294
        %v1297 = vunpack.c.l.s4 1934713408
        %v1298 = vunpack.c.0.s8 %v1297
        %v1299 = vlaneseq
        %v1300 = vshrl.u32 %v1299, 7
        %v1301 = vsub.s32 %v1298, %v1300
        %v1302 = vrot.slane %v1288, %v1301
        %v1303 = vcombine.low %v1278, %v1286
        %v1304 = vcombine.high %v1278, %v1286
        %v1306 = vunpack.c.l.s4 1934713408
        %v1307 = vunpack.c.0.s8 %v1306
        %v1308 = vlaneseq
        %v1309 = vshrl.u32 %v1308, 7
        %v1310 = vsub.s32 %v1307, %v1309
        %v1311 = vrot.slane %v1303, %v1310
        %v1313 = vunpack.c.l.s4 1934713408
        %v1314 = vunpack.c.0.s8 %v1313
        %v1315 = vlaneseq
        %v1316 = vshrl.u32 %v1315, 7
        %v1317 = vsub.s32 %v1314, %v1316
        %v1318 = vrot.slane %v1304, %v1317
        %v1319 = vcombine.low %v1295, %v1311
        %v1320 = vcombine.high %v1295, %v1311
        %v1321 = vcombine.low %v1302, %v1318
        %v1322 = vcombine.high %v1302, %v1318
        %vm1323 = vcmask 64512
        %v1325 = vsel %vm1323, %v631, 0
        %v1328 = vsel %vm1323, %v941, 0
        %1330 = vmatprep.subr.mxu0 0.0
        %1331 = vmatpush1.xpose.msra.mxu0 %v1328
        %1332 = vmatprep.subr.mxu0 0.0
        %1333 = vmatpush1.xpose.msra.mxu0 0.0
        %1334 = vmatprep.subr.mxu0 0.0
        %1335 = vmatpush1.xpose.msra.mxu0 0.0
        %1336 = vmatprep.subr.mxu0 0.0
        %1337 = vmatpush1.xpose.msra.mxu0 0.0
        %1338 = vmatprep.subr.mxu0 0.0
        %1339 = vmatpush1.xpose.msra.mxu0 0.0
        %1340 = vmatprep.subr.mxu0 0.0
        %1341 = vmatpush1.xpose.msra.mxu0 0.0
        %1342 = vmatprep.subr.mxu0 0.0
        %1343 = vmatpush1.xpose.msra.mxu0 0.0
        %1344 = vmatprep.subr.mxu0 0.0
        %1345 = vmatpush1.xpose.msra.mxu0 0.0
        %1346 = vmatprep.subr.mxu0 0.0
        %1347 = vmatpush1.xpose.msra.mxu0 0.0
        %1348 = vmatprep.subr.mxu0 0.0
        %1349 = vmatpush1.xpose.msra.mxu0 0.0
        %1350 = vmatprep.subr.mxu0 0.0
        %1351 = vmatpush1.xpose.msra.mxu0 0.0
        %1352 = vmatprep.subr.mxu0 0.0
        %1353 = vmatpush1.xpose.msra.mxu0 0.0
        %1354 = vmatprep.subr.mxu0 0.0
        %1355 = vmatpush1.xpose.msra.mxu0 0.0
        %1356 = vmatprep.subr.mxu0 0.0
        %1357 = vmatpush1.xpose.msra.mxu0 0.0
        %1358 = vmatprep.subr.mxu0 0.0
        %1359 = vmatpush1.xpose.msra.mxu0 0.0
        %1360 = vmatprep.subr.mxu0 0.0
        %1361 = vmatpush1.xpose.msra.mxu0 0.0
        %1362 = vmatprep.subr.mxu0 0.0
        %1363 = vmatpush1.xpose.msra.mxu0 0.0
        %1364 = vmatprep.subr.mxu0 0.0
        %1365 = vmatpush1.xpose.msra.mxu0 0.0
        %1366 = vmatprep.subr.mxu0 0.0
        %1367 = vmatpush1.xpose.msra.mxu0 0.0
        %1368 = vmatprep.subr.mxu0 0.0
        %1369 = vmatpush1.xpose.msra.mxu0 0.0
        %1370 = vmatprep.subr.mxu0 0.0
        %1371 = vmatpush1.xpose.msra.mxu0 0.0
        %1372 = vmatprep.subr.mxu0 0.0
        %1373 = vmatpush1.xpose.msra.mxu0 0.0
        %1374 = vmatprep.subr.mxu0 0.0
        %1375 = vmatpush1.xpose.msra.mxu0 0.0
        %1376 = vmatprep.subr.mxu0 0.0
        %1377 = vmatpush1.xpose.msra.mxu0 0.0
        %1378 = vmatprep.subr.mxu0 0.0
        %1379 = vmatpush1.xpose.msra.mxu0 0.0
        %1380 = vmatprep.subr.mxu0 0.0
        %1381 = vmatpush1.xpose.msra.mxu0 0.0
        %1382 = vmatprep.subr.mxu0 0.0
        %1383 = vmatpush1.xpose.msra.mxu0 0.0
        %1384 = vmatprep.subr.mxu0 0.0
        %1385 = vmatpush1.xpose.msra.mxu0 0.0
        %1386 = vmatprep.subr.mxu0 0.0
        %1387 = vmatpush1.xpose.msra.mxu0 0.0
        %1388 = vmatprep.subr.mxu0 0.0
        %1389 = vmatpush1.xpose.msra.mxu0 0.0
        %1390 = vmatprep.subr.mxu0 0.0
        %1391 = vmatpush1.xpose.msra.mxu0 0.0
        %1392 = vmatprep.subr.mxu0 0.0
        %1393 = vmatpush1.xpose.msra.mxu0 0.0
        %1394 = vmatprep.mubr.f32.mxu0 0.0
        %1395 = vmatmul.mubr.f32.gmra.mrb[0].mxu0 %v1325
        %v1396 = vpop.f32.mrb[0].mxu0
        %v1397 = vadd.f32 0.0, %v1396
        %v1398 = vpop.f32.mrb[0].mxu0
        %1399 = vdwg.mxu0
        %v1401 = vsel %vm1323, %v632, 0
        %v1404 = vsel %vm1323, %v942, 0
        %1406 = vmatprep.subr.mxu0 0.0
        %1407 = vmatpush1.xpose.msra.mxu0 %v1404
        %1408 = vmatprep.subr.mxu0 0.0
        %1409 = vmatpush1.xpose.msra.mxu0 0.0
        %1410 = vmatprep.subr.mxu0 0.0
        %1411 = vmatpush1.xpose.msra.mxu0 0.0
        %1412 = vmatprep.subr.mxu0 0.0
        %1413 = vmatpush1.xpose.msra.mxu0 0.0
        %1414 = vmatprep.subr.mxu0 0.0
        %1415 = vmatpush1.xpose.msra.mxu0 0.0
        %1416 = vmatprep.subr.mxu0 0.0
        %1417 = vmatpush1.xpose.msra.mxu0 0.0
        %1418 = vmatprep.subr.mxu0 0.0
        %1419 = vmatpush1.xpose.msra.mxu0 0.0
        %1420 = vmatprep.subr.mxu0 0.0
        %1421 = vmatpush1.xpose.msra.mxu0 0.0
        %1422 = vmatprep.subr.mxu0 0.0
        %1423 = vmatpush1.xpose.msra.mxu0 0.0
        %1424 = vmatprep.subr.mxu0 0.0
        %1425 = vmatpush1.xpose.msra.mxu0 0.0
        %1426 = vmatprep.subr.mxu0 0.0
        %1427 = vmatpush1.xpose.msra.mxu0 0.0
        %1428 = vmatprep.subr.mxu0 0.0
        %1429 = vmatpush1.xpose.msra.mxu0 0.0
        %1430 = vmatprep.subr.mxu0 0.0
        %1431 = vmatpush1.xpose.msra.mxu0 0.0
        %1432 = vmatprep.subr.mxu0 0.0
        %1433 = vmatpush1.xpose.msra.mxu0 0.0
        %1434 = vmatprep.subr.mxu0 0.0
        %1435 = vmatpush1.xpose.msra.mxu0 0.0
        %1436 = vmatprep.subr.mxu0 0.0
        %1437 = vmatpush1.xpose.msra.mxu0 0.0
        %1438 = vmatprep.subr.mxu0 0.0
        %1439 = vmatpush1.xpose.msra.mxu0 0.0
        %1440 = vmatprep.subr.mxu0 0.0
        %1441 = vmatpush1.xpose.msra.mxu0 0.0
        %1442 = vmatprep.subr.mxu0 0.0
        %1443 = vmatpush1.xpose.msra.mxu0 0.0
        %1444 = vmatprep.subr.mxu0 0.0
        %1445 = vmatpush1.xpose.msra.mxu0 0.0
        %1446 = vmatprep.subr.mxu0 0.0
        %1447 = vmatpush1.xpose.msra.mxu0 0.0
        %1448 = vmatprep.subr.mxu0 0.0
        %1449 = vmatpush1.xpose.msra.mxu0 0.0
        %1450 = vmatprep.subr.mxu0 0.0
        %1451 = vmatpush1.xpose.msra.mxu0 0.0
        %1452 = vmatprep.subr.mxu0 0.0
        %1453 = vmatpush1.xpose.msra.mxu0 0.0
        %1454 = vmatprep.subr.mxu0 0.0
        %1455 = vmatpush1.xpose.msra.mxu0 0.0
        %1456 = vmatprep.subr.mxu0 0.0
        %1457 = vmatpush1.xpose.msra.mxu0 0.0
        %1458 = vmatprep.subr.mxu0 0.0
        %1459 = vmatpush1.xpose.msra.mxu0 0.0
        %1460 = vmatprep.subr.mxu0 0.0
        %1461 = vmatpush1.xpose.msra.mxu0 0.0
        %1462 = vmatprep.subr.mxu0 0.0
        %1463 = vmatpush1.xpose.msra.mxu0 0.0
        %1464 = vmatprep.subr.mxu0 0.0
        %1465 = vmatpush1.xpose.msra.mxu0 0.0
        %1466 = vmatprep.subr.mxu0 0.0
        %1467 = vmatpush1.xpose.msra.mxu0 0.0
        %1468 = vmatprep.subr.mxu0 0.0
        %1469 = vmatpush1.xpose.msra.mxu0 0.0
        %1470 = vmatprep.mubr.f32.mxu0 0.0
        %1471 = vmatmul.mubr.f32.gmra.mrb[0].mxu0 %v1401
        %v1472 = vpop.f32.mrb[0].mxu0
        %v1473 = vadd.f32 0.0, %v1472
        %v1474 = vpop.f32.mrb[0].mxu0
        %1475 = vdwg.mxu0
        %v1477 = vsel %vm1323, %v633, 0
        %v1480 = vsel %vm1323, %v943, 0
        %1482 = vmatprep.subr.mxu0 0.0
        %1483 = vmatpush1.xpose.msra.mxu0 %v1480
        %1484 = vmatprep.subr.mxu0 0.0
        %1485 = vmatpush1.xpose.msra.mxu0 0.0
        %1486 = vmatprep.subr.mxu0 0.0
        %1487 = vmatpush1.xpose.msra.mxu0 0.0
        %1488 = vmatprep.subr.mxu0 0.0
        %1489 = vmatpush1.xpose.msra.mxu0 0.0
        %1490 = vmatprep.subr.mxu0 0.0
        %1491 = vmatpush1.xpose.msra.mxu0 0.0
        %1492 = vmatprep.subr.mxu0 0.0
        %1493 = vmatpush1.xpose.msra.mxu0 0.0
        %1494 = vmatprep.subr.mxu0 0.0
        %1495 = vmatpush1.xpose.msra.mxu0 0.0
        %1496 = vmatprep.subr.mxu0 0.0
        %1497 = vmatpush1.xpose.msra.mxu0 0.0
        %1498 = vmatprep.subr.mxu0 0.0
        %1499 = vmatpush1.xpose.msra.mxu0 0.0
        %1500 = vmatprep.subr.mxu0 0.0
        %1501 = vmatpush1.xpose.msra.mxu0 0.0
        %1502 = vmatprep.subr.mxu0 0.0
        %1503 = vmatpush1.xpose.msra.mxu0 0.0
        %1504 = vmatprep.subr.mxu0 0.0
        %1505 = vmatpush1.xpose.msra.mxu0 0.0
        %1506 = vmatprep.subr.mxu0 0.0
        %1507 = vmatpush1.xpose.msra.mxu0 0.0
        %1508 = vmatprep.subr.mxu0 0.0
        %1509 = vmatpush1.xpose.msra.mxu0 0.0
        %1510 = vmatprep.subr.mxu0 0.0
        %1511 = vmatpush1.xpose.msra.mxu0 0.0
        %1512 = vmatprep.subr.mxu0 0.0
        %1513 = vmatpush1.xpose.msra.mxu0 0.0
        %1514 = vmatprep.subr.mxu0 0.0
        %1515 = vmatpush1.xpose.msra.mxu0 0.0
        %1516 = vmatprep.subr.mxu0 0.0
        %1517 = vmatpush1.xpose.msra.mxu0 0.0
        %1518 = vmatprep.subr.mxu0 0.0
        %1519 = vmatpush1.xpose.msra.mxu0 0.0
        %1520 = vmatprep.subr.mxu0 0.0
        %1521 = vmatpush1.xpose.msra.mxu0 0.0
        %1522 = vmatprep.subr.mxu0 0.0
        %1523 = vmatpush1.xpose.msra.mxu0 0.0
        %1524 = vmatprep.subr.mxu0 0.0
        %1525 = vmatpush1.xpose.msra.mxu0 0.0
        %1526 = vmatprep.subr.mxu0 0.0
        %1527 = vmatpush1.xpose.msra.mxu0 0.0
        %1528 = vmatprep.subr.mxu0 0.0
        %1529 = vmatpush1.xpose.msra.mxu0 0.0
        %1530 = vmatprep.subr.mxu0 0.0
        %1531 = vmatpush1.xpose.msra.mxu0 0.0
        %1532 = vmatprep.subr.mxu0 0.0
        %1533 = vmatpush1.xpose.msra.mxu0 0.0
        %1534 = vmatprep.subr.mxu0 0.0
        %1535 = vmatpush1.xpose.msra.mxu0 0.0
        %1536 = vmatprep.subr.mxu0 0.0
        %1537 = vmatpush1.xpose.msra.mxu0 0.0
        %1538 = vmatprep.subr.mxu0 0.0
        %1539 = vmatpush1.xpose.msra.mxu0 0.0
        %1540 = vmatprep.subr.mxu0 0.0
        %1541 = vmatpush1.xpose.msra.mxu0 0.0
        %1542 = vmatprep.subr.mxu0 0.0
        %1543 = vmatpush1.xpose.msra.mxu0 0.0
        %1544 = vmatprep.subr.mxu0 0.0
        %1545 = vmatpush1.xpose.msra.mxu0 0.0
        %1546 = vmatprep.mubr.f32.mxu0 0.0
        %1547 = vmatmul.mubr.f32.gmra.mrb[0].mxu0 %v1477
        %v1548 = vpop.f32.mrb[0].mxu0
        %v1549 = vadd.f32 0.0, %v1548
        %v1550 = vpop.f32.mrb[0].mxu0
        %1551 = vdwg.mxu0
        %v1553 = vsel %vm1323, %v634, 0
        %v1556 = vsel %vm1323, %v944, 0
        %1558 = vmatprep.subr.mxu0 0.0
        %1559 = vmatpush1.xpose.msra.mxu0 %v1556
        %1560 = vmatprep.subr.mxu0 0.0
        %1561 = vmatpush1.xpose.msra.mxu0 0.0
        %1562 = vmatprep.subr.mxu0 0.0
        %1563 = vmatpush1.xpose.msra.mxu0 0.0
        %1564 = vmatprep.subr.mxu0 0.0
        %1565 = vmatpush1.xpose.msra.mxu0 0.0
        %1566 = vmatprep.subr.mxu0 0.0
        %1567 = vmatpush1.xpose.msra.mxu0 0.0
        %1568 = vmatprep.subr.mxu0 0.0
        %1569 = vmatpush1.xpose.msra.mxu0 0.0
        %1570 = vmatprep.subr.mxu0 0.0
        %1571 = vmatpush1.xpose.msra.mxu0 0.0
        %1572 = vmatprep.subr.mxu0 0.0
        %1573 = vmatpush1.xpose.msra.mxu0 0.0
        %1574 = vmatprep.subr.mxu0 0.0
        %1575 = vmatpush1.xpose.msra.mxu0 0.0
        %1576 = vmatprep.subr.mxu0 0.0
        %1577 = vmatpush1.xpose.msra.mxu0 0.0
        %1578 = vmatprep.subr.mxu0 0.0
        %1579 = vmatpush1.xpose.msra.mxu0 0.0
        %1580 = vmatprep.subr.mxu0 0.0
        %1581 = vmatpush1.xpose.msra.mxu0 0.0
        %1582 = vmatprep.subr.mxu0 0.0
        %1583 = vmatpush1.xpose.msra.mxu0 0.0
        %1584 = vmatprep.subr.mxu0 0.0
        %1585 = vmatpush1.xpose.msra.mxu0 0.0
        %1586 = vmatprep.subr.mxu0 0.0
        %1587 = vmatpush1.xpose.msra.mxu0 0.0
        %1588 = vmatprep.subr.mxu0 0.0
        %1589 = vmatpush1.xpose.msra.mxu0 0.0
        %1590 = vmatprep.subr.mxu0 0.0
        %1591 = vmatpush1.xpose.msra.mxu0 0.0
        %1592 = vmatprep.subr.mxu0 0.0
        %1593 = vmatpush1.xpose.msra.mxu0 0.0
        %1594 = vmatprep.subr.mxu0 0.0
        %1595 = vmatpush1.xpose.msra.mxu0 0.0
        %1596 = vmatprep.subr.mxu0 0.0
        %1597 = vmatpush1.xpose.msra.mxu0 0.0
        %1598 = vmatprep.subr.mxu0 0.0
        %1599 = vmatpush1.xpose.msra.mxu0 0.0
        %1600 = vmatprep.subr.mxu0 0.0
        %1601 = vmatpush1.xpose.msra.mxu0 0.0
        %1602 = vmatprep.subr.mxu0 0.0
        %1603 = vmatpush1.xpose.msra.mxu0 0.0
        %1604 = vmatprep.subr.mxu0 0.0
        %1605 = vmatpush1.xpose.msra.mxu0 0.0
        %1606 = vmatprep.subr.mxu0 0.0
        %1607 = vmatpush1.xpose.msra.mxu0 0.0
        %1608 = vmatprep.subr.mxu0 0.0
        %1609 = vmatpush1.xpose.msra.mxu0 0.0
        %1610 = vmatprep.subr.mxu0 0.0
        %1611 = vmatpush1.xpose.msra.mxu0 0.0
        %1612 = vmatprep.subr.mxu0 0.0
        %1613 = vmatpush1.xpose.msra.mxu0 0.0
        %1614 = vmatprep.subr.mxu0 0.0
        %1615 = vmatpush1.xpose.msra.mxu0 0.0
        %1616 = vmatprep.subr.mxu0 0.0
        %1617 = vmatpush1.xpose.msra.mxu0 0.0
        %1618 = vmatprep.subr.mxu0 0.0
        %1619 = vmatpush1.xpose.msra.mxu0 0.0
        %1620 = vmatprep.subr.mxu0 0.0
        %1621 = vmatpush1.xpose.msra.mxu0 0.0
        %1622 = vmatprep.mubr.f32.mxu0 0.0
        %1623 = vmatmul.mubr.f32.gmra.mrb[0].mxu0 %v1553
        %v1624 = vpop.f32.mrb[0].mxu0
        %v1625 = vadd.f32 0.0, %v1624
        %v1626 = vpop.f32.mrb[0].mxu0
        %1627 = vdwg.mxu0
        %v1629 = vsel %vm1323, %v699, 0
        %v1632 = vsel %vm1323, %v1009, 0
        %1634 = vmatprep.subr.mxu0 0.0
        %1635 = vmatpush1.xpose.msra.mxu0 %v1632
        %1636 = vmatprep.subr.mxu0 0.0
        %1637 = vmatpush1.xpose.msra.mxu0 0.0
        %1638 = vmatprep.subr.mxu0 0.0
        %1639 = vmatpush1.xpose.msra.mxu0 0.0
        %1640 = vmatprep.subr.mxu0 0.0
        %1641 = vmatpush1.xpose.msra.mxu0 0.0
        %1642 = vmatprep.subr.mxu0 0.0
        %1643 = vmatpush1.xpose.msra.mxu0 0.0
        %1644 = vmatprep.subr.mxu0 0.0
        %1645 = vmatpush1.xpose.msra.mxu0 0.0
        %1646 = vmatprep.subr.mxu0 0.0
        %1647 = vmatpush1.xpose.msra.mxu0 0.0
        %1648 = vmatprep.subr.mxu0 0.0
        %1649 = vmatpush1.xpose.msra.mxu0 0.0
        %1650 = vmatprep.subr.mxu0 0.0
        %1651 = vmatpush1.xpose.msra.mxu0 0.0
        %1652 = vmatprep.subr.mxu0 0.0
        %1653 = vmatpush1.xpose.msra.mxu0 0.0
        %1654 = vmatprep.subr.mxu0 0.0
        %1655 = vmatpush1.xpose.msra.mxu0 0.0
        %1656 = vmatprep.subr.mxu0 0.0
        %1657 = vmatpush1.xpose.msra.mxu0 0.0
        %1658 = vmatprep.subr.mxu0 0.0
        %1659 = vmatpush1.xpose.msra.mxu0 0.0
        %1660 = vmatprep.subr.mxu0 0.0
        %1661 = vmatpush1.xpose.msra.mxu0 0.0
        %1662 = vmatprep.subr.mxu0 0.0
        %1663 = vmatpush1.xpose.msra.mxu0 0.0
        %1664 = vmatprep.subr.mxu0 0.0
        %1665 = vmatpush1.xpose.msra.mxu0 0.0
        %1666 = vmatprep.subr.mxu0 0.0
        %1667 = vmatpush1.xpose.msra.mxu0 0.0
        %1668 = vmatprep.subr.mxu0 0.0
        %1669 = vmatpush1.xpose.msra.mxu0 0.0
        %1670 = vmatprep.subr.mxu0 0.0
        %1671 = vmatpush1.xpose.msra.mxu0 0.0
        %1672 = vmatprep.subr.mxu0 0.0
        %1673 = vmatpush1.xpose.msra.mxu0 0.0
        %1674 = vmatprep.subr.mxu0 0.0
        %1675 = vmatpush1.xpose.msra.mxu0 0.0
        %1676 = vmatprep.subr.mxu0 0.0
        %1677 = vmatpush1.xpose.msra.mxu0 0.0
        %1678 = vmatprep.subr.mxu0 0.0
        %1679 = vmatpush1.xpose.msra.mxu0 0.0
        %1680 = vmatprep.subr.mxu0 0.0
        %1681 = vmatpush1.xpose.msra.mxu0 0.0
        %1682 = vmatprep.subr.mxu0 0.0
        %1683 = vmatpush1.xpose.msra.mxu0 0.0
        %1684 = vmatprep.subr.mxu0 0.0
        %1685 = vmatpush1.xpose.msra.mxu0 0.0
        %1686 = vmatprep.subr.mxu0 0.0
        %1687 = vmatpush1.xpose.msra.mxu0 0.0
        %1688 = vmatprep.subr.mxu0 0.0
        %1689 = vmatpush1.xpose.msra.mxu0 0.0
        %1690 = vmatprep.subr.mxu0 0.0
        %1691 = vmatpush1.xpose.msra.mxu0 0.0
        %1692 = vmatprep.subr.mxu0 0.0
        %1693 = vmatpush1.xpose.msra.mxu0 0.0
        %1694 = vmatprep.subr.mxu0 0.0
        %1695 = vmatpush1.xpose.msra.mxu0 0.0
        %1696 = vmatprep.subr.mxu0 0.0
        %1697 = vmatpush1.xpose.msra.mxu0 0.0
        %1698 = vmatprep.mubr.f32.mxu0 0.0
        %1699 = vmatmul.mubr.f32.gmra.mrb[0].mxu0 %v1629
        %v1700 = vpop.f32.mrb[0].mxu0
        %v1701 = vadd.f32 0.0, %v1700
        %v1702 = vpop.f32.mrb[0].mxu0
        %1703 = vdwg.mxu0
        %v1705 = vsel %vm1323, %v700, 0
        %v1708 = vsel %vm1323, %v1010, 0
        %1710 = vmatprep.subr.mxu0 0.0
        %1711 = vmatpush1.xpose.msra.mxu0 %v1708
        %1712 = vmatprep.subr.mxu0 0.0
        %1713 = vmatpush1.xpose.msra.mxu0 0.0
        %1714 = vmatprep.subr.mxu0 0.0
        %1715 = vmatpush1.xpose.msra.mxu0 0.0
        %1716 = vmatprep.subr.mxu0 0.0
        %1717 = vmatpush1.xpose.msra.mxu0 0.0
        %1718 = vmatprep.subr.mxu0 0.0
        %1719 = vmatpush1.xpose.msra.mxu0 0.0
        %1720 = vmatprep.subr.mxu0 0.0
        %1721 = vmatpush1.xpose.msra.mxu0 0.0
        %1722 = vmatprep.subr.mxu0 0.0
        %1723 = vmatpush1.xpose.msra.mxu0 0.0
        %1724 = vmatprep.subr.mxu0 0.0
        %1725 = vmatpush1.xpose.msra.mxu0 0.0
        %1726 = vmatprep.subr.mxu0 0.0
        %1727 = vmatpush1.xpose.msra.mxu0 0.0
        %1728 = vmatprep.subr.mxu0 0.0
        %1729 = vmatpush1.xpose.msra.mxu0 0.0
        %1730 = vmatprep.subr.mxu0 0.0
        %1731 = vmatpush1.xpose.msra.mxu0 0.0
        %1732 = vmatprep.subr.mxu0 0.0
        %1733 = vmatpush1.xpose.msra.mxu0 0.0
        %1734 = vmatprep.subr.mxu0 0.0
        %1735 = vmatpush1.xpose.msra.mxu0 0.0
        %1736 = vmatprep.subr.mxu0 0.0
        %1737 = vmatpush1.xpose.msra.mxu0 0.0
        %1738 = vmatprep.subr.mxu0 0.0
        %1739 = vmatpush1.xpose.msra.mxu0 0.0
        %1740 = vmatprep.subr.mxu0 0.0
        %1741 = vmatpush1.xpose.msra.mxu0 0.0
        %1742 = vmatprep.subr.mxu0 0.0
        %1743 = vmatpush1.xpose.msra.mxu0 0.0
        %1744 = vmatprep.subr.mxu0 0.0
        %1745 = vmatpush1.xpose.msra.mxu0 0.0
        %1746 = vmatprep.subr.mxu0 0.0
        %1747 = vmatpush1.xpose.msra.mxu0 0.0
        %1748 = vmatprep.subr.mxu0 0.0
        %1749 = vmatpush1.xpose.msra.mxu0 0.0
        %1750 = vmatprep.subr.mxu0 0.0
        %1751 = vmatpush1.xpose.msra.mxu0 0.0
        %1752 = vmatprep.subr.mxu0 0.0
        %1753 = vmatpush1.xpose.msra.mxu0 0.0
        %1754 = vmatprep.subr.mxu0 0.0
        %1755 = vmatpush1.xpose.msra.mxu0 0.0
        %1756 = vmatprep.subr.mxu0 0.0
        %1757 = vmatpush1.xpose.msra.mxu0 0.0
        %1758 = vmatprep.subr.mxu0 0.0
        %1759 = vmatpush1.xpose.msra.mxu0 0.0
        %1760 = vmatprep.subr.mxu0 0.0
        %1761 = vmatpush1.xpose.msra.mxu0 0.0
        %1762 = vmatprep.subr.mxu0 0.0
        %1763 = vmatpush1.xpose.msra.mxu0 0.0
        %1764 = vmatprep.subr.mxu0 0.0
        %1765 = vmatpush1.xpose.msra.mxu0 0.0
        %1766 = vmatprep.subr.mxu0 0.0
        %1767 = vmatpush1.xpose.msra.mxu0 0.0
        %1768 = vmatprep.subr.mxu0 0.0
        %1769 = vmatpush1.xpose.msra.mxu0 0.0
        %1770 = vmatprep.subr.mxu0 0.0
        %1771 = vmatpush1.xpose.msra.mxu0 0.0
        %1772 = vmatprep.subr.mxu0 0.0
        %1773 = vmatpush1.xpose.msra.mxu0 0.0
        %1774 = vmatprep.mubr.f32.mxu0 0.0
        %1775 = vmatmul.mubr.f32.gmra.mrb[0].mxu0 %v1705
        %v1776 = vpop.f32.mrb[0].mxu0
        %v1777 = vadd.f32 0.0, %v1776
        %v1778 = vpop.f32.mrb[0].mxu0
        %1779 = vdwg.mxu0
        %v1781 = vsel %vm1323, %v701, 0
        %v1784 = vsel %vm1323, %v1011, 0
        %1786 = vmatprep.subr.mxu0 0.0
        %1787 = vmatpush1.xpose.msra.mxu0 %v1784
        %1788 = vmatprep.subr.mxu0 0.0
        %1789 = vmatpush1.xpose.msra.mxu0 0.0
        %1790 = vmatprep.subr.mxu0 0.0
        %1791 = vmatpush1.xpose.msra.mxu0 0.0
        %1792 = vmatprep.subr.mxu0 0.0
        %1793 = vmatpush1.xpose.msra.mxu0 0.0
        %1794 = vmatprep.subr.mxu0 0.0
        %1795 = vmatpush1.xpose.msra.mxu0 0.0
        %1796 = vmatprep.subr.mxu0 0.0
        %1797 = vmatpush1.xpose.msra.mxu0 0.0
        %1798 = vmatprep.subr.mxu0 0.0
        %1799 = vmatpush1.xpose.msra.mxu0 0.0
        %1800 = vmatprep.subr.mxu0 0.0
        %1801 = vmatpush1.xpose.msra.mxu0 0.0
        %1802 = vmatprep.subr.mxu0 0.0
        %1803 = vmatpush1.xpose.msra.mxu0 0.0
        %1804 = vmatprep.subr.mxu0 0.0
        %1805 = vmatpush1.xpose.msra.mxu0 0.0
        %1806 = vmatprep.subr.mxu0 0.0
        %1807 = vmatpush1.xpose.msra.mxu0 0.0
        %1808 = vmatprep.subr.mxu0 0.0
        %1809 = vmatpush1.xpose.msra.mxu0 0.0
        %1810 = vmatprep.subr.mxu0 0.0
        %1811 = vmatpush1.xpose.msra.mxu0 0.0
        %1812 = vmatprep.subr.mxu0 0.0
        %1813 = vmatpush1.xpose.msra.mxu0 0.0
        %1814 = vmatprep.subr.mxu0 0.0
        %1815 = vmatpush1.xpose.msra.mxu0 0.0
        %1816 = vmatprep.subr.mxu0 0.0
        %1817 = vmatpush1.xpose.msra.mxu0 0.0
        %1818 = vmatprep.subr.mxu0 0.0
        %1819 = vmatpush1.xpose.msra.mxu0 0.0
        %1820 = vmatprep.subr.mxu0 0.0
        %1821 = vmatpush1.xpose.msra.mxu0 0.0
        %1822 = vmatprep.subr.mxu0 0.0
        %1823 = vmatpush1.xpose.msra.mxu0 0.0
        %1824 = vmatprep.subr.mxu0 0.0
        %1825 = vmatpush1.xpose.msra.mxu0 0.0
        %1826 = vmatprep.subr.mxu0 0.0
        %1827 = vmatpush1.xpose.msra.mxu0 0.0
        %1828 = vmatprep.subr.mxu0 0.0
        %1829 = vmatpush1.xpose.msra.mxu0 0.0
        %1830 = vmatprep.subr.mxu0 0.0
        %1831 = vmatpush1.xpose.msra.mxu0 0.0
        %1832 = vmatprep.subr.mxu0 0.0
        %1833 = vmatpush1.xpose.msra.mxu0 0.0
        %1834 = vmatprep.subr.mxu0 0.0
        %1835 = vmatpush1.xpose.msra.mxu0 0.0
        %1836 = vmatprep.subr.mxu0 0.0
        %1837 = vmatpush1.xpose.msra.mxu0 0.0
        %1838 = vmatprep.subr.mxu0 0.0
        %1839 = vmatpush1.xpose.msra.mxu0 0.0
        %1840 = vmatprep.subr.mxu0 0.0
        %1841 = vmatpush1.xpose.msra.mxu0 0.0
        %1842 = vmatprep.subr.mxu0 0.0
        %1843 = vmatpush1.xpose.msra.mxu0 0.0
        %1844 = vmatprep.subr.mxu0 0.0
        %1845 = vmatpush1.xpose.msra.mxu0 0.0
        %1846 = vmatprep.subr.mxu0 0.0
        %1847 = vmatpush1.xpose.msra.mxu0 0.0
        %1848 = vmatprep.subr.mxu0 0.0
        %1849 = vmatpush1.xpose.msra.mxu0 0.0
        %1850 = vmatprep.mubr.f32.mxu0 0.0
        %1851 = vmatmul.mubr.f32.gmra.mrb[0].mxu0 %v1781
        %v1852 = vpop.f32.mrb[0].mxu0
        %v1853 = vadd.f32 0.0, %v1852
        %v1854 = vpop.f32.mrb[0].mxu0
        %1855 = vdwg.mxu0
        %v1857 = vsel %vm1323, %v702, 0
        %v1860 = vsel %vm1323, %v1012, 0
        %1862 = vmatprep.subr.mxu0 0.0
        %1863 = vmatpush1.xpose.msra.mxu0 %v1860
        %1864 = vmatprep.subr.mxu0 0.0
        %1865 = vmatpush1.xpose.msra.mxu0 0.0
        %1866 = vmatprep.subr.mxu0 0.0
        %1867 = vmatpush1.xpose.msra.mxu0 0.0
        %1868 = vmatprep.subr.mxu0 0.0
        %1869 = vmatpush1.xpose.msra.mxu0 0.0
        %1870 = vmatprep.subr.mxu0 0.0
        %1871 = vmatpush1.xpose.msra.mxu0 0.0
        %1872 = vmatprep.subr.mxu0 0.0
        %1873 = vmatpush1.xpose.msra.mxu0 0.0
        %1874 = vmatprep.subr.mxu0 0.0
        %1875 = vmatpush1.xpose.msra.mxu0 0.0
        %1876 = vmatprep.subr.mxu0 0.0
        %1877 = vmatpush1.xpose.msra.mxu0 0.0
        %1878 = vmatprep.subr.mxu0 0.0
        %1879 = vmatpush1.xpose.msra.mxu0 0.0
        %1880 = vmatprep.subr.mxu0 0.0
        %1881 = vmatpush1.xpose.msra.mxu0 0.0
        %1882 = vmatprep.subr.mxu0 0.0
        %1883 = vmatpush1.xpose.msra.mxu0 0.0
        %1884 = vmatprep.subr.mxu0 0.0
        %1885 = vmatpush1.xpose.msra.mxu0 0.0
        %1886 = vmatprep.subr.mxu0 0.0
        %1887 = vmatpush1.xpose.msra.mxu0 0.0
        %1888 = vmatprep.subr.mxu0 0.0
        %1889 = vmatpush1.xpose.msra.mxu0 0.0
        %1890 = vmatprep.subr.mxu0 0.0
        %1891 = vmatpush1.xpose.msra.mxu0 0.0
        %1892 = vmatprep.subr.mxu0 0.0
        %1893 = vmatpush1.xpose.msra.mxu0 0.0
        %1894 = vmatprep.subr.mxu0 0.0
        %1895 = vmatpush1.xpose.msra.mxu0 0.0
        %1896 = vmatprep.subr.mxu0 0.0
        %1897 = vmatpush1.xpose.msra.mxu0 0.0
        %1898 = vmatprep.subr.mxu0 0.0
        %1899 = vmatpush1.xpose.msra.mxu0 0.0
        %1900 = vmatprep.subr.mxu0 0.0
        %1901 = vmatpush1.xpose.msra.mxu0 0.0
        %1902 = vmatprep.subr.mxu0 0.0
        %1903 = vmatpush1.xpose.msra.mxu0 0.0
        %1904 = vmatprep.subr.mxu0 0.0
        %1905 = vmatpush1.xpose.msra.mxu0 0.0
        %1906 = vmatprep.subr.mxu0 0.0
        %1907 = vmatpush1.xpose.msra.mxu0 0.0
        %1908 = vmatprep.subr.mxu0 0.0
        %1909 = vmatpush1.xpose.msra.mxu0 0.0
        %1910 = vmatprep.subr.mxu0 0.0
        %1911 = vmatpush1.xpose.msra.mxu0 0.0
        %1912 = vmatprep.subr.mxu0 0.0
        %1913 = vmatpush1.xpose.msra.mxu0 0.0
        %1914 = vmatprep.subr.mxu0 0.0
        %1915 = vmatpush1.xpose.msra.mxu0 0.0
        %1916 = vmatprep.subr.mxu0 0.0
        %1917 = vmatpush1.xpose.msra.mxu0 0.0
        %1918 = vmatprep.subr.mxu0 0.0
        %1919 = vmatpush1.xpose.msra.mxu0 0.0
        %1920 = vmatprep.subr.mxu0 0.0
        %1921 = vmatpush1.xpose.msra.mxu0 0.0
        %1922 = vmatprep.subr.mxu0 0.0
        %1923 = vmatpush1.xpose.msra.mxu0 0.0
        %1924 = vmatprep.subr.mxu0 0.0
        %1925 = vmatpush1.xpose.msra.mxu0 0.0
        %1926 = vmatprep.mubr.f32.mxu0 0.0
        %1927 = vmatmul.mubr.f32.gmra.mrb[0].mxu0 %v1857
        %v1928 = vpop.f32.mrb[0].mxu0
        %v1929 = vadd.f32 0.0, %v1928
        %v1930 = vpop.f32.mrb[0].mxu0
        %1931 = vdwg.mxu0
        %v1932 = vsel %vm1323, %v1397, -inf
        %1933 = vmax.xlane.f32.xlu0 %v1932
        %v1934 = vpop.xlane.xlu0 %1933
        %v1935 = vsel %vm1323, %v1473, -inf
        %1936 = vmax.xlane.f32.xlu0 %v1935
        %v1937 = vpop.xlane.xlu0 %1936
        %v1938 = vsel %vm1323, %v1549, -inf
        %1939 = vmax.xlane.f32.xlu0 %v1938
        %v1940 = vpop.xlane.xlu0 %1939
        %v1941 = vsel %vm1323, %v1625, -inf
        %1942 = vmax.xlane.f32.xlu0 %v1941
        %v1943 = vpop.xlane.xlu0 %1942
        %v1944 = vsel %vm1323, %v1701, -inf
        %1945 = vmax.xlane.f32.xlu0 %v1944
        %v1946 = vpop.xlane.xlu0 %1945
        %v1947 = vsel %vm1323, %v1777, -inf
        %1948 = vmax.xlane.f32.xlu0 %v1947
        %v1949 = vpop.xlane.xlu0 %1948
        %v1950 = vsel %vm1323, %v1853, -inf
        %1951 = vmax.xlane.f32.xlu0 %v1950
        %v1952 = vpop.xlane.xlu0 %1951
        %v1953 = vsel %vm1323, %v1929, -inf
        %1954 = vmax.xlane.f32.xlu0 %v1953
        %v1955 = vpop.xlane.xlu0 %1954
        %v1956 = vsub.f32 %v1397, %v1934
        %v1957 = vsub.f32 %v1473, %v1937
        %v1958 = vsub.f32 %v1549, %v1940
        %v1959 = vsub.f32 %v1625, %v1943
        %v1960 = vsub.f32 %v1701, %v1946
        %v1961 = vsub.f32 %v1777, %v1949
        %v1962 = vsub.f32 %v1853, %v1952
        %v1963 = vsub.f32 %v1929, %v1955
        %v1964 = vmul.f32 %v1956, 1.442695
        %v1965 = vpow.pop %v1964
        %v1966 = vmul.f32 %v1957, 1.442695
        %v1967 = vpow.pop %v1966
        %v1968 = vmul.f32 %v1958, 1.442695
        %v1969 = vpow.pop %v1968
        %v1970 = vmul.f32 %v1959, 1.442695
        %v1971 = vpow.pop %v1970
        %v1972 = vmul.f32 %v1960, 1.442695
        %v1973 = vpow.pop %v1972
        %v1974 = vmul.f32 %v1961, 1.442695
        %v1975 = vpow.pop %v1974
        %v1976 = vmul.f32 %v1962, 1.442695
        %v1977 = vpow.pop %v1976
        %v1978 = vmul.f32 %v1963, 1.442695
        %v1979 = vpow.pop %v1978
        %v1980 = vsel %vm1323, %v1965, 0.0
        %1981 = vadd.xlane.f32.xlu0 %v1980
        %v1982 = vpop.xlane.xlu0 %1981
        %v1983 = vsel %vm1323, %v1967, 0.0
        %1984 = vadd.xlane.f32.xlu0 %v1983
        %v1985 = vpop.xlane.xlu0 %1984
        %v1986 = vsel %vm1323, %v1969, 0.0
        %1987 = vadd.xlane.f32.xlu0 %v1986
        %v1988 = vpop.xlane.xlu0 %1987
        %v1989 = vsel %vm1323, %v1971, 0.0
        %1990 = vadd.xlane.f32.xlu0 %v1989
        %v1991 = vpop.xlane.xlu0 %1990
        %v1992 = vsel %vm1323, %v1973, 0.0
        %1993 = vadd.xlane.f32.xlu0 %v1992
        %v1994 = vpop.xlane.xlu0 %1993
        %v1995 = vsel %vm1323, %v1975, 0.0
        %1996 = vadd.xlane.f32.xlu0 %v1995
        %v1997 = vpop.xlane.xlu0 %1996
        %v1998 = vsel %vm1323, %v1977, 0.0
        %1999 = vadd.xlane.f32.xlu0 %v1998
        %v2000 = vpop.xlane.xlu0 %1999
        %v2001 = vsel %vm1323, %v1979, 0.0
        %2002 = vadd.xlane.f32.xlu0 %v2001
        %v2003 = vpop.xlane.xlu0 %2002
        %v2004 = vrcp.pop %v1982
        %v2005 = vrcp.pop %v1985
        %v2006 = vrcp.pop %v1988
        %v2007 = vrcp.pop %v1991
        %v2008 = vrcp.pop %v1994
        %v2009 = vrcp.pop %v1997
        %v2010 = vrcp.pop %v2000
        %v2011 = vrcp.pop %v2003
        %v2012 = vmul.f32 %v1982, %v2004
        %v2013 = vmul.f32 %v1985, %v2005
        %v2014 = vmul.f32 %v1988, %v2006
        %v2015 = vmul.f32 %v1991, %v2007
        %v2016 = vmul.f32 %v1994, %v2008
        %v2017 = vmul.f32 %v1997, %v2009
        %v2018 = vmul.f32 %v2000, %v2010
        %v2019 = vmul.f32 %v2003, %v2011
        %v2020 = vsub.f32 2.0, %v2012
        %v2021 = vsub.f32 2.0, %v2013
        %v2022 = vsub.f32 2.0, %v2014
        %v2023 = vsub.f32 2.0, %v2015
        %v2024 = vsub.f32 2.0, %v2016
        %v2025 = vsub.f32 2.0, %v2017
        %v2026 = vsub.f32 2.0, %v2018
        %v2027 = vsub.f32 2.0, %v2019
        %v2028 = vmul.f32 %v2004, %v2020
        %v2029 = vmul.f32 %v2005, %v2021
        %v2030 = vmul.f32 %v2006, %v2022
        %v2031 = vmul.f32 %v2007, %v2023
        %v2032 = vmul.f32 %v2008, %v2024
        %v2033 = vmul.f32 %v2009, %v2025
        %v2034 = vmul.f32 %v2010, %v2026
        %v2035 = vmul.f32 %v2011, %v2027
        %v2036 = vmul.f32 %v1965, %v2028
        %v2037 = vmul.f32 %v1967, %v2029
        %v2038 = vmul.f32 %v1969, %v2030
        %v2039 = vmul.f32 %v1971, %v2031
        %v2040 = vmul.f32 %v1973, %v2032
        %v2041 = vmul.f32 %v1975, %v2033
        %v2042 = vmul.f32 %v1977, %v2034
        %v2043 = vmul.f32 %v1979, %v2035
        %v2045 = vsel %vm1323, %v2036, 0
        %2047 = vmatprep.subr.mxu0 0.0
        %2048 = vmatpush1.msra.mxu0 %v1251
        %2049 = vmatprep.subr.mxu0 0.0
        %2050 = vmatpush1.msra.mxu0 0.0
        %2051 = vmatprep.subr.mxu0 0.0
        %2052 = vmatpush1.msra.mxu0 0.0
        %2053 = vmatprep.subr.mxu0 0.0
        %2054 = vmatpush1.msra.mxu0 0.0
        %2055 = vmatprep.subr.mxu0 0.0
        %2056 = vmatpush1.msra.mxu0 0.0
        %2057 = vmatprep.subr.mxu0 0.0
        %2058 = vmatpush1.msra.mxu0 0.0
        %2059 = vmatprep.subr.mxu0 0.0
        %2060 = vmatpush1.msra.mxu0 0.0
        %2061 = vmatprep.subr.mxu0 0.0
        %2062 = vmatpush1.msra.mxu0 0.0
        %2063 = vmatprep.subr.mxu0 0.0
        %2064 = vmatpush1.msra.mxu0 0.0
        %2065 = vmatprep.subr.mxu0 0.0
        %2066 = vmatpush1.msra.mxu0 0.0
        %2067 = vmatprep.subr.mxu0 0.0
        %2068 = vmatpush1.msra.mxu0 0.0
        %2069 = vmatprep.subr.mxu0 0.0
        %2070 = vmatpush1.msra.mxu0 0.0
        %2071 = vmatprep.subr.mxu0 0.0
        %2072 = vmatpush1.msra.mxu0 0.0
        %2073 = vmatprep.subr.mxu0 0.0
        %2074 = vmatpush1.msra.mxu0 0.0
        %2075 = vmatprep.subr.mxu0 0.0
        %2076 = vmatpush1.msra.mxu0 0.0
        %2077 = vmatprep.subr.mxu0 0.0
        %2078 = vmatpush1.msra.mxu0 0.0
        %2079 = vmatprep.subr.mxu0 0.0
        %2080 = vmatpush1.msra.mxu0 0.0
        %2081 = vmatprep.subr.mxu0 0.0
        %2082 = vmatpush1.msra.mxu0 0.0
        %2083 = vmatprep.subr.mxu0 0.0
        %2084 = vmatpush1.msra.mxu0 0.0
        %2085 = vmatprep.subr.mxu0 0.0
        %2086 = vmatpush1.msra.mxu0 0.0
        %2087 = vmatprep.subr.mxu0 0.0
        %2088 = vmatpush1.msra.mxu0 0.0
        %2089 = vmatprep.subr.mxu0 0.0
        %2090 = vmatpush1.msra.mxu0 0.0
        %2091 = vmatprep.subr.mxu0 0.0
        %2092 = vmatpush1.msra.mxu0 0.0
        %2093 = vmatprep.subr.mxu0 0.0
        %2094 = vmatpush1.msra.mxu0 0.0
        %2095 = vmatprep.subr.mxu0 0.0
        %2096 = vmatpush1.msra.mxu0 0.0
        %2097 = vmatprep.subr.mxu0 0.0
        %2098 = vmatpush1.msra.mxu0 0.0
        %2099 = vmatprep.subr.mxu0 0.0
        %2100 = vmatpush1.msra.mxu0 0.0
        %2101 = vmatprep.subr.mxu0 0.0
        %2102 = vmatpush1.msra.mxu0 0.0
        %2103 = vmatprep.subr.mxu0 0.0
        %2104 = vmatpush1.msra.mxu0 0.0
        %2105 = vmatprep.subr.mxu0 0.0
        %2106 = vmatpush1.msra.mxu0 0.0
        %2107 = vmatprep.subr.mxu0 0.0
        %2108 = vmatpush1.msra.mxu0 0.0
        %2109 = vmatprep.subr.mxu0 0.0
        %2110 = vmatpush1.msra.mxu0 0.0
        %2111 = vmatprep.mubr.f32.mxu0 0.0
        %2112 = vmatmul.mubr.f32.gmra.mrb[0].mxu0 %v2045
        %v2113 = vpop.f32.mrb[0].mxu0
        %v2114 = vadd.f32 0.0, %v2113
        %v2115 = vpop.f32.mrb[0].mxu0
        %2116 = vdwg.mxu0
        %v2118 = vsel %vm1323, %v2037, 0
        %2120 = vmatprep.subr.mxu0 0.0
        %2121 = vmatpush1.msra.mxu0 %v1252
        %2122 = vmatprep.subr.mxu0 0.0
        %2123 = vmatpush1.msra.mxu0 0.0
        %2124 = vmatprep.subr.mxu0 0.0
        %2125 = vmatpush1.msra.mxu0 0.0
        %2126 = vmatprep.subr.mxu0 0.0
        %2127 = vmatpush1.msra.mxu0 0.0
        %2128 = vmatprep.subr.mxu0 0.0
        %2129 = vmatpush1.msra.mxu0 0.0
        %2130 = vmatprep.subr.mxu0 0.0
        %2131 = vmatpush1.msra.mxu0 0.0
        %2132 = vmatprep.subr.mxu0 0.0
        %2133 = vmatpush1.msra.mxu0 0.0
        %2134 = vmatprep.subr.mxu0 0.0
        %2135 = vmatpush1.msra.mxu0 0.0
        %2136 = vmatprep.subr.mxu0 0.0
        %2137 = vmatpush1.msra.mxu0 0.0
        %2138 = vmatprep.subr.mxu0 0.0
        %2139 = vmatpush1.msra.mxu0 0.0
        %2140 = vmatprep.subr.mxu0 0.0
        %2141 = vmatpush1.msra.mxu0 0.0
        %2142 = vmatprep.subr.mxu0 0.0
        %2143 = vmatpush1.msra.mxu0 0.0
        %2144 = vmatprep.subr.mxu0 0.0
        %2145 = vmatpush1.msra.mxu0 0.0
        %2146 = vmatprep.subr.mxu0 0.0
        %2147 = vmatpush1.msra.mxu0 0.0
        %2148 = vmatprep.subr.mxu0 0.0
        %2149 = vmatpush1.msra.mxu0 0.0
        %2150 = vmatprep.subr.mxu0 0.0
        %2151 = vmatpush1.msra.mxu0 0.0
        %2152 = vmatprep.subr.mxu0 0.0
        %2153 = vmatpush1.msra.mxu0 0.0
        %2154 = vmatprep.subr.mxu0 0.0
        %2155 = vmatpush1.msra.mxu0 0.0
        %2156 = vmatprep.subr.mxu0 0.0
        %2157 = vmatpush1.msra.mxu0 0.0
        %2158 = vmatprep.subr.mxu0 0.0
        %2159 = vmatpush1.msra.mxu0 0.0
        %2160 = vmatprep.subr.mxu0 0.0
        %2161 = vmatpush1.msra.mxu0 0.0
        %2162 = vmatprep.subr.mxu0 0.0
        %2163 = vmatpush1.msra.mxu0 0.0
        %2164 = vmatprep.subr.mxu0 0.0
        %2165 = vmatpush1.msra.mxu0 0.0
        %2166 = vmatprep.subr.mxu0 0.0
        %2167 = vmatpush1.msra.mxu0 0.0
        %2168 = vmatprep.subr.mxu0 0.0
        %2169 = vmatpush1.msra.mxu0 0.0
        %2170 = vmatprep.subr.mxu0 0.0
        %2171 = vmatpush1.msra.mxu0 0.0
        %2172 = vmatprep.subr.mxu0 0.0
        %2173 = vmatpush1.msra.mxu0 0.0
        %2174 = vmatprep.subr.mxu0 0.0
        %2175 = vmatpush1.msra.mxu0 0.0
        %2176 = vmatprep.subr.mxu0 0.0
        %2177 = vmatpush1.msra.mxu0 0.0
        %2178 = vmatprep.subr.mxu0 0.0
        %2179 = vmatpush1.msra.mxu0 0.0
        %2180 = vmatprep.subr.mxu0 0.0
        %2181 = vmatpush1.msra.mxu0 0.0
        %2182 = vmatprep.subr.mxu0 0.0
        %2183 = vmatpush1.msra.mxu0 0.0
        %2184 = vmatprep.mubr.f32.mxu0 0.0
        %2185 = vmatmul.mubr.f32.gmra.mrb[0].mxu0 %v2118
        %v2186 = vpop.f32.mrb[0].mxu0
        %v2187 = vadd.f32 0.0, %v2186
        %v2188 = vpop.f32.mrb[0].mxu0
        %2189 = vdwg.mxu0
        %v2191 = vsel %vm1323, %v2038, 0
        %2193 = vmatprep.subr.mxu0 0.0
        %2194 = vmatpush1.msra.mxu0 %v1253
        %2195 = vmatprep.subr.mxu0 0.0
        %2196 = vmatpush1.msra.mxu0 0.0
        %2197 = vmatprep.subr.mxu0 0.0
        %2198 = vmatpush1.msra.mxu0 0.0
        %2199 = vmatprep.subr.mxu0 0.0
        %2200 = vmatpush1.msra.mxu0 0.0
        %2201 = vmatprep.subr.mxu0 0.0
        %2202 = vmatpush1.msra.mxu0 0.0
        %2203 = vmatprep.subr.mxu0 0.0
        %2204 = vmatpush1.msra.mxu0 0.0
        %2205 = vmatprep.subr.mxu0 0.0
        %2206 = vmatpush1.msra.mxu0 0.0
        %2207 = vmatprep.subr.mxu0 0.0
        %2208 = vmatpush1.msra.mxu0 0.0
        %2209 = vmatprep.subr.mxu0 0.0
        %2210 = vmatpush1.msra.mxu0 0.0
        %2211 = vmatprep.subr.mxu0 0.0
        %2212 = vmatpush1.msra.mxu0 0.0
        %2213 = vmatprep.subr.mxu0 0.0
        %2214 = vmatpush1.msra.mxu0 0.0
        %2215 = vmatprep.subr.mxu0 0.0
        %2216 = vmatpush1.msra.mxu0 0.0
        %2217 = vmatprep.subr.mxu0 0.0
        %2218 = vmatpush1.msra.mxu0 0.0
        %2219 = vmatprep.subr.mxu0 0.0
        %2220 = vmatpush1.msra.mxu0 0.0
        %2221 = vmatprep.subr.mxu0 0.0
        %2222 = vmatpush1.msra.mxu0 0.0
        %2223 = vmatprep.subr.mxu0 0.0
        %2224 = vmatpush1.msra.mxu0 0.0
        %2225 = vmatprep.subr.mxu0 0.0
        %2226 = vmatpush1.msra.mxu0 0.0
        %2227 = vmatprep.subr.mxu0 0.0
        %2228 = vmatpush1.msra.mxu0 0.0
        %2229 = vmatprep.subr.mxu0 0.0
        %2230 = vmatpush1.msra.mxu0 0.0
        %2231 = vmatprep.subr.mxu0 0.0
        %2232 = vmatpush1.msra.mxu0 0.0
        %2233 = vmatprep.subr.mxu0 0.0
        %2234 = vmatpush1.msra.mxu0 0.0
        %2235 = vmatprep.subr.mxu0 0.0
        %2236 = vmatpush1.msra.mxu0 0.0
        %2237 = vmatprep.subr.mxu0 0.0
        %2238 = vmatpush1.msra.mxu0 0.0
        %2239 = vmatprep.subr.mxu0 0.0
        %2240 = vmatpush1.msra.mxu0 0.0
        %2241 = vmatprep.subr.mxu0 0.0
        %2242 = vmatpush1.msra.mxu0 0.0
        %2243 = vmatprep.subr.mxu0 0.0
        %2244 = vmatpush1.msra.mxu0 0.0
        %2245 = vmatprep.subr.mxu0 0.0
        %2246 = vmatpush1.msra.mxu0 0.0
        %2247 = vmatprep.subr.mxu0 0.0
        %2248 = vmatpush1.msra.mxu0 0.0
        %2249 = vmatprep.subr.mxu0 0.0
        %2250 = vmatpush1.msra.mxu0 0.0
        %2251 = vmatprep.subr.mxu0 0.0
        %2252 = vmatpush1.msra.mxu0 0.0
        %2253 = vmatprep.subr.mxu0 0.0
        %2254 = vmatpush1.msra.mxu0 0.0
        %2255 = vmatprep.subr.mxu0 0.0
        %2256 = vmatpush1.msra.mxu0 0.0
        %2257 = vmatprep.mubr.f32.mxu0 0.0
        %2258 = vmatmul.mubr.f32.gmra.mrb[0].mxu0 %v2191
        %v2259 = vpop.f32.mrb[0].mxu0
        %v2260 = vadd.f32 0.0, %v2259
        %v2261 = vpop.f32.mrb[0].mxu0
        %2262 = vdwg.mxu0
        %v2264 = vsel %vm1323, %v2039, 0
        %2266 = vmatprep.subr.mxu0 0.0
        %2267 = vmatpush1.msra.mxu0 %v1254
        %2268 = vmatprep.subr.mxu0 0.0
        %2269 = vmatpush1.msra.mxu0 0.0
        %2270 = vmatprep.subr.mxu0 0.0
        %2271 = vmatpush1.msra.mxu0 0.0
        %2272 = vmatprep.subr.mxu0 0.0
        %2273 = vmatpush1.msra.mxu0 0.0
        %2274 = vmatprep.subr.mxu0 0.0
        %2275 = vmatpush1.msra.mxu0 0.0
        %2276 = vmatprep.subr.mxu0 0.0
        %2277 = vmatpush1.msra.mxu0 0.0
        %2278 = vmatprep.subr.mxu0 0.0
        %2279 = vmatpush1.msra.mxu0 0.0
        %2280 = vmatprep.subr.mxu0 0.0
        %2281 = vmatpush1.msra.mxu0 0.0
        %2282 = vmatprep.subr.mxu0 0.0
        %2283 = vmatpush1.msra.mxu0 0.0
        %2284 = vmatprep.subr.mxu0 0.0
        %2285 = vmatpush1.msra.mxu0 0.0
        %2286 = vmatprep.subr.mxu0 0.0
        %2287 = vmatpush1.msra.mxu0 0.0
        %2288 = vmatprep.subr.mxu0 0.0
        %2289 = vmatpush1.msra.mxu0 0.0
        %2290 = vmatprep.subr.mxu0 0.0
        %2291 = vmatpush1.msra.mxu0 0.0
        %2292 = vmatprep.subr.mxu0 0.0
        %2293 = vmatpush1.msra.mxu0 0.0
        %2294 = vmatprep.subr.mxu0 0.0
        %2295 = vmatpush1.msra.mxu0 0.0
        %2296 = vmatprep.subr.mxu0 0.0
        %2297 = vmatpush1.msra.mxu0 0.0
        %2298 = vmatprep.subr.mxu0 0.0
        %2299 = vmatpush1.msra.mxu0 0.0
        %2300 = vmatprep.subr.mxu0 0.0
        %2301 = vmatpush1.msra.mxu0 0.0
        %2302 = vmatprep.subr.mxu0 0.0
        %2303 = vmatpush1.msra.mxu0 0.0
        %2304 = vmatprep.subr.mxu0 0.0
        %2305 = vmatpush1.msra.mxu0 0.0
        %2306 = vmatprep.subr.mxu0 0.0
        %2307 = vmatpush1.msra.mxu0 0.0
        %2308 = vmatprep.subr.mxu0 0.0
        %2309 = vmatpush1.msra.mxu0 0.0
        %2310 = vmatprep.subr.mxu0 0.0
        %2311 = vmatpush1.msra.mxu0 0.0
        %2312 = vmatprep.subr.mxu0 0.0
        %2313 = vmatpush1.msra.mxu0 0.0
        %2314 = vmatprep.subr.mxu0 0.0
        %2315 = vmatpush1.msra.mxu0 0.0
        %2316 = vmatprep.subr.mxu0 0.0
        %2317 = vmatpush1.msra.mxu0 0.0
        %2318 = vmatprep.subr.mxu0 0.0
        %2319 = vmatpush1.msra.mxu0 0.0
        %2320 = vmatprep.subr.mxu0 0.0
        %2321 = vmatpush1.msra.mxu0 0.0
        %2322 = vmatprep.subr.mxu0 0.0
        %2323 = vmatpush1.msra.mxu0 0.0
        %2324 = vmatprep.subr.mxu0 0.0
        %2325 = vmatpush1.msra.mxu0 0.0
        %2326 = vmatprep.subr.mxu0 0.0
        %2327 = vmatpush1.msra.mxu0 0.0
        %2328 = vmatprep.subr.mxu0 0.0
        %2329 = vmatpush1.msra.mxu0 0.0
        %2330 = vmatprep.mubr.f32.mxu0 0.0
        %2331 = vmatmul.mubr.f32.gmra.mrb[0].mxu0 %v2264
        %v2332 = vpop.f32.mrb[0].mxu0
        %v2333 = vadd.f32 0.0, %v2332
        %v2334 = vpop.f32.mrb[0].mxu0
        %2335 = vdwg.mxu0
        %v2337 = vsel %vm1323, %v2040, 0
        %2339 = vmatprep.subr.mxu0 0.0
        %2340 = vmatpush1.msra.mxu0 %v1319
        %2341 = vmatprep.subr.mxu0 0.0
        %2342 = vmatpush1.msra.mxu0 0.0
        %2343 = vmatprep.subr.mxu0 0.0
        %2344 = vmatpush1.msra.mxu0 0.0
        %2345 = vmatprep.subr.mxu0 0.0
        %2346 = vmatpush1.msra.mxu0 0.0
        %2347 = vmatprep.subr.mxu0 0.0
        %2348 = vmatpush1.msra.mxu0 0.0
        %2349 = vmatprep.subr.mxu0 0.0
        %2350 = vmatpush1.msra.mxu0 0.0
        %2351 = vmatprep.subr.mxu0 0.0
        %2352 = vmatpush1.msra.mxu0 0.0
        %2353 = vmatprep.subr.mxu0 0.0
        %2354 = vmatpush1.msra.mxu0 0.0
        %2355 = vmatprep.subr.mxu0 0.0
        %2356 = vmatpush1.msra.mxu0 0.0
        %2357 = vmatprep.subr.mxu0 0.0
        %2358 = vmatpush1.msra.mxu0 0.0
        %2359 = vmatprep.subr.mxu0 0.0
        %2360 = vmatpush1.msra.mxu0 0.0
        %2361 = vmatprep.subr.mxu0 0.0
        %2362 = vmatpush1.msra.mxu0 0.0
        %2363 = vmatprep.subr.mxu0 0.0
        %2364 = vmatpush1.msra.mxu0 0.0
        %2365 = vmatprep.subr.mxu0 0.0
        %2366 = vmatpush1.msra.mxu0 0.0
        %2367 = vmatprep.subr.mxu0 0.0
        %2368 = vmatpush1.msra.mxu0 0.0
        %2369 = vmatprep.subr.mxu0 0.0
        %2370 = vmatpush1.msra.mxu0 0.0
        %2371 = vmatprep.subr.mxu0 0.0
        %2372 = vmatpush1.msra.mxu0 0.0
        %2373 = vmatprep.subr.mxu0 0.0
        %2374 = vmatpush1.msra.mxu0 0.0
        %2375 = vmatprep.subr.mxu0 0.0
        %2376 = vmatpush1.msra.mxu0 0.0
        %2377 = vmatprep.subr.mxu0 0.0
        %2378 = vmatpush1.msra.mxu0 0.0
        %2379 = vmatprep.subr.mxu0 0.0
        %2380 = vmatpush1.msra.mxu0 0.0
        %2381 = vmatprep.subr.mxu0 0.0
        %2382 = vmatpush1.msra.mxu0 0.0
        %2383 = vmatprep.subr.mxu0 0.0
        %2384 = vmatpush1.msra.mxu0 0.0
        %2385 = vmatprep.subr.mxu0 0.0
        %2386 = vmatpush1.msra.mxu0 0.0
        %2387 = vmatprep.subr.mxu0 0.0
        %2388 = vmatpush1.msra.mxu0 0.0
        %2389 = vmatprep.subr.mxu0 0.0
        %2390 = vmatpush1.msra.mxu0 0.0
        %2391 = vmatprep.subr.mxu0 0.0
        %2392 = vmatpush1.msra.mxu0 0.0
        %2393 = vmatprep.subr.mxu0 0.0
        %2394 = vmatpush1.msra.mxu0 0.0
        %2395 = vmatprep.subr.mxu0 0.0
        %2396 = vmatpush1.msra.mxu0 0.0
        %2397 = vmatprep.subr.mxu0 0.0
        %2398 = vmatpush1.msra.mxu0 0.0
        %2399 = vmatprep.subr.mxu0 0.0
        %2400 = vmatpush1.msra.mxu0 0.0
        %2401 = vmatprep.subr.mxu0 0.0
        %2402 = vmatpush1.msra.mxu0 0.0
        %2403 = vmatprep.mubr.f32.mxu0 0.0
        %2404 = vmatmul.mubr.f32.gmra.mrb[0].mxu0 %v2337
        %v2405 = vpop.f32.mrb[0].mxu0
        %v2406 = vadd.f32 0.0, %v2405
        %v2407 = vpop.f32.mrb[0].mxu0
        %2408 = vdwg.mxu0
        %v2410 = vsel %vm1323, %v2041, 0
        %2412 = vmatprep.subr.mxu0 0.0
        %2413 = vmatpush1.msra.mxu0 %v1320
        %2414 = vmatprep.subr.mxu0 0.0
        %2415 = vmatpush1.msra.mxu0 0.0
        %2416 = vmatprep.subr.mxu0 0.0
        %2417 = vmatpush1.msra.mxu0 0.0
        %2418 = vmatprep.subr.mxu0 0.0
        %2419 = vmatpush1.msra.mxu0 0.0
        %2420 = vmatprep.subr.mxu0 0.0
        %2421 = vmatpush1.msra.mxu0 0.0
        %2422 = vmatprep.subr.mxu0 0.0
        %2423 = vmatpush1.msra.mxu0 0.0
        %2424 = vmatprep.subr.mxu0 0.0
        %2425 = vmatpush1.msra.mxu0 0.0
        %2426 = vmatprep.subr.mxu0 0.0
        %2427 = vmatpush1.msra.mxu0 0.0
        %2428 = vmatprep.subr.mxu0 0.0
        %2429 = vmatpush1.msra.mxu0 0.0
        %2430 = vmatprep.subr.mxu0 0.0
        %2431 = vmatpush1.msra.mxu0 0.0
        %2432 = vmatprep.subr.mxu0 0.0
        %2433 = vmatpush1.msra.mxu0 0.0
        %2434 = vmatprep.subr.mxu0 0.0
        %2435 = vmatpush1.msra.mxu0 0.0
        %2436 = vmatprep.subr.mxu0 0.0
        %2437 = vmatpush1.msra.mxu0 0.0
        %2438 = vmatprep.subr.mxu0 0.0
        %2439 = vmatpush1.msra.mxu0 0.0
        %2440 = vmatprep.subr.mxu0 0.0
        %2441 = vmatpush1.msra.mxu0 0.0
        %2442 = vmatprep.subr.mxu0 0.0
        %2443 = vmatpush1.msra.mxu0 0.0
        %2444 = vmatprep.subr.mxu0 0.0
        %2445 = vmatpush1.msra.mxu0 0.0
        %2446 = vmatprep.subr.mxu0 0.0
        %2447 = vmatpush1.msra.mxu0 0.0
        %2448 = vmatprep.subr.mxu0 0.0
        %2449 = vmatpush1.msra.mxu0 0.0
        %2450 = vmatprep.subr.mxu0 0.0
        %2451 = vmatpush1.msra.mxu0 0.0
        %2452 = vmatprep.subr.mxu0 0.0
        %2453 = vmatpush1.msra.mxu0 0.0
        %2454 = vmatprep.subr.mxu0 0.0
        %2455 = vmatpush1.msra.mxu0 0.0
        %2456 = vmatprep.subr.mxu0 0.0
        %2457 = vmatpush1.msra.mxu0 0.0
        %2458 = vmatprep.subr.mxu0 0.0
        %2459 = vmatpush1.msra.mxu0 0.0
        %2460 = vmatprep.subr.mxu0 0.0
        %2461 = vmatpush1.msra.mxu0 0.0
        %2462 = vmatprep.subr.mxu0 0.0
        %2463 = vmatpush1.msra.mxu0 0.0
        %2464 = vmatprep.subr.mxu0 0.0
        %2465 = vmatpush1.msra.mxu0 0.0
        %2466 = vmatprep.subr.mxu0 0.0
        %2467 = vmatpush1.msra.mxu0 0.0
        %2468 = vmatprep.subr.mxu0 0.0
        %2469 = vmatpush1.msra.mxu0 0.0
        %2470 = vmatprep.subr.mxu0 0.0
        %2471 = vmatpush1.msra.mxu0 0.0
        %2472 = vmatprep.subr.mxu0 0.0
        %2473 = vmatpush1.msra.mxu0 0.0
        %2474 = vmatprep.subr.mxu0 0.0
        %2475 = vmatpush1.msra.mxu0 0.0
        %2476 = vmatprep.mubr.f32.mxu0 0.0
        %2477 = vmatmul.mubr.f32.gmra.mrb[0].mxu0 %v2410
        %v2478 = vpop.f32.mrb[0].mxu0
        %v2479 = vadd.f32 0.0, %v2478
        %v2480 = vpop.f32.mrb[0].mxu0
        %2481 = vdwg.mxu0
        %v2483 = vsel %vm1323, %v2042, 0
        %2485 = vmatprep.subr.mxu0 0.0
        %2486 = vmatpush1.msra.mxu0 %v1321
        %2487 = vmatprep.subr.mxu0 0.0
        %2488 = vmatpush1.msra.mxu0 0.0
        %2489 = vmatprep.subr.mxu0 0.0
        %2490 = vmatpush1.msra.mxu0 0.0
        %2491 = vmatprep.subr.mxu0 0.0
        %2492 = vmatpush1.msra.mxu0 0.0
        %2493 = vmatprep.subr.mxu0 0.0
        %2494 = vmatpush1.msra.mxu0 0.0
        %2495 = vmatprep.subr.mxu0 0.0
        %2496 = vmatpush1.msra.mxu0 0.0
        %2497 = vmatprep.subr.mxu0 0.0
        %2498 = vmatpush1.msra.mxu0 0.0
        %2499 = vmatprep.subr.mxu0 0.0
        %2500 = vmatpush1.msra.mxu0 0.0
        %2501 = vmatprep.subr.mxu0 0.0
        %2502 = vmatpush1.msra.mxu0 0.0
        %2503 = vmatprep.subr.mxu0 0.0
        %2504 = vmatpush1.msra.mxu0 0.0
        %2505 = vmatprep.subr.mxu0 0.0
        %2506 = vmatpush1.msra.mxu0 0.0
        %2507 = vmatprep.subr.mxu0 0.0
        %2508 = vmatpush1.msra.mxu0 0.0
        %2509 = vmatprep.subr.mxu0 0.0
        %2510 = vmatpush1.msra.mxu0 0.0
        %2511 = vmatprep.subr.mxu0 0.0
        %2512 = vmatpush1.msra.mxu0 0.0
        %2513 = vmatprep.subr.mxu0 0.0
        %2514 = vmatpush1.msra.mxu0 0.0
        %2515 = vmatprep.subr.mxu0 0.0
        %2516 = vmatpush1.msra.mxu0 0.0
        %2517 = vmatprep.subr.mxu0 0.0
        %2518 = vmatpush1.msra.mxu0 0.0
        %2519 = vmatprep.subr.mxu0 0.0
        %2520 = vmatpush1.msra.mxu0 0.0
        %2521 = vmatprep.subr.mxu0 0.0
        %2522 = vmatpush1.msra.mxu0 0.0
        %2523 = vmatprep.subr.mxu0 0.0
        %2524 = vmatpush1.msra.mxu0 0.0
        %2525 = vmatprep.subr.mxu0 0.0
        %2526 = vmatpush1.msra.mxu0 0.0
        %2527 = vmatprep.subr.mxu0 0.0
        %2528 = vmatpush1.msra.mxu0 0.0
        %2529 = vmatprep.subr.mxu0 0.0
        %2530 = vmatpush1.msra.mxu0 0.0
        %2531 = vmatprep.subr.mxu0 0.0
        %2532 = vmatpush1.msra.mxu0 0.0
        %2533 = vmatprep.subr.mxu0 0.0
        %2534 = vmatpush1.msra.mxu0 0.0
        %2535 = vmatprep.subr.mxu0 0.0
        %2536 = vmatpush1.msra.mxu0 0.0
        %2537 = vmatprep.subr.mxu0 0.0
        %2538 = vmatpush1.msra.mxu0 0.0
        %2539 = vmatprep.subr.mxu0 0.0
        %2540 = vmatpush1.msra.mxu0 0.0
        %2541 = vmatprep.subr.mxu0 0.0
        %2542 = vmatpush1.msra.mxu0 0.0
        %2543 = vmatprep.subr.mxu0 0.0
        %2544 = vmatpush1.msra.mxu0 0.0
        %2545 = vmatprep.subr.mxu0 0.0
        %2546 = vmatpush1.msra.mxu0 0.0
        %2547 = vmatprep.subr.mxu0 0.0
        %2548 = vmatpush1.msra.mxu0 0.0
        %2549 = vmatprep.mubr.f32.mxu0 0.0
        %2550 = vmatmul.mubr.f32.gmra.mrb[0].mxu0 %v2483
        %v2551 = vpop.f32.mrb[0].mxu0
        %v2552 = vadd.f32 0.0, %v2551
        %v2553 = vpop.f32.mrb[0].mxu0
        %2554 = vdwg.mxu0
        %v2556 = vsel %vm1323, %v2043, 0
        %2558 = vmatprep.subr.mxu0 0.0
        %2559 = vmatpush1.msra.mxu0 %v1322
        %2560 = vmatprep.subr.mxu0 0.0
        %2561 = vmatpush1.msra.mxu0 0.0
        %2562 = vmatprep.subr.mxu0 0.0
        %2563 = vmatpush1.msra.mxu0 0.0
        %2564 = vmatprep.subr.mxu0 0.0
        %2565 = vmatpush1.msra.mxu0 0.0
        %2566 = vmatprep.subr.mxu0 0.0
        %2567 = vmatpush1.msra.mxu0 0.0
        %2568 = vmatprep.subr.mxu0 0.0
        %2569 = vmatpush1.msra.mxu0 0.0
        %2570 = vmatprep.subr.mxu0 0.0
        %2571 = vmatpush1.msra.mxu0 0.0
        %2572 = vmatprep.subr.mxu0 0.0
        %2573 = vmatpush1.msra.mxu0 0.0
        %2574 = vmatprep.subr.mxu0 0.0
        %2575 = vmatpush1.msra.mxu0 0.0
        %2576 = vmatprep.subr.mxu0 0.0
        %2577 = vmatpush1.msra.mxu0 0.0
        %2578 = vmatprep.subr.mxu0 0.0
        %2579 = vmatpush1.msra.mxu0 0.0
        %2580 = vmatprep.subr.mxu0 0.0
        %2581 = vmatpush1.msra.mxu0 0.0
        %2582 = vmatprep.subr.mxu0 0.0
        %2583 = vmatpush1.msra.mxu0 0.0
        %2584 = vmatprep.subr.mxu0 0.0
        %2585 = vmatpush1.msra.mxu0 0.0
        %2586 = vmatprep.subr.mxu0 0.0
        %2587 = vmatpush1.msra.mxu0 0.0
        %2588 = vmatprep.subr.mxu0 0.0
        %2589 = vmatpush1.msra.mxu0 0.0
        %2590 = vmatprep.subr.mxu0 0.0
        %2591 = vmatpush1.msra.mxu0 0.0
        %2592 = vmatprep.subr.mxu0 0.0
        %2593 = vmatpush1.msra.mxu0 0.0
        %2594 = vmatprep.subr.mxu0 0.0
        %2595 = vmatpush1.msra.mxu0 0.0
        %2596 = vmatprep.subr.mxu0 0.0
        %2597 = vmatpush1.msra.mxu0 0.0
        %2598 = vmatprep.subr.mxu0 0.0
        %2599 = vmatpush1.msra.mxu0 0.0
        %2600 = vmatprep.subr.mxu0 0.0
        %2601 = vmatpush1.msra.mxu0 0.0
        %2602 = vmatprep.subr.mxu0 0.0
        %2603 = vmatpush1.msra.mxu0 0.0
        %2604 = vmatprep.subr.mxu0 0.0
        %2605 = vmatpush1.msra.mxu0 0.0
        %2606 = vmatprep.subr.mxu0 0.0
        %2607 = vmatpush1.msra.mxu0 0.0
        %2608 = vmatprep.subr.mxu0 0.0
        %2609 = vmatpush1.msra.mxu0 0.0
        %2610 = vmatprep.subr.mxu0 0.0
        %2611 = vmatpush1.msra.mxu0 0.0
        %2612 = vmatprep.subr.mxu0 0.0
        %2613 = vmatpush1.msra.mxu0 0.0
        %2614 = vmatprep.subr.mxu0 0.0
        %2615 = vmatpush1.msra.mxu0 0.0
        %2616 = vmatprep.subr.mxu0 0.0
        %2617 = vmatpush1.msra.mxu0 0.0
        %2618 = vmatprep.subr.mxu0 0.0
        %2619 = vmatpush1.msra.mxu0 0.0
        %2620 = vmatprep.subr.mxu0 0.0
        %2621 = vmatpush1.msra.mxu0 0.0
        %2622 = vmatprep.mubr.f32.mxu0 0.0
        %2623 = vmatmul.mubr.f32.gmra.mrb[0].mxu0 %v2556
        %v2624 = vpop.f32.mrb[0].mxu0
        %v2625 = vadd.f32 0.0, %v2624
        %v2626 = vpop.f32.mrb[0].mxu0
        %2627 = vdwg.mxu0
        %v2628 = vcombine.low %v2114, %v2260
        %v2629 = vcombine.high %v2114, %v2260
        %v2631 = vunpack.c.l.s4 1983009808
        %v2632 = vunpack.c.0.s8 %v2631
        %v2633 = vlaneseq
        %v2634 = vshrl.u32 %v2633, 7
        %v2635 = vsub.s32 %v2632, %v2634
        %v2636 = vrot.slane %v2628, %v2635
        %v2638 = vunpack.c.l.s4 1983009808
        %v2639 = vunpack.c.0.s8 %v2638
        %v2640 = vlaneseq
        %v2641 = vshrl.u32 %v2640, 7
        %v2642 = vsub.s32 %v2639, %v2641
        %v2643 = vrot.slane %v2629, %v2642
        %v2644 = vcombine.low %v2187, %v2333
        %v2645 = vcombine.high %v2187, %v2333
        %v2647 = vunpack.c.l.s4 1983009808
        %v2648 = vunpack.c.0.s8 %v2647
        %v2649 = vlaneseq
        %v2650 = vshrl.u32 %v2649, 7
        %v2651 = vsub.s32 %v2648, %v2650
        %v2652 = vrot.slane %v2644, %v2651
        %v2654 = vunpack.c.l.s4 1983009808
        %v2655 = vunpack.c.0.s8 %v2654
        %v2656 = vlaneseq
        %v2657 = vshrl.u32 %v2656, 7
        %v2658 = vsub.s32 %v2655, %v2657
        %v2659 = vrot.slane %v2645, %v2658
        %v2660 = vcombine.low %v2636, %v2652
        %v2661 = vcombine.high %v2636, %v2652
        %v2663 = vunpack.c.l.s4 1934713408
        %v2664 = vunpack.c.0.s8 %v2663
        %v2665 = vlaneseq
        %v2666 = vshrl.u32 %v2665, 7
        %v2667 = vsub.s32 %v2664, %v2666
        %v2668 = vrot.slane %v2660, %v2667
        %v2670 = vunpack.c.l.s4 1934713408
        %v2671 = vunpack.c.0.s8 %v2670
        %v2672 = vlaneseq
        %v2673 = vshrl.u32 %v2672, 7
        %v2674 = vsub.s32 %v2671, %v2673
        %v2675 = vrot.slane %v2661, %v2674
        %v2676 = vcombine.low %v2643, %v2659
        %v2677 = vcombine.high %v2643, %v2659
        %v2679 = vunpack.c.l.s4 1934713408
        %v2680 = vunpack.c.0.s8 %v2679
        %v2681 = vlaneseq
        %v2682 = vshrl.u32 %v2681, 7
        %v2683 = vsub.s32 %v2680, %v2682
        %v2684 = vrot.slane %v2676, %v2683
        %v2686 = vunpack.c.l.s4 1934713408
        %v2687 = vunpack.c.0.s8 %v2686
        %v2688 = vlaneseq
        %v2689 = vshrl.u32 %v2688, 7
        %v2690 = vsub.s32 %v2687, %v2689
        %v2691 = vrot.slane %v2677, %v2690
        %v2692 = vcombine.high %v2668, 0.0
        %v2693 = vcombine.high %v2675, 0.0
        %v2694 = vcombine.high %v2684, 0.0
        %v2695 = vcombine.high %v2691, 0.0
        %v2696 = vcombine.low %v2406, %v2552
        %v2697 = vcombine.high %v2406, %v2552
        %v2699 = vunpack.c.l.s4 1983009808
        %v2700 = vunpack.c.0.s8 %v2699
        %v2701 = vlaneseq
        %v2702 = vshrl.u32 %v2701, 7
        %v2703 = vsub.s32 %v2700, %v2702
        %v2704 = vrot.slane %v2696, %v2703
        %v2706 = vunpack.c.l.s4 1983009808
        %v2707 = vunpack.c.0.s8 %v2706
        %v2708 = vlaneseq
        %v2709 = vshrl.u32 %v2708, 7
        %v2710 = vsub.s32 %v2707, %v2709
        %v2711 = vrot.slane %v2697, %v2710
        %v2712 = vcombine.low %v2479, %v2625
        %v2713 = vcombine.high %v2479, %v2625
        %v2715 = vunpack.c.l.s4 1983009808
        %v2716 = vunpack.c.0.s8 %v2715
        %v2717 = vlaneseq
        %v2718 = vshrl.u32 %v2717, 7
        %v2719 = vsub.s32 %v2716, %v2718
        %v2720 = vrot.slane %v2712, %v2719
        %v2722 = vunpack.c.l.s4 1983009808
        %v2723 = vunpack.c.0.s8 %v2722
        %v2724 = vlaneseq
        %v2725 = vshrl.u32 %v2724, 7
        %v2726 = vsub.s32 %v2723, %v2725
        %v2727 = vrot.slane %v2713, %v2726
        %v2728 = vcombine.low %v2704, %v2720
        %v2729 = vcombine.high %v2704, %v2720
        %v2731 = vunpack.c.l.s4 1934713408
        %v2732 = vunpack.c.0.s8 %v2731
        %v2733 = vlaneseq
        %v2734 = vshrl.u32 %v2733, 7
        %v2735 = vsub.s32 %v2732, %v2734
        %v2736 = vrot.slane %v2728, %v2735
        %v2738 = vunpack.c.l.s4 1934713408
        %v2739 = vunpack.c.0.s8 %v2738
        %v2740 = vlaneseq
        %v2741 = vshrl.u32 %v2740, 7
        %v2742 = vsub.s32 %v2739, %v2741
        %v2743 = vrot.slane %v2729, %v2742
        %v2744 = vcombine.low %v2711, %v2727
        %v2745 = vcombine.high %v2711, %v2727
        %v2747 = vunpack.c.l.s4 1934713408
        %v2748 = vunpack.c.0.s8 %v2747
        %v2749 = vlaneseq
        %v2750 = vshrl.u32 %v2749, 7
        %v2751 = vsub.s32 %v2748, %v2750
        %v2752 = vrot.slane %v2744, %v2751
        %v2754 = vunpack.c.l.s4 1934713408
        %v2755 = vunpack.c.0.s8 %v2754
        %v2756 = vlaneseq
        %v2757 = vshrl.u32 %v2756, 7
        %v2758 = vsub.s32 %v2755, %v2757
        %v2759 = vrot.slane %v2745, %v2758
        %v2760 = vcombine.high %v2736, 0.0
        %v2761 = vcombine.high %v2743, 0.0
        %v2762 = vcombine.high %v2752, 0.0
        %v2763 = vcombine.high %v2759, 0.0
        %v2764 = vcombine.low %v2668, %v2675
        %v2766 = vunpack.c.l.s4 1983009808
        %v2767 = vunpack.c.0.s8 %v2766
        %v2768 = vlaneseq
        %v2769 = vshrl.u32 %v2768, 7
        %v2770 = vsub.s32 %v2767, %v2769
        %v2771 = vrot.slane %v2764, %v2770
        %v2772 = vcombine.low %v2692, %v2693
        %v2774 = vunpack.c.l.s4 1983009808
        %v2775 = vunpack.c.0.s8 %v2774
        %v2776 = vlaneseq
        %v2777 = vshrl.u32 %v2776, 7
        %v2778 = vsub.s32 %v2775, %v2777
        %v2779 = vrot.slane %v2772, %v2778
        %v2780 = vcombine.low %v2684, %v2691
        %v2782 = vunpack.c.l.s4 1983009808
        %v2783 = vunpack.c.0.s8 %v2782
        %v2784 = vlaneseq
        %v2785 = vshrl.u32 %v2784, 7
        %v2786 = vsub.s32 %v2783, %v2785
        %v2787 = vrot.slane %v2780, %v2786
        %v2788 = vcombine.low %v2694, %v2695
        %v2790 = vunpack.c.l.s4 1983009808
        %v2791 = vunpack.c.0.s8 %v2790
        %v2792 = vlaneseq
        %v2793 = vshrl.u32 %v2792, 7
        %v2794 = vsub.s32 %v2791, %v2793
        %v2795 = vrot.slane %v2788, %v2794
        %v2796 = vcombine.low %v2771, %v2779
        %v2797 = vcombine.high %v2771, %v2779
        %v2799 = vunpack.c.l.s4 1934713408
        %v2800 = vunpack.c.0.s8 %v2799
        %v2801 = vlaneseq
        %v2802 = vshrl.u32 %v2801, 7
        %v2803 = vsub.s32 %v2800, %v2802
        %v2804 = vrot.slane %v2796, %v2803
        %v2806 = vunpack.c.l.s4 1934713408
        %v2807 = vunpack.c.0.s8 %v2806
        %v2808 = vlaneseq
        %v2809 = vshrl.u32 %v2808, 7
        %v2810 = vsub.s32 %v2807, %v2809
        %v2811 = vrot.slane %v2797, %v2810
        %v2812 = vcombine.low %v2787, %v2795
        %v2813 = vcombine.high %v2787, %v2795
        %v2815 = vunpack.c.l.s4 1934713408
        %v2816 = vunpack.c.0.s8 %v2815
        %v2817 = vlaneseq
        %v2818 = vshrl.u32 %v2817, 7
        %v2819 = vsub.s32 %v2816, %v2818
        %v2820 = vrot.slane %v2812, %v2819
        %v2822 = vunpack.c.l.s4 1934713408
        %v2823 = vunpack.c.0.s8 %v2822
        %v2824 = vlaneseq
        %v2825 = vshrl.u32 %v2824, 7
        %v2826 = vsub.s32 %v2823, %v2825
        %v2827 = vrot.slane %v2813, %v2826
        %v2828 = vcombine.low %v2804, %v2820
        %v2829 = vcombine.high %v2804, %v2820
        %v2830 = vcombine.low %v2811, %v2827
        %v2831 = vcombine.high %v2811, %v2827
        %v2832 = vcombine.low %v2736, %v2743
        %v2834 = vunpack.c.l.s4 1983009808
        %v2835 = vunpack.c.0.s8 %v2834
        %v2836 = vlaneseq
        %v2837 = vshrl.u32 %v2836, 7
        %v2838 = vsub.s32 %v2835, %v2837
        %v2839 = vrot.slane %v2832, %v2838
        %v2840 = vcombine.low %v2760, %v2761
        %v2842 = vunpack.c.l.s4 1983009808
        %v2843 = vunpack.c.0.s8 %v2842
        %v2844 = vlaneseq
        %v2845 = vshrl.u32 %v2844, 7
        %v2846 = vsub.s32 %v2843, %v2845
        %v2847 = vrot.slane %v2840, %v2846
        %v2848 = vcombine.low %v2752, %v2759
        %v2850 = vunpack.c.l.s4 1983009808
        %v2851 = vunpack.c.0.s8 %v2850
        %v2852 = vlaneseq
        %v2853 = vshrl.u32 %v2852, 7
        %v2854 = vsub.s32 %v2851, %v2853
        %v2855 = vrot.slane %v2848, %v2854
        %v2856 = vcombine.low %v2762, %v2763
        %v2858 = vunpack.c.l.s4 1983009808
        %v2859 = vunpack.c.0.s8 %v2858
        %v2860 = vlaneseq
        %v2861 = vshrl.u32 %v2860, 7
        %v2862 = vsub.s32 %v2859, %v2861
        %v2863 = vrot.slane %v2856, %v2862
        %v2864 = vcombine.low %v2839, %v2847
        %v2865 = vcombine.high %v2839, %v2847
        %v2867 = vunpack.c.l.s4 1934713408
        %v2868 = vunpack.c.0.s8 %v2867
        %v2869 = vlaneseq
        %v2870 = vshrl.u32 %v2869, 7
        %v2871 = vsub.s32 %v2868, %v2870
        %v2872 = vrot.slane %v2864, %v2871
        %v2874 = vunpack.c.l.s4 1934713408
        %v2875 = vunpack.c.0.s8 %v2874
        %v2876 = vlaneseq
        %v2877 = vshrl.u32 %v2876, 7
        %v2878 = vsub.s32 %v2875, %v2877
        %v2879 = vrot.slane %v2865, %v2878
        %v2880 = vcombine.low %v2855, %v2863
        %v2881 = vcombine.high %v2855, %v2863
        %v2883 = vunpack.c.l.s4 1934713408
        %v2884 = vunpack.c.0.s8 %v2883
        %v2885 = vlaneseq
        %v2886 = vshrl.u32 %v2885, 7
        %v2887 = vsub.s32 %v2884, %v2886
        %v2888 = vrot.slane %v2880, %v2887
        %v2890 = vunpack.c.l.s4 1934713408
        %v2891 = vunpack.c.0.s8 %v2890
        %v2892 = vlaneseq
        %v2893 = vshrl.u32 %v2892, 7
        %v2894 = vsub.s32 %v2891, %v2893
        %v2895 = vrot.slane %v2881, %v2894
        %v2896 = vcombine.low %v2872, %v2888
        %v2897 = vcombine.high %v2872, %v2888
        %v2898 = vcombine.low %v2879, %v2895
        %v2899 = vcombine.high %v2879, %v2895
        %2902 = vrot.lane.b32.xlu0 %v2829, 8
        %v2903 = vpop.permute.xlu0 %2902
        %2904 = vrot.lane.b32.xlu0 %v2897, 8
        %v2905 = vpop.permute.xlu0 %2904
        %2910 = vrot.lane.b32.xlu0 %v2830, 16
        %v2911 = vpop.permute.xlu0 %2910
        %2912 = vrot.lane.b32.xlu0 %v2898, 16
        %v2913 = vpop.permute.xlu0 %2912
        %2918 = vrot.lane.b32.xlu0 %v2831, 24
        %v2919 = vpop.permute.xlu0 %2918
        %2920 = vrot.lane.b32.xlu0 %v2899, 24
        %v2921 = vpop.permute.xlu0 %2920
        %v2924 = vsel %vm1323, %v2828, %v2903
        %v2925 = vsel %vm1323, %v2896, %v2905
        %vm2926 = vcmask 130048
        %v2927 = vsel %vm2926, %v2924, %v2911
        %v2928 = vsel %vm2926, %v2925, %v2913
        %vm2929 = vcmask 195584
        %v2930 = vsel %vm2929, %v2927, %v2919
        %v2931 = vsel %vm2929, %v2928, %v2921
        %v2932 = vlaneseq
        %v2933 = vshrl.u32 %v2932, 7
        %v2934 = vsub.s32 3, %v2933
        %v2935 = vrot.slane %v299, %v2934
        %v2937 = vsel %vm301, %v2930, 0
        %v2940 = vsel %vm301, %v2931, 0
        %2942 = vmatprep.subr.mxu0 0.0
        %2943 = vmatpush1.msra.mxu0 %v278
        %2944 = vmatprep.subr.mxu0 0.0
        %2945 = vmatpush1.msra.mxu0 %v279
        %2946 = vmatprep.subr.mxu0 0.0
        %2947 = vmatpush1.msra.mxu0 %v280
        %2948 = vmatprep.subr.mxu0 0.0
        %2949 = vmatpush1.msra.mxu0 %v281
        %2950 = vmatprep.subr.mxu0 0.0
        %2951 = vmatpush1.msra.mxu0 0.0
        %2952 = vmatprep.subr.mxu0 0.0
        %2953 = vmatpush1.msra.mxu0 0.0
        %2954 = vmatprep.subr.mxu0 0.0
        %2955 = vmatpush1.msra.mxu0 0.0
        %2956 = vmatprep.subr.mxu0 0.0
        %2957 = vmatpush1.msra.mxu0 0.0
        %2958 = vmatprep.subr.mxu0 0.0
        %2959 = vmatpush1.msra.mxu0 0.0
        %2960 = vmatprep.subr.mxu0 0.0
        %2961 = vmatpush1.msra.mxu0 0.0
        %2962 = vmatprep.subr.mxu0 0.0
        %2963 = vmatpush1.msra.mxu0 0.0
        %2964 = vmatprep.subr.mxu0 0.0
        %2965 = vmatpush1.msra.mxu0 0.0
        %2966 = vmatprep.subr.mxu0 0.0
        %2967 = vmatpush1.msra.mxu0 0.0
        %2968 = vmatprep.subr.mxu0 0.0
        %2969 = vmatpush1.msra.mxu0 0.0
        %2970 = vmatprep.subr.mxu0 0.0
        %2971 = vmatpush1.msra.mxu0 0.0
        %2972 = vmatprep.subr.mxu0 0.0
        %2973 = vmatpush1.msra.mxu0 0.0
        %2974 = vmatprep.subr.mxu0 0.0
        %2975 = vmatpush1.msra.mxu0 0.0
        %2976 = vmatprep.subr.mxu0 0.0
        %2977 = vmatpush1.msra.mxu0 0.0
        %2978 = vmatprep.subr.mxu0 0.0
        %2979 = vmatpush1.msra.mxu0 0.0
        %2980 = vmatprep.subr.mxu0 0.0
        %2981 = vmatpush1.msra.mxu0 0.0
        %2982 = vmatprep.subr.mxu0 0.0
        %2983 = vmatpush1.msra.mxu0 0.0
        %2984 = vmatprep.subr.mxu0 0.0
        %2985 = vmatpush1.msra.mxu0 0.0
        %2986 = vmatprep.subr.mxu0 0.0
        %2987 = vmatpush1.msra.mxu0 0.0
        %2988 = vmatprep.subr.mxu0 0.0
        %2989 = vmatpush1.msra.mxu0 0.0
        %2990 = vmatprep.subr.mxu0 0.0
        %2991 = vmatpush1.msra.mxu0 0.0
        %2992 = vmatprep.subr.mxu0 0.0
        %2993 = vmatpush1.msra.mxu0 0.0
        %2994 = vmatprep.subr.mxu0 0.0
        %2995 = vmatpush1.msra.mxu0 0.0
        %2996 = vmatprep.subr.mxu0 0.0
        %2997 = vmatpush1.msra.mxu0 0.0
        %2998 = vmatprep.subr.mxu0 0.0
        %2999 = vmatpush1.msra.mxu0 0.0
        %3000 = vmatprep.subr.mxu0 0.0
        %3001 = vmatpush1.msra.mxu0 0.0
        %3002 = vmatprep.subr.mxu0 0.0
        %3003 = vmatpush1.msra.mxu0 0.0
        %3004 = vmatprep.subr.mxu0 0.0
        %3005 = vmatpush1.msra.mxu0 0.0
        %3006 = vmatprep.mubr.f32.mxu0 0.0
        %3007 = vmatmul.mubr.f32.gmra.mrb[0].mxu0 %v2937
        %v3008 = vpop.f32.mrb[0].mxu0
        %v3009 = vadd.f32 %v2935, %v3008
        %v3010 = vpop.f32.mrb[0].mxu0
        %3011 = vmatprep.mubr.f32.mxu0 0.0
        %3012 = vmatmul.mubr.f32.gmra.mrb[0].mxu0 %v2940
        %v3013 = vpop.f32.mrb[0].mxu0
        %v3014 = vadd.f32 %v2935, %v3013
        %v3015 = vpop.f32.mrb[0].mxu0
        %3016 = vdwg.mxu0
        %v3017 = vadd.f32 %v269, %v3009
        %v3018 = vadd.f32 %v270, %v3014
        %v3019 = vsel %vm301, %v3017, 0.0
        %3020 = vadd.xlane.f32.xlu0 %v3019
        %v3021 = vpop.xlane.xlu0 %3020
        %v3022 = vsel %vm301, %v3018, 0.0
        %3023 = vadd.xlane.f32.xlu0 %v3022
        %v3024 = vpop.xlane.xlu0 %3023
        %v3025 = vrcp.pop 32.0
        %v3026 = vmul.f32 %v3021, %v3025
        %v3027 = vmul.f32 %v3024, %v3025
        %v3028 = vmul.f32 %v3017, %v3017
        %v3029 = vmul.f32 %v3018, %v3018
        %v3030 = vsel %vm301, %v3028, 0.0
        %3031 = vadd.xlane.f32.xlu0 %v3030
        %v3032 = vpop.xlane.xlu0 %3031
        %v3033 = vsel %vm301, %v3029, 0.0
        %3034 = vadd.xlane.f32.xlu0 %v3033
        %v3035 = vpop.xlane.xlu0 %3034
        %v3036 = vmul.f32 %v3032, %v3025
        %v3037 = vmul.f32 %v3035, %v3025
        %v3038 = vmul.f32 %v3026, %v3026
        %v3039 = vmul.f32 %v3027, %v3027
        %v3040 = vsub.f32 %v3036, %v3038
        %v3041 = vsub.f32 %v3037, %v3039
        %v3042 = vmax.f32 %v3040, 0.0
        %v3043 = vmax.f32 %v3041, 0.0
        %v3044 = vsub.f32 %v3017, %v3026
        %v3045 = vsub.f32 %v3018, %v3027
        %v3046 = vadd.f32 %v3042, 1e-05
        %v3047 = vadd.f32 %v3043, 1e-05
        %v3048 = vrsqrt.pop %v3046
        %v3049 = vrsqrt.pop %v3047
        %v3050 = vmul.f32 %v3044, %v3048
        %v3051 = vmul.f32 %v3045, %v3049
        %v3052 = vlaneseq
        %v3053 = vshrl.u32 %v3052, 7
        %v3054 = vsub.s32 4, %v3053
        %v3055 = vrot.slane %v299, %v3054
        %v3056 = vmul.f32 %v3050, %v3055
        %v3057 = vmul.f32 %v3051, %v3055
        %v3058 = vlaneseq
        %v3059 = vshrl.u32 %v3058, 7
        %v3060 = vsub.s32 5, %v3059
        %v3061 = vrot.slane %v299, %v3060
        %v3062 = vadd.f32 %v3056, %v3061
        %v3063 = vadd.f32 %v3057, %v3061
        %v3064 = vlaneseq
        %v3065 = vshrl.u32 %v3064, 7
        %v3066 = vsub.s32 6, %v3065
        %v3067 = vrot.slane %v299, %v3066
        %v3069 = vsel %vm301, %v3062, 0
        %v3072 = vsel %vm301, %v3063, 0
        %3074 = vmatprep.subr.mxu0 0.0
        %3075 = vmatpush1.msra.mxu0 %v283
        %3076 = vmatprep.subr.mxu0 0.0
        %3077 = vmatpush1.msra.mxu0 %v284
        %3078 = vmatprep.subr.mxu0 0.0
        %3079 = vmatpush1.msra.mxu0 %v285
        %3080 = vmatprep.subr.mxu0 0.0
        %3081 = vmatpush1.msra.mxu0 %v286
        %3082 = vmatprep.subr.mxu0 0.0
        %3083 = vmatpush1.msra.mxu0 0.0
        %3084 = vmatprep.subr.mxu0 0.0
        %3085 = vmatpush1.msra.mxu0 0.0
        %3086 = vmatprep.subr.mxu0 0.0
        %3087 = vmatpush1.msra.mxu0 0.0
        %3088 = vmatprep.subr.mxu0 0.0
        %3089 = vmatpush1.msra.mxu0 0.0
        %3090 = vmatprep.subr.mxu0 0.0
        %3091 = vmatpush1.msra.mxu0 0.0
        %3092 = vmatprep.subr.mxu0 0.0
        %3093 = vmatpush1.msra.mxu0 0.0
        %3094 = vmatprep.subr.mxu0 0.0
        %3095 = vmatpush1.msra.mxu0 0.0
        %3096 = vmatprep.subr.mxu0 0.0
        %3097 = vmatpush1.msra.mxu0 0.0
        %3098 = vmatprep.subr.mxu0 0.0
        %3099 = vmatpush1.msra.mxu0 0.0
        %3100 = vmatprep.subr.mxu0 0.0
        %3101 = vmatpush1.msra.mxu0 0.0
        %3102 = vmatprep.subr.mxu0 0.0
        %3103 = vmatpush1.msra.mxu0 0.0
        %3104 = vmatprep.subr.mxu0 0.0
        %3105 = vmatpush1.msra.mxu0 0.0
        %3106 = vmatprep.subr.mxu0 0.0
        %3107 = vmatpush1.msra.mxu0 0.0
        %3108 = vmatprep.subr.mxu0 0.0
        %3109 = vmatpush1.msra.mxu0 0.0
        %3110 = vmatprep.subr.mxu0 0.0
        %3111 = vmatpush1.msra.mxu0 0.0
        %3112 = vmatprep.subr.mxu0 0.0
        %3113 = vmatpush1.msra.mxu0 0.0
        %3114 = vmatprep.subr.mxu0 0.0
        %3115 = vmatpush1.msra.mxu0 0.0
        %3116 = vmatprep.subr.mxu0 0.0
        %3117 = vmatpush1.msra.mxu0 0.0
        %3118 = vmatprep.subr.mxu0 0.0
        %3119 = vmatpush1.msra.mxu0 0.0
        %3120 = vmatprep.subr.mxu0 0.0
        %3121 = vmatpush1.msra.mxu0 0.0
        %3122 = vmatprep.subr.mxu0 0.0
        %3123 = vmatpush1.msra.mxu0 0.0
        %3124 = vmatprep.subr.mxu0 0.0
        %3125 = vmatpush1.msra.mxu0 0.0
        %3126 = vmatprep.subr.mxu0 0.0
        %3127 = vmatpush1.msra.mxu0 0.0
        %3128 = vmatprep.subr.mxu0 0.0
        %3129 = vmatpush1.msra.mxu0 0.0
        %3130 = vmatprep.subr.mxu0 0.0
        %3131 = vmatpush1.msra.mxu0 0.0
        %3132 = vmatprep.subr.mxu0 0.0
        %3133 = vmatpush1.msra.mxu0 0.0
        %3134 = vmatprep.subr.mxu0 0.0
        %3135 = vmatpush1.msra.mxu0 0.0
        %3136 = vmatprep.subr.mxu0 0.0
        %3137 = vmatpush1.msra.mxu0 0.0
        %3138 = vmatprep.mubr.f32.mxu0 0.0
        %3139 = vmatmul.mubr.f32.gmra.mrb[0].mxu0 %v3069
        %v3140 = vpop.f32.mrb[0].mxu0
        %v3141 = vadd.f32 %v3067, %v3140
        %v3142 = vpop.f32.mrb[0].mxu0
        %3143 = vmatprep.mubr.f32.mxu0 0.0
        %3144 = vmatmul.mubr.f32.gmra.mrb[0].mxu0 %v3072
        %v3145 = vpop.f32.mrb[0].mxu0
        %v3146 = vadd.f32 %v3067, %v3145
        %v3147 = vpop.f32.mrb[0].mxu0
        %3148 = vdwg.mxu0
        %vm3149 = vcmp.ge.f32.partialorder %v3141, 0.0
        %vm3150 = vcmp.ge.f32.partialorder %v3146, 0.0
        %v3151 = vmul.f32 %v3141, 0.01
        %v3152 = vmul.f32 %v3146, 0.01
        %v3153 = vsel %vm3149, %v3141, %v3151
        %v3154 = vsel %vm3150, %v3146, %v3152
        %v3155 = vlaneseq
        %v3156 = vshrl.u32 %v3155, 7
        %v3157 = vsub.s32 7, %v3156
        %v3158 = vrot.slane %v299, %v3157
        %vm3159 = vcmask 523264
        %v3161 = vsel %vm3159, %v3153, 0
        %v3164 = vsel %vm3159, %v3154, 0
        %3166 = vmatprep.subr.mxu0 0.0
        %3167 = vmatpush1.msra.mxu0 %v289
        %3168 = vmatprep.subr.mxu0 0.0
        %3169 = vmatpush1.msra.mxu0 %v290
        %3170 = vmatprep.subr.mxu0 0.0
        %3171 = vmatpush1.msra.mxu0 %v291
        %3172 = vmatprep.subr.mxu0 0.0
        %3173 = vmatpush1.msra.mxu0 %v292
        %3174 = vmatprep.subr.mxu0 0.0
        %3175 = vmatpush1.msra.mxu0 %v293
        %3176 = vmatprep.subr.mxu0 0.0
        %3177 = vmatpush1.msra.mxu0 %v294
        %3178 = vmatprep.subr.mxu0 0.0
        %3179 = vmatpush1.msra.mxu0 %v295
        %3180 = vmatprep.subr.mxu0 0.0
        %3181 = vmatpush1.msra.mxu0 %v296
        %3182 = vmatprep.subr.mxu0 0.0
        %3183 = vmatpush1.msra.mxu0 0.0
        %3184 = vmatprep.subr.mxu0 0.0
        %3185 = vmatpush1.msra.mxu0 0.0
        %3186 = vmatprep.subr.mxu0 0.0
        %3187 = vmatpush1.msra.mxu0 0.0
        %3188 = vmatprep.subr.mxu0 0.0
        %3189 = vmatpush1.msra.mxu0 0.0
        %3190 = vmatprep.subr.mxu0 0.0
        %3191 = vmatpush1.msra.mxu0 0.0
        %3192 = vmatprep.subr.mxu0 0.0
        %3193 = vmatpush1.msra.mxu0 0.0
        %3194 = vmatprep.subr.mxu0 0.0
        %3195 = vmatpush1.msra.mxu0 0.0
        %3196 = vmatprep.subr.mxu0 0.0
        %3197 = vmatpush1.msra.mxu0 0.0
        %3198 = vmatprep.subr.mxu0 0.0
        %3199 = vmatpush1.msra.mxu0 0.0
        %3200 = vmatprep.subr.mxu0 0.0
        %3201 = vmatpush1.msra.mxu0 0.0
        %3202 = vmatprep.subr.mxu0 0.0
        %3203 = vmatpush1.msra.mxu0 0.0
        %3204 = vmatprep.subr.mxu0 0.0
        %3205 = vmatpush1.msra.mxu0 0.0
        %3206 = vmatprep.subr.mxu0 0.0
        %3207 = vmatpush1.msra.mxu0 0.0
        %3208 = vmatprep.subr.mxu0 0.0
        %3209 = vmatpush1.msra.mxu0 0.0
        %3210 = vmatprep.subr.mxu0 0.0
        %3211 = vmatpush1.msra.mxu0 0.0
        %3212 = vmatprep.subr.mxu0 0.0
        %3213 = vmatpush1.msra.mxu0 0.0
        %3214 = vmatprep.subr.mxu0 0.0
        %3215 = vmatpush1.msra.mxu0 0.0
        %3216 = vmatprep.subr.mxu0 0.0
        %3217 = vmatpush1.msra.mxu0 0.0
        %3218 = vmatprep.subr.mxu0 0.0
        %3219 = vmatpush1.msra.mxu0 0.0
        %3220 = vmatprep.subr.mxu0 0.0
        %3221 = vmatpush1.msra.mxu0 0.0
        %3222 = vmatprep.subr.mxu0 0.0
        %3223 = vmatpush1.msra.mxu0 0.0
        %3224 = vmatprep.subr.mxu0 0.0
        %3225 = vmatpush1.msra.mxu0 0.0
        %3226 = vmatprep.subr.mxu0 0.0
        %3227 = vmatpush1.msra.mxu0 0.0
        %3228 = vmatprep.subr.mxu0 0.0
        %3229 = vmatpush1.msra.mxu0 0.0
        %3230 = vmatprep.mubr.f32.mxu0 0.0
        %3231 = vmatmul.mubr.f32.gmra.mrb[0].mxu0 %v3161
        %v3232 = vpop.f32.mrb[0].mxu0
        %v3233 = vadd.f32 %v3158, %v3232
        %v3234 = vpop.f32.mrb[0].mxu0
        %3235 = vmatprep.mubr.f32.mxu0 0.0
        %3236 = vmatmul.mubr.f32.gmra.mrb[0].mxu0 %v3164
        %v3237 = vpop.f32.mrb[0].mxu0
        %v3238 = vadd.f32 %v3158, %v3237
        %v3239 = vpop.f32.mrb[0].mxu0
        %3240 = vdwg.mxu0
        %v3241 = vadd.f32 %v3062, %v3233
        %v3242 = vadd.f32 %v3063, %v3238
        %v3243 = vsel %vm301, %v3241, 0.0
        %3244 = vadd.xlane.f32.xlu0 %v3243
        %v3245 = vpop.xlane.xlu0 %3244
        %v3246 = vsel %vm301, %v3242, 0.0
        %3247 = vadd.xlane.f32.xlu0 %v3246
        %v3248 = vpop.xlane.xlu0 %3247
        %v3249 = vmul.f32 %v3245, %v3025
        %v3250 = vmul.f32 %v3248, %v3025
        %v3251 = vmul.f32 %v3241, %v3241
        %v3252 = vmul.f32 %v3242, %v3242
        %v3253 = vsel %vm301, %v3251, 0.0
        %3254 = vadd.xlane.f32.xlu0 %v3253
        %v3255 = vpop.xlane.xlu0 %3254
        %v3256 = vsel %vm301, %v3252, 0.0
        %3257 = vadd.xlane.f32.xlu0 %v3256
        %v3258 = vpop.xlane.xlu0 %3257
        %v3259 = vmul.f32 %v3255, %v3025
        %v3260 = vmul.f32 %v3258, %v3025
        %v3261 = vmul.f32 %v3249, %v3249
        %v3262 = vmul.f32 %v3250, %v3250
        %v3263 = vsub.f32 %v3259, %v3261
        %v3264 = vsub.f32 %v3260, %v3262
        %v3265 = vmax.f32 %v3263, 0.0
        %v3266 = vmax.f32 %v3264, 0.0
        %v3267 = vsub.f32 %v3241, %v3249
        %v3268 = vsub.f32 %v3242, %v3250
        %v3269 = vadd.f32 %v3265, 1e-05
        %v3270 = vadd.f32 %v3266, 1e-05
        %v3271 = vrsqrt.pop %v3269
        %v3272 = vrsqrt.pop %v3270
        %v3273 = vmul.f32 %v3267, %v3271
        %v3274 = vmul.f32 %v3268, %v3272
        %v3275 = vlaneseq
        %v3276 = vshrl.u32 %v3275, 7
        %v3277 = vsub.s32 0, %v3276
        %v3278 = vrot.slane %v300, %v3277
        %v3279 = vmul.f32 %v3273, %v3278
        %v3280 = vmul.f32 %v3274, %v3278
        %v3281 = vlaneseq
        %v3282 = vshrl.u32 %v3281, 7
        %v3283 = vsub.s32 1, %v3282
        %v3284 = vrot.slane %v300, %v3283
        %v3285 = vadd.f32 %v3279, %v3284
        %v3286 = vadd.f32 %v3280, %v3284
        %3287 = vst.msk [vmem:[#allocation2] sm:$0xff] %vm301, %v3285
        %3288 = vst.msk [vmem:[#allocation2 + $0x8] sm:$0xff] %vm301, %v3286
        %p3289 = scmp.eq.s32.totalorder %s24, 1
        // Predicated region
        $region53: #{tpu_custom_call.1} parent=43 // pred_check
          %p3290 = pneg %p3289
        $region54: #{tpu_custom_call.1} parent=43 // pred_check_branch
          %3292 = sbr.rel (%p3290) target = $region56
        $region55: #{tpu_custom_call.1} parent=43 // pred_region
          %3293 = vst.msk [vmem:[#allocation6] sm:$0xff] %vm301, %v3285
          %3294 = vst.msk [vmem:[#allocation6 + $0x8] sm:$0xff] %vm301, %v3286
        $region56: #{tpu_custom_call.1} parent=43 // pred_fallthru
          _
        // Predicated region
        $region57: #{tpu_custom_call.1} parent=43 // pred_check
          %p3295 = pneg %p180
        $region58: #{tpu_custom_call.1} parent=43 // pred_check_branch
          %3297 = sbr.rel (%p3295) target = $region60
        $region59: #{tpu_custom_call.1} parent=43 // pred_region
          %s3298 = smul.u32 2, %s23
          %s3300 = ssub.s32 256, 256
          %3301 = vsyncadd [#allocation5], %s3300
          %s3302 = smul.addr %s3298, 128
          %s3303 = scalar_lea.hbm %s6, %s3302
          %s3304 = sshll.u32 [#allocation6], 4
          %s3305 = int_to_ptr.vmem [resolvable:$true] %s3304
          %3310 = dma.vmem_to_hbm [thread:$0]  %s3305, 256, %s3303, [#allocation5], 128, 128, 8
        $region60: #{tpu_custom_call.1} parent=43 // pred_fallthru
          _
        // Predicated region
        $region61: #{tpu_custom_call.1} parent=43 // pred_check
          %p3311 = pneg %p180
        $region62: #{tpu_custom_call.1} parent=43 // pred_check_branch
          %3313 = sbr.rel (%p3311) target = $region64
        $region63: #{tpu_custom_call.1} parent=43 // pred_region
          %3314 = dma.done [#allocation5], 256
        $region64: #{tpu_custom_call.1} parent=43 // pred_fallthru
          _
      $region44: #{tpu_custom_call.1} parent=5 // pred_fallthru
        _
      %p3315 = scmp.le.s32.totalorder 2, %s14
      // Predicated region
      $region65: #{tpu_custom_call.1} parent=5 // pred_check
        %p3316 = pneg %p3315
      $region66: #{tpu_custom_call.1} parent=5 // pred_check_branch
        %3318 = sbr.rel (%p3316) target = $region68
      $region67: #{tpu_custom_call.1} parent=5 // pred_region
        %s3319 = ssub.s32 %s14, 2
      $region68: #{tpu_custom_call.1} parent=5 // pred_fallthru
        _
    $region6: #{tpu_custom_call.1} parent=1 // loop_footer
      %s18 = sadd.s32 1, %s14
    $region7: #{tpu_custom_call.1} parent=1 // loop_footer_branch
      %13 = sbr.rel target = $region3
    $region8: #{tpu_custom_call.1} parent=1 // loop_exit
      _
    %3320 = vsyncpa [#allocation4], 1
    %s3321 = scalar_lea.sflag [#allocation4], 1
    %3322 = vsyncpa %s3321, 1
    %3323 = vsyncpa [#allocation5], 1
    %s3324 = scalar_lea.sflag [#allocation5], 1
    %3325 = vsyncpa %s3324, 1

</llo_original>
